<compile_context>
chip_gen: v7x
topology: tpu7x:2x2x1
jax: 0.10.0
libtpu: 0.0.40
codegen_flags: <defaults>
</compile_context>

<pallas_src>
import functools

import jax
import jax.numpy as jnp
from jax.experimental import pallas as pl
from jax.experimental.pallas import tpu as pltpu


def _sigmoid(x):
    # sigmoid(x) = 0.5 * tanh(0.5 * x) + 0.5  -- 1 EUP push (tanh) vs. 2 for
    # the exp/reciprocal lowering of jax.nn.sigmoid; mathematically identical.
    return 0.5 * jnp.tanh(0.5 * x) + 0.5


def _lstm_fc_kernel(x2d_ref, wih0_ref, b0_ref, whh0_ref, w1_ref, b1_ref,
                    fcw_ref, fcb_ref, out_ref, g0_scr, *, hidden, seq_len):
    """2-layer LSTM recurrence + final Linear, one kernel invocation.

    x2d_ref:  (T*B, D)  f32   time-major input, flattened over (T, B)
    wih0_ref: (D, 4H)   f32   layer-0 input weights (transposed)
    b0_ref:   (1, 4H)   f32   layer-0 bias (b_ih + b_hh)
    whh0_ref: (H, 4H)   bf16  layer-0 recurrent weights (transposed)
    w1_ref:   (2H, 4H)  bf16  layer-1 fused [wih1; whh1] weights (transposed)
    b1_ref:   (1, 4H)   f32   layer-1 bias (b_ih + b_hh)
    fcw_ref:  (H, 1)    f32   fc weight (transposed)
    fcb_ref:  (1, 1)    f32   fc bias
    out_ref:  (B, 1)    f32   output
    g0_scr:   (T*B, 4H) f32   VMEM scratch: hoisted layer-0 pre-activations
    """
    H = hidden
    T = seq_len
    TB, _ = x2d_ref.shape
    B = TB // T

    # ---- hoist the layer-0 input projection off the serial recurrence ----
    # One big, well-utilized MXU pass; result lives in VMEM scratch (not as a
    # giant register-resident value across the unrolled loop).
    g0_scr[...] = (
        jnp.dot(x2d_ref[...], wih0_ref[...], preferred_element_type=jnp.float32)
        + b0_ref[...])

    def gates(g):
        # PyTorch gate order: input, forget, cell(g), output.
        if H % 128 == 0:
            # Lane-aligned full-tile slices: slice first, 4 EUP pushes total.
            i = _sigmoid(g[:, 0 * H:1 * H])
            f = _sigmoid(g[:, 1 * H:2 * H])
            gg = jnp.tanh(g[:, 2 * H:3 * H])
            o = _sigmoid(g[:, 3 * H:4 * H])
        else:
            # Gates share vregs: full-slab activations, then slice.
            s = _sigmoid(g)
            th = jnp.tanh(g)
            i = s[:, 0 * H:1 * H]
            f = s[:, 1 * H:2 * H]
            gg = th[:, 2 * H:3 * H]
            o = s[:, 3 * H:4 * H]
        return i, f, gg, o

    h0 = jnp.zeros((B, H), jnp.float32)
    c0 = jnp.zeros((B, H), jnp.float32)
    h1 = jnp.zeros((B, H), jnp.float32)
    c1 = jnp.zeros((B, H), jnp.float32)

    # Fully unrolled time loop (T static & small): static scratch slices and
    # cross-iteration scheduling visibility.  Weights are read from their VMEM
    # refs at each use site (vld is hidden under MXU latency) instead of being
    # held as long-lived values.
    for t in range(T):
        # ---- layer 0: only the recurrent matmul remains on the chain ----
        g0 = (g0_scr[t * B:(t + 1) * B, :]
              + jnp.dot(h0.astype(jnp.bfloat16), whh0_ref[...],
                        preferred_element_type=jnp.float32))
        i0, f0, gg0, o0 = gates(g0)
        c0 = f0 * c0 + i0 * gg0
        h0 = o0 * jnp.tanh(c0)

        # ---- layer 1: single fused K=2H matmul ([h0 | h1] @ [wih1; whh1]) ----
        hcat = jnp.concatenate(
            [h0.astype(jnp.bfloat16), h1.astype(jnp.bfloat16)], axis=1)
        g1 = (jnp.dot(hcat, w1_ref[...], preferred_element_type=jnp.float32)
              + b1_ref[...])
        i1, f1, gg1, o1 = gates(g1)
        c1 = f1 * c1 + i1 * gg1
        h1 = o1 * jnp.tanh(c1)

    # out[:, -1, :] of the top LSTM layer == h1 after the last step.
    out_ref[...] = (
        jnp.dot(h1, fcw_ref[...], preferred_element_type=jnp.float32)
        + fcb_ref[...])


def lstm_model_forward(x, params, hidden):
    """x: (B, T, D) float32.  Returns (B, 1) float32."""
    B, T, D = x.shape
    H = hidden

    # time-major, flattened over (T, B) -> plain 2-D slab for the kernel.
    x2d = jnp.transpose(x, (1, 0, 2)).reshape(T * B, D)

    # bf16 copies of the recurrent-path weights (single-pass MXU operands);
    # layer-1 input & recurrent weights fused along K into one (2H, 4H) matrix.
    whh0_b = params["whh0_t"].astype(jnp.bfloat16)
    w1_cat = jnp.concatenate(
        [params["wih1_t"], params["whh1_t"]], axis=0).astype(jnp.bfloat16)

    args = (
        x2d,
        params["wih0_t"], params["b0"],
        whh0_b, w1_cat, params["b1"],
        params["fcw_t"], params["fcb"],
    )

    vmem_spec = pl.BlockSpec(memory_space=pltpu.MemorySpace.VMEM)
    kernel = functools.partial(_lstm_fc_kernel, hidden=H, seq_len=T)

    return pl.pallas_call(
        kernel,
        out_shape=jax.ShapeDtypeStruct((B, 1), jnp.float32),
        in_specs=[vmem_spec] * len(args),
        out_specs=vmem_spec,
        scratch_shapes=[pltpu.VMEM((T * B, 4 * H), jnp.float32)],
        compiler_params=pltpu.CompilerParams(vmem_limit_bytes=4 << 20),
    )(*args)


def init_params(key, input_size, hidden):
    """Deterministic init matching PyTorch LSTM/Linear shapes.

    PyTorch stores weight_ih_l{k}: (4H, in), weight_hh_l{k}: (4H, H),
    bias_ih/bias_hh: (4H,), fc.weight: (1, H), fc.bias: (1,).
    We pre-transpose the matmul weights and fold the two LSTM biases together.
    """
    H = hidden
    k = 1.0 / jnp.sqrt(jnp.float32(H))
    keys = jax.random.split(key, 11)
    u = lambda kk, shape: jax.random.uniform(kk, shape, jnp.float32, -k, k)

    wih0 = u(keys[0], (4 * H, input_size))
    whh0 = u(keys[1], (4 * H, H))
    bih0 = u(keys[2], (4 * H,))
    bhh0 = u(keys[3], (4 * H,))
    wih1 = u(keys[4], (4 * H, H))
    whh1 = u(keys[5], (4 * H, H))
    bih1 = u(keys[6], (4 * H,))
    bhh1 = u(keys[7], (4 * H,))
    fcw = u(keys[8], (1, H))
    fcb = u(keys[9], (1,))

    return {
        "wih0_t": wih0.T, "whh0_t": whh0.T, "b0": (bih0 + bhh0).reshape(1, 4 * H),
        "wih1_t": wih1.T, "whh1_t": whh1.T, "b1": (bih1 + bhh1).reshape(1, 4 * H),
        "fcw_t": fcw.T, "fcb": fcb.reshape(1, 1),
    }


def reference_forward(x, params, hidden):
    """Pure-JAX float32 reference (mirrors torch.nn.LSTM + Linear forward)."""
    H = hidden
    B, T, D = x.shape

    def cell(x_t, h, c, wih_t, whh_t, b):
        g = x_t @ wih_t + h @ whh_t + b
        i = jax.nn.sigmoid(g[:, 0 * H:1 * H])
        f = jax.nn.sigmoid(g[:, 1 * H:2 * H])
        gg = jnp.tanh(g[:, 2 * H:3 * H])
        o = jax.nn.sigmoid(g[:, 3 * H:4 * H])
        c = f * c + i * gg
        h = o * jnp.tanh(c)
        return h, c

    h0 = c0 = h1 = c1 = jnp.zeros((B, H), jnp.float32)
    for t in range(T):
        h0, c0 = cell(x[:, t, :], h0, c0,
                      params["wih0_t"], params["whh0_t"], params["b0"])
        h1, c1 = cell(h0, h1, c1,
                      params["wih1_t"], params["whh1_t"], params["b1"])
    return h1 @ params["fcw_t"] + params["fcb"]


if __name__ == "__main__":
    # Small shapes; H=128 is the LSTMModel default hidden_size (lane-aligned gates).
    B, T, D, H = 8, 8, 16, 128

    key = jax.random.PRNGKey(0)
    kx, kp = jax.random.split(key)
    x = jax.random.normal(kx, (B, T, D), jnp.float32)
    params = init_params(kp, D, H)

    out = lstm_model_forward(x, params, H)
    out = jax.block_until_ready(out)

    ref = reference_forward(x, params, H)
    assert out.shape == (B, 1), out.shape
    # bf16 operands on the recurrent matmuls shift results at ~1e-3 level.
    assert jnp.allclose(out, ref, atol=2e-2, rtol=2e-2), (out, ref)

    print("KERNEL_OK")
</pallas_src>

<mosaic_0001>
module attributes {stable_mosaic.version = 11 : i64} {
  func.func @_lstm_fc_kernel(%arg0: memref<64x16xf32, #tpu.memory_space<vmem>>, %arg1: memref<16x512xf32, #tpu.memory_space<vmem>>, %arg2: memref<1x512xf32, #tpu.memory_space<vmem>>, %arg3: memref<128x512xbf16, #tpu.memory_space<vmem>>, %arg4: memref<256x512xbf16, #tpu.memory_space<vmem>>, %arg5: memref<1x512xf32, #tpu.memory_space<vmem>>, %arg6: memref<128x1xf32, #tpu.memory_space<vmem>>, %arg7: memref<1x1xf32, #tpu.memory_space<vmem>>, %arg8: memref<8x1xf32, #tpu.memory_space<vmem>>, %arg9: memref<64x512xf32, #tpu.memory_space<vmem>>) attributes {dimension_semantics = [], scalar_prefetch = 0 : i64, scratch_operands = 1 : i64, tpu.core_type = #tpu.core_type<tc>} {
    %c0 = arith.constant 0 : index
    %c0_0 = arith.constant 0 : index
    %0 = vector.load %arg0[%c0, %c0_0] : memref<64x16xf32, #tpu.memory_space<vmem>>, vector<64x16xf32>
    %c0_1 = arith.constant 0 : index
    %c0_2 = arith.constant 0 : index
    %1 = vector.load %arg1[%c0_1, %c0_2] : memref<16x512xf32, #tpu.memory_space<vmem>>, vector<16x512xf32>
    %cst = arith.constant dense<0.000000e+00> : vector<64x512xf32>
    %2 = tpu.matmul %0, %1, %cst {dimension_numbers = #tpu.dot_dimension_numbers<[1], [0], [0], [1], [0, 0, 1, 1], [], []>} : vector<64x16xf32>, vector<16x512xf32>, vector<64x512xf32> -> vector<64x512xf32>
    %c0_3 = arith.constant 0 : index
    %c0_4 = arith.constant 0 : index
    %3 = vector.load %arg2[%c0_3, %c0_4] : memref<1x512xf32, #tpu.memory_space<vmem>>, vector<1x512xf32>
    %4 = vector.broadcast %3 : vector<1x512xf32> to vector<64x512xf32>
    %5 = arith.addf %2, %4 : vector<64x512xf32>
    %c0_5 = arith.constant 0 : index
    %c0_6 = arith.constant 0 : index
    %6 = vector.load %arg9[%c0_5, %c0_6] : memref<64x512xf32, #tpu.memory_space<vmem>>, vector<64x512xf32>
    tpu.vector_store %arg9[%c0_5, %c0_6], %5 {strides = array<i32>} : memref<64x512xf32, #tpu.memory_space<vmem>>, vector<64x512xf32>,
    %cst_7 = arith.constant 0.000000e+00 : f32
    %7 = vector.broadcast %cst_7 : f32 to vector<8x128xf32>
    %cst_8 = arith.constant 0.000000e+00 : f32
    %8 = vector.broadcast %cst_8 : f32 to vector<8x128xf32>
    %cst_9 = arith.constant 0.000000e+00 : f32
    %9 = vector.broadcast %cst_9 : f32 to vector<8x128xf32>
    %cst_10 = arith.constant 0.000000e+00 : f32
    %10 = vector.broadcast %cst_10 : f32 to vector<8x128xf32>
    %c0_11 = arith.constant 0 : index
    %c0_12 = arith.constant 0 : index
    %11 = vector.load %arg9[%c0_11, %c0_12] : memref<64x512xf32, #tpu.memory_space<vmem>>, vector<8x512xf32>
    %12 = arith.truncf %7 : vector<8x128xf32> to vector<8x128xbf16>
    %c0_13 = arith.constant 0 : index
    %c0_14 = arith.constant 0 : index
    %13 = vector.load %arg3[%c0_13, %c0_14] : memref<128x512xbf16, #tpu.memory_space<vmem>>, vector<128x512xbf16>
    %cst_15 = arith.constant dense<0.000000e+00> : vector<8x512xf32>
    %14 = tpu.matmul %12, %13, %cst_15 {dimension_numbers = #tpu.dot_dimension_numbers<[1], [0], [0], [1], [0, 0, 1, 1], [], []>} : vector<8x128xbf16>, vector<128x512xbf16>, vector<8x512xf32> -> vector<8x512xf32>
    %15 = arith.addf %11, %14 : vector<8x512xf32>
    %16 = vector.extract_strided_slice %15 {offsets = [0, 0], sizes = [8, 128], strides = [1, 1]} : vector<8x512xf32> to vector<8x128xf32>
    %cst_16 = arith.constant 5.000000e-01 : f32
    %17 = vector.broadcast %cst_16 : f32 to vector<8x128xf32>
    %18 = arith.mulf %17, %16 : vector<8x128xf32>
    %19 = math.tanh %18 : vector<8x128xf32>
    %cst_17 = arith.constant 5.000000e-01 : f32
    %20 = vector.broadcast %cst_17 : f32 to vector<8x128xf32>
    %21 = arith.mulf %20, %19 : vector<8x128xf32>
    %cst_18 = arith.constant 5.000000e-01 : f32
    %22 = vector.broadcast %cst_18 : f32 to vector<8x128xf32>
    %23 = arith.addf %21, %22 : vector<8x128xf32>
    %24 = vector.extract_strided_slice %15 {offsets = [0, 128], sizes = [8, 128], strides = [1, 1]} : vector<8x512xf32> to vector<8x128xf32>
    %cst_19 = arith.constant 5.000000e-01 : f32
    %25 = vector.broadcast %cst_19 : f32 to vector<8x128xf32>
    %26 = arith.mulf %25, %24 : vector<8x128xf32>
    %27 = math.tanh %26 : vector<8x128xf32>
    %cst_20 = arith.constant 5.000000e-01 : f32
    %28 = vector.broadcast %cst_20 : f32 to vector<8x128xf32>
    %29 = arith.mulf %28, %27 : vector<8x128xf32>
    %cst_21 = arith.constant 5.000000e-01 : f32
    %30 = vector.broadcast %cst_21 : f32 to vector<8x128xf32>
    %31 = arith.addf %29, %30 : vector<8x128xf32>
    %32 = vector.extract_strided_slice %15 {offsets = [0, 256], sizes = [8, 128], strides = [1, 1]} : vector<8x512xf32> to vector<8x128xf32>
    %33 = math.tanh %32 : vector<8x128xf32>
    %34 = vector.extract_strided_slice %15 {offsets = [0, 384], sizes = [8, 128], strides = [1, 1]} : vector<8x512xf32> to vector<8x128xf32>
    %cst_22 = arith.constant 5.000000e-01 : f32
    %35 = vector.broadcast %cst_22 : f32 to vector<8x128xf32>
    %36 = arith.mulf %35, %34 : vector<8x128xf32>
    %37 = math.tanh %36 : vector<8x128xf32>
    %cst_23 = arith.constant 5.000000e-01 : f32
    %38 = vector.broadcast %cst_23 : f32 to vector<8x128xf32>
    %39 = arith.mulf %38, %37 : vector<8x128xf32>
    %cst_24 = arith.constant 5.000000e-01 : f32
    %40 = vector.broadcast %cst_24 : f32 to vector<8x128xf32>
    %41 = arith.addf %39, %40 : vector<8x128xf32>
    %42 = arith.mulf %31, %8 : vector<8x128xf32>
    %43 = arith.mulf %23, %33 : vector<8x128xf32>
    %44 = arith.addf %42, %43 : vector<8x128xf32>
    %45 = math.tanh %44 : vector<8x128xf32>
    %46 = arith.mulf %41, %45 : vector<8x128xf32>
    %47 = arith.truncf %46 : vector<8x128xf32> to vector<8x128xbf16>
    %48 = arith.truncf %9 : vector<8x128xf32> to vector<8x128xbf16>
    %49 = tpu.concatenate %47, %48 in 1 : vector<8x128xbf16>, vector<8x128xbf16> -> vector<8x256xbf16>
    %c0_25 = arith.constant 0 : index
    %c0_26 = arith.constant 0 : index
    %50 = vector.load %arg4[%c0_25, %c0_26] : memref<256x512xbf16, #tpu.memory_space<vmem>>, vector<256x512xbf16>
    %cst_27 = arith.constant dense<0.000000e+00> : vector<8x512xf32>
    %51 = tpu.matmul %49, %50, %cst_27 {dimension_numbers = #tpu.dot_dimension_numbers<[1], [0], [0], [1], [0, 0, 1, 1], [], []>} : vector<8x256xbf16>, vector<256x512xbf16>, vector<8x512xf32> -> vector<8x512xf32>
    %c0_28 = arith.constant 0 : index
    %c0_29 = arith.constant 0 : index
    %52 = vector.load %arg5[%c0_28, %c0_29] : memref<1x512xf32, #tpu.memory_space<vmem>>, vector<1x512xf32>
    %53 = vector.broadcast %52 : vector<1x512xf32> to vector<8x512xf32>
    %54 = arith.addf %51, %53 : vector<8x512xf32>
    %55 = vector.extract_strided_slice %54 {offsets = [0, 0], sizes = [8, 128], strides = [1, 1]} : vector<8x512xf32> to vector<8x128xf32>
    %cst_30 = arith.constant 5.000000e-01 : f32
    %56 = vector.broadcast %cst_30 : f32 to vector<8x128xf32>
    %57 = arith.mulf %56, %55 : vector<8x128xf32>
    %58 = math.tanh %57 : vector<8x128xf32>
    %cst_31 = arith.constant 5.000000e-01 : f32
    %59 = vector.broadcast %cst_31 : f32 to vector<8x128xf32>
    %60 = arith.mulf %59, %58 : vector<8x128xf32>
    %cst_32 = arith.constant 5.000000e-01 : f32
    %61 = vector.broadcast %cst_32 : f32 to vector<8x128xf32>
    %62 = arith.addf %60, %61 : vector<8x128xf32>
    %63 = vector.extract_strided_slice %54 {offsets = [0, 128], sizes = [8, 128], strides = [1, 1]} : vector<8x512xf32> to vector<8x128xf32>
    %cst_33 = arith.constant 5.000000e-01 : f32
    %64 = vector.broadcast %cst_33 : f32 to vector<8x128xf32>
    %65 = arith.mulf %64, %63 : vector<8x128xf32>
    %66 = math.tanh %65 : vector<8x128xf32>
    %cst_34 = arith.constant 5.000000e-01 : f32
    %67 = vector.broadcast %cst_34 : f32 to vector<8x128xf32>
    %68 = arith.mulf %67, %66 : vector<8x128xf32>
    %cst_35 = arith.constant 5.000000e-01 : f32
    %69 = vector.broadcast %cst_35 : f32 to vector<8x128xf32>
    %70 = arith.addf %68, %69 : vector<8x128xf32>
    %71 = vector.extract_strided_slice %54 {offsets = [0, 256], sizes = [8, 128], strides = [1, 1]} : vector<8x512xf32> to vector<8x128xf32>
    %72 = math.tanh %71 : vector<8x128xf32>
    %73 = vector.extract_strided_slice %54 {offsets = [0, 384], sizes = [8, 128], strides = [1, 1]} : vector<8x512xf32> to vector<8x128xf32>
    %cst_36 = arith.constant 5.000000e-01 : f32
    %74 = vector.broadcast %cst_36 : f32 to vector<8x128xf32>
    %75 = arith.mulf %74, %73 : vector<8x128xf32>
    %76 = math.tanh %75 : vector<8x128xf32>
    %cst_37 = arith.constant 5.000000e-01 : f32
    %77 = vector.broadcast %cst_37 : f32 to vector<8x128xf32>
    %78 = arith.mulf %77, %76 : vector<8x128xf32>
    %cst_38 = arith.constant 5.000000e-01 : f32
    %79 = vector.broadcast %cst_38 : f32 to vector<8x128xf32>
    %80 = arith.addf %78, %79 : vector<8x128xf32>
    %81 = arith.mulf %70, %10 : vector<8x128xf32>
    %82 = arith.mulf %62, %72 : vector<8x128xf32>
    %83 = arith.addf %81, %82 : vector<8x128xf32>
    %84 = math.tanh %83 : vector<8x128xf32>
    %85 = arith.mulf %80, %84 : vector<8x128xf32>
    %c8 = arith.constant 8 : index
    %c0_39 = arith.constant 0 : index
    %86 = vector.load %arg9[%c8, %c0_39] : memref<64x512xf32, #tpu.memory_space<vmem>>, vector<8x512xf32>
    %87 = arith.truncf %46 : vector<8x128xf32> to vector<8x128xbf16>
    %c0_40 = arith.constant 0 : index
    %c0_41 = arith.constant 0 : index
    %88 = vector.load %arg3[%c0_40, %c0_41] : memref<128x512xbf16, #tpu.memory_space<vmem>>, vector<128x512xbf16>
    %cst_42 = arith.constant dense<0.000000e+00> : vector<8x512xf32>
    %89 = tpu.matmul %87, %88, %cst_42 {dimension_numbers = #tpu.dot_dimension_numbers<[1], [0], [0], [1], [0, 0, 1, 1], [], []>} : vector<8x128xbf16>, vector<128x512xbf16>, vector<8x512xf32> -> vector<8x512xf32>
    %90 = arith.addf %86, %89 : vector<8x512xf32>
    %91 = vector.extract_strided_slice %90 {offsets = [0, 0], sizes = [8, 128], strides = [1, 1]} : vector<8x512xf32> to vector<8x128xf32>
    %cst_43 = arith.constant 5.000000e-01 : f32
    %92 = vector.broadcast %cst_43 : f32 to vector<8x128xf32>
    %93 = arith.mulf %92, %91 : vector<8x128xf32>
    %94 = math.tanh %93 : vector<8x128xf32>
    %cst_44 = arith.constant 5.000000e-01 : f32
    %95 = vector.broadcast %cst_44 : f32 to vector<8x128xf32>
    %96 = arith.mulf %95, %94 : vector<8x128xf32>
    %cst_45 = arith.constant 5.000000e-01 : f32
    %97 = vector.broadcast %cst_45 : f32 to vector<8x128xf32>
    %98 = arith.addf %96, %97 : vector<8x128xf32>
    %99 = vector.extract_strided_slice %90 {offsets = [0, 128], sizes = [8, 128], strides = [1, 1]} : vector<8x512xf32> to vector<8x128xf32>
    %cst_46 = arith.constant 5.000000e-01 : f32
    %100 = vector.broadcast %cst_46 : f32 to vector<8x128xf32>
    %101 = arith.mulf %100, %99 : vector<8x128xf32>
    %102 = math.tanh %101 : vector<8x128xf32>
    %cst_47 = arith.constant 5.000000e-01 : f32
    %103 = vector.broadcast %cst_47 : f32 to vector<8x128xf32>
    %104 = arith.mulf %103, %102 : vector<8x128xf32>
    %cst_48 = arith.constant 5.000000e-01 : f32
    %105 = vector.broadcast %cst_48 : f32 to vector<8x128xf32>
    %106 = arith.addf %104, %105 : vector<8x128xf32>
    %107 = vector.extract_strided_slice %90 {offsets = [0, 256], sizes = [8, 128], strides = [1, 1]} : vector<8x512xf32> to vector<8x128xf32>
    %108 = math.tanh %107 : vector<8x128xf32>
    %109 = vector.extract_strided_slice %90 {offsets = [0, 384], sizes = [8, 128], strides = [1, 1]} : vector<8x512xf32> to vector<8x128xf32>
    %cst_49 = arith.constant 5.000000e-01 : f32
    %110 = vector.broadcast %cst_49 : f32 to vector<8x128xf32>
    %111 = arith.mulf %110, %109 : vector<8x128xf32>
    %112 = math.tanh %111 : vector<8x128xf32>
    %cst_50 = arith.constant 5.000000e-01 : f32
    %113 = vector.broadcast %cst_50 : f32 to vector<8x128xf32>
    %114 = arith.mulf %113, %112 : vector<8x128xf32>
    %cst_51 = arith.constant 5.000000e-01 : f32
    %115 = vector.broadcast %cst_51 : f32 to vector<8x128xf32>
    %116 = arith.addf %114, %115 : vector<8x128xf32>
    %117 = arith.mulf %106, %44 : vector<8x128xf32>
    %118 = arith.mulf %98, %108 : vector<8x128xf32>
    %119 = arith.addf %117, %118 : vector<8x128xf32>
    %120 = math.tanh %119 : vector<8x128xf32>
    %121 = arith.mulf %116, %120 : vector<8x128xf32>
    %122 = arith.truncf %121 : vector<8x128xf32> to vector<8x128xbf16>
    %123 = arith.truncf %85 : vector<8x128xf32> to vector<8x128xbf16>
    %124 = tpu.concatenate %122, %123 in 1 : vector<8x128xbf16>, vector<8x128xbf16> -> vector<8x256xbf16>
    %c0_52 = arith.constant 0 : index
    %c0_53 = arith.constant 0 : index
    %125 = vector.load %arg4[%c0_52, %c0_53] : memref<256x512xbf16, #tpu.memory_space<vmem>>, vector<256x512xbf16>
    %cst_54 = arith.constant dense<0.000000e+00> : vector<8x512xf32>
    %126 = tpu.matmul %124, %125, %cst_54 {dimension_numbers = #tpu.dot_dimension_numbers<[1], [0], [0], [1], [0, 0, 1, 1], [], []>} : vector<8x256xbf16>, vector<256x512xbf16>, vector<8x512xf32> -> vector<8x512xf32>
    %c0_55 = arith.constant 0 : index
    %c0_56 = arith.constant 0 : index
    %127 = vector.load %arg5[%c0_55, %c0_56] : memref<1x512xf32, #tpu.memory_space<vmem>>, vector<1x512xf32>
    %128 = vector.broadcast %127 : vector<1x512xf32> to vector<8x512xf32>
    %129 = arith.addf %126, %128 : vector<8x512xf32>
    %130 = vector.extract_strided_slice %129 {offsets = [0, 0], sizes = [8, 128], strides = [1, 1]} : vector<8x512xf32> to vector<8x128xf32>
    %cst_57 = arith.constant 5.000000e-01 : f32
    %131 = vector.broadcast %cst_57 : f32 to vector<8x128xf32>
    %132 = arith.mulf %131, %130 : vector<8x128xf32>
    %133 = math.tanh %132 : vector<8x128xf32>
    %cst_58 = arith.constant 5.000000e-01 : f32
    %134 = vector.broadcast %cst_58 : f32 to vector<8x128xf32>
    %135 = arith.mulf %134, %133 : vector<8x128xf32>
    %cst_59 = arith.constant 5.000000e-01 : f32
    %136 = vector.broadcast %cst_59 : f32 to vector<8x128xf32>
    %137 = arith.addf %135, %136 : vector<8x128xf32>
    %138 = vector.extract_strided_slice %129 {offsets = [0, 128], sizes = [8, 128], strides = [1, 1]} : vector<8x512xf32> to vector<8x128xf32>
    %cst_60 = arith.constant 5.000000e-01 : f32
    %139 = vector.broadcast %cst_60 : f32 to vector<8x128xf32>
    %140 = arith.mulf %139, %138 : vector<8x128xf32>
    %141 = math.tanh %140 : vector<8x128xf32>
    %cst_61 = arith.constant 5.000000e-01 : f32
    %142 = vector.broadcast %cst_61 : f32 to vector<8x128xf32>
    %143 = arith.mulf %142, %141 : vector<8x128xf32>
    %cst_62 = arith.constant 5.000000e-01 : f32
    %144 = vector.broadcast %cst_62 : f32 to vector<8x128xf32>
    %145 = arith.addf %143, %144 : vector<8x128xf32>
    %146 = vector.extract_strided_slice %129 {offsets = [0, 256], sizes = [8, 128], strides = [1, 1]} : vector<8x512xf32> to vector<8x128xf32>
    %147 = math.tanh %146 : vector<8x128xf32>
    %148 = vector.extract_strided_slice %129 {offsets = [0, 384], sizes = [8, 128], strides = [1, 1]} : vector<8x512xf32> to vector<8x128xf32>
    %cst_63 = arith.constant 5.000000e-01 : f32
    %149 = vector.broadcast %cst_63 : f32 to vector<8x128xf32>
    %150 = arith.mulf %149, %148 : vector<8x128xf32>
    %151 = math.tanh %150 : vector<8x128xf32>
    %cst_64 = arith.constant 5.000000e-01 : f32
    %152 = vector.broadcast %cst_64 : f32 to vector<8x128xf32>
    %153 = arith.mulf %152, %151 : vector<8x128xf32>
    %cst_65 = arith.constant 5.000000e-01 : f32
    %154 = vector.broadcast %cst_65 : f32 to vector<8x128xf32>
    %155 = arith.addf %153, %154 : vector<8x128xf32>
    %156 = arith.mulf %145, %83 : vector<8x128xf32>
    %157 = arith.mulf %137, %147 : vector<8x128xf32>
    %158 = arith.addf %156, %157 : vector<8x128xf32>
    %159 = math.tanh %158 : vector<8x128xf32>
    %160 = arith.mulf %155, %159 : vector<8x128xf32>
    %c16 = arith.constant 16 : index
    %c0_66 = arith.constant 0 : index
    %161 = vector.load %arg9[%c16, %c0_66] : memref<64x512xf32, #tpu.memory_space<vmem>>, vector<8x512xf32>
    %162 = arith.truncf %121 : vector<8x128xf32> to vector<8x128xbf16>
    %c0_67 = arith.constant 0 : index
    %c0_68 = arith.constant 0 : index
    %163 = vector.load %arg3[%c0_67, %c0_68] : memref<128x512xbf16, #tpu.memory_space<vmem>>, vector<128x512xbf16>
    %cst_69 = arith.constant dense<0.000000e+00> : vector<8x512xf32>
    %164 = tpu.matmul %162, %163, %cst_69 {dimension_numbers = #tpu.dot_dimension_numbers<[1], [0], [0], [1], [0, 0, 1, 1], [], []>} : vector<8x128xbf16>, vector<128x512xbf16>, vector<8x512xf32> -> vector<8x512xf32>
    %165 = arith.addf %161, %164 : vector<8x512xf32>
    %166 = vector.extract_strided_slice %165 {offsets = [0, 0], sizes = [8, 128], strides = [1, 1]} : vector<8x512xf32> to vector<8x128xf32>
    %cst_70 = arith.constant 5.000000e-01 : f32
    %167 = vector.broadcast %cst_70 : f32 to vector<8x128xf32>
    %168 = arith.mulf %167, %166 : vector<8x128xf32>
    %169 = math.tanh %168 : vector<8x128xf32>
    %cst_71 = arith.constant 5.000000e-01 : f32
    %170 = vector.broadcast %cst_71 : f32 to vector<8x128xf32>
    %171 = arith.mulf %170, %169 : vector<8x128xf32>
    %cst_72 = arith.constant 5.000000e-01 : f32
    %172 = vector.broadcast %cst_72 : f32 to vector<8x128xf32>
    %173 = arith.addf %171, %172 : vector<8x128xf32>
    %174 = vector.extract_strided_slice %165 {offsets = [0, 128], sizes = [8, 128], strides = [1, 1]} : vector<8x512xf32> to vector<8x128xf32>
    %cst_73 = arith.constant 5.000000e-01 : f32
    %175 = vector.broadcast %cst_73 : f32 to vector<8x128xf32>
    %176 = arith.mulf %175, %174 : vector<8x128xf32>
    %177 = math.tanh %176 : vector<8x128xf32>
    %cst_74 = arith.constant 5.000000e-01 : f32
    %178 = vector.broadcast %cst_74 : f32 to vector<8x128xf32>
    %179 = arith.mulf %178, %177 : vector<8x128xf32>
    %cst_75 = arith.constant 5.000000e-01 : f32
    %180 = vector.broadcast %cst_75 : f32 to vector<8x128xf32>
    %181 = arith.addf %179, %180 : vector<8x128xf32>
    %182 = vector.extract_strided_slice %165 {offsets = [0, 256], sizes = [8, 128], strides = [1, 1]} : vector<8x512xf32> to vector<8x128xf32>
    %183 = math.tanh %182 : vector<8x128xf32>
    %184 = vector.extract_strided_slice %165 {offsets = [0, 384], sizes = [8, 128], strides = [1, 1]} : vector<8x512xf32> to vector<8x128xf32>
    %cst_76 = arith.constant 5.000000e-01 : f32
    %185 = vector.broadcast %cst_76 : f32 to vector<8x128xf32>
    %186 = arith.mulf %185, %184 : vector<8x128xf32>
    %187 = math.tanh %186 : vector<8x128xf32>
    %cst_77 = arith.constant 5.000000e-01 : f32
    %188 = vector.broadcast %cst_77 : f32 to vector<8x128xf32>
    %189 = arith.mulf %188, %187 : vector<8x128xf32>
    %cst_78 = arith.constant 5.000000e-01 : f32
    %190 = vector.broadcast %cst_78 : f32 to vector<8x128xf32>
    %191 = arith.addf %189, %190 : vector<8x128xf32>
    %192 = arith.mulf %181, %119 : vector<8x128xf32>
    %193 = arith.mulf %173, %183 : vector<8x128xf32>
    %194 = arith.addf %192, %193 : vector<8x128xf32>
    %195 = math.tanh %194 : vector<8x128xf32>
    %196 = arith.mulf %191, %195 : vector<8x128xf32>
    %197 = arith.truncf %196 : vector<8x128xf32> to vector<8x128xbf16>
    %198 = arith.truncf %160 : vector<8x128xf32> to vector<8x128xbf16>
    %199 = tpu.concatenate %197, %198 in 1 : vector<8x128xbf16>, vector<8x128xbf16> -> vector<8x256xbf16>
    %c0_79 = arith.constant 0 : index
    %c0_80 = arith.constant 0 : index
    %200 = vector.load %arg4[%c0_79, %c0_80] : memref<256x512xbf16, #tpu.memory_space<vmem>>, vector<256x512xbf16>
    %cst_81 = arith.constant dense<0.000000e+00> : vector<8x512xf32>
    %201 = tpu.matmul %199, %200, %cst_81 {dimension_numbers = #tpu.dot_dimension_numbers<[1], [0], [0], [1], [0, 0, 1, 1], [], []>} : vector<8x256xbf16>, vector<256x512xbf16>, vector<8x512xf32> -> vector<8x512xf32>
    %c0_82 = arith.constant 0 : index
    %c0_83 = arith.constant 0 : index
    %202 = vector.load %arg5[%c0_82, %c0_83] : memref<1x512xf32, #tpu.memory_space<vmem>>, vector<1x512xf32>
    %203 = vector.broadcast %202 : vector<1x512xf32> to vector<8x512xf32>
    %204 = arith.addf %201, %203 : vector<8x512xf32>
    %205 = vector.extract_strided_slice %204 {offsets = [0, 0], sizes = [8, 128], strides = [1, 1]} : vector<8x512xf32> to vector<8x128xf32>
    %cst_84 = arith.constant 5.000000e-01 : f32
    %206 = vector.broadcast %cst_84 : f32 to vector<8x128xf32>
    %207 = arith.mulf %206, %205 : vector<8x128xf32>
    %208 = math.tanh %207 : vector<8x128xf32>
    %cst_85 = arith.constant 5.000000e-01 : f32
    %209 = vector.broadcast %cst_85 : f32 to vector<8x128xf32>
    %210 = arith.mulf %209, %208 : vector<8x128xf32>
    %cst_86 = arith.constant 5.000000e-01 : f32
    %211 = vector.broadcast %cst_86 : f32 to vector<8x128xf32>
    %212 = arith.addf %210, %211 : vector<8x128xf32>
    %213 = vector.extract_strided_slice %204 {offsets = [0, 128], sizes = [8, 128], strides = [1, 1]} : vector<8x512xf32> to vector<8x128xf32>
    %cst_87 = arith.constant 5.000000e-01 : f32
    %214 = vector.broadcast %cst_87 : f32 to vector<8x128xf32>
    %215 = arith.mulf %214, %213 : vector<8x128xf32>
    %216 = math.tanh %215 : vector<8x128xf32>
    %cst_88 = arith.constant 5.000000e-01 : f32
    %217 = vector.broadcast %cst_88 : f32 to vector<8x128xf32>
    %218 = arith.mulf %217, %216 : vector<8x128xf32>
    %cst_89 = arith.constant 5.000000e-01 : f32
    %219 = vector.broadcast %cst_89 : f32 to vector<8x128xf32>
    %220 = arith.addf %218, %219 : vector<8x128xf32>
    %221 = vector.extract_strided_slice %204 {offsets = [0, 256], sizes = [8, 128], strides = [1, 1]} : vector<8x512xf32> to vector<8x128xf32>
    %222 = math.tanh %221 : vector<8x128xf32>
    %223 = vector.extract_strided_slice %204 {offsets = [0, 384], sizes = [8, 128], strides = [1, 1]} : vector<8x512xf32> to vector<8x128xf32>
    %cst_90 = arith.constant 5.000000e-01 : f32
    %224 = vector.broadcast %cst_90 : f32 to vector<8x128xf32>
    %225 = arith.mulf %224, %223 : vector<8x128xf32>
    %226 = math.tanh %225 : vector<8x128xf32>
    %cst_91 = arith.constant 5.000000e-01 : f32
    %227 = vector.broadcast %cst_91 : f32 to vector<8x128xf32>
    %228 = arith.mulf %227, %226 : vector<8x128xf32>
    %cst_92 = arith.constant 5.000000e-01 : f32
    %229 = vector.broadcast %cst_92 : f32 to vector<8x128xf32>
    %230 = arith.addf %228, %229 : vector<8x128xf32>
    %231 = arith.mulf %220, %158 : vector<8x128xf32>
    %232 = arith.mulf %212, %222 : vector<8x128xf32>
    %233 = arith.addf %231, %232 : vector<8x128xf32>
    %234 = math.tanh %233 : vector<8x128xf32>
    %235 = arith.mulf %230, %234 : vector<8x128xf32>
    %c24 = arith.constant 24 : index
    %c0_93 = arith.constant 0 : index
    %236 = vector.load %arg9[%c24, %c0_93] : memref<64x512xf32, #tpu.memory_space<vmem>>, vector<8x512xf32>
    %237 = arith.truncf %196 : vector<8x128xf32> to vector<8x128xbf16>
    %c0_94 = arith.constant 0 : index
    %c0_95 = arith.constant 0 : index
    %238 = vector.load %arg3[%c0_94, %c0_95] : memref<128x512xbf16, #tpu.memory_space<vmem>>, vector<128x512xbf16>
    %cst_96 = arith.constant dense<0.000000e+00> : vector<8x512xf32>
    %239 = tpu.matmul %237, %238, %cst_96 {dimension_numbers = #tpu.dot_dimension_numbers<[1], [0], [0], [1], [0, 0, 1, 1], [], []>} : vector<8x128xbf16>, vector<128x512xbf16>, vector<8x512xf32> -> vector<8x512xf32>
    %240 = arith.addf %236, %239 : vector<8x512xf32>
    %241 = vector.extract_strided_slice %240 {offsets = [0, 0], sizes = [8, 128], strides = [1, 1]} : vector<8x512xf32> to vector<8x128xf32>
    %cst_97 = arith.constant 5.000000e-01 : f32
    %242 = vector.broadcast %cst_97 : f32 to vector<8x128xf32>
    %243 = arith.mulf %242, %241 : vector<8x128xf32>
    %244 = math.tanh %243 : vector<8x128xf32>
    %cst_98 = arith.constant 5.000000e-01 : f32
    %245 = vector.broadcast %cst_98 : f32 to vector<8x128xf32>
    %246 = arith.mulf %245, %244 : vector<8x128xf32>
    %cst_99 = arith.constant 5.000000e-01 : f32
    %247 = vector.broadcast %cst_99 : f32 to vector<8x128xf32>
    %248 = arith.addf %246, %247 : vector<8x128xf32>
    %249 = vector.extract_strided_slice %240 {offsets = [0, 128], sizes = [8, 128], strides = [1, 1]} : vector<8x512xf32> to vector<8x128xf32>
    %cst_100 = arith.constant 5.000000e-01 : f32
    %250 = vector.broadcast %cst_100 : f32 to vector<8x128xf32>
    %251 = arith.mulf %250, %249 : vector<8x128xf32>
    %252 = math.tanh %251 : vector<8x128xf32>
    %cst_101 = arith.constant 5.000000e-01 : f32
    %253 = vector.broadcast %cst_101 : f32 to vector<8x128xf32>
    %254 = arith.mulf %253, %252 : vector<8x128xf32>
    %cst_102 = arith.constant 5.000000e-01 : f32
    %255 = vector.broadcast %cst_102 : f32 to vector<8x128xf32>
    %256 = arith.addf %254, %255 : vector<8x128xf32>
    %257 = vector.extract_strided_slice %240 {offsets = [0, 256], sizes = [8, 128], strides = [1, 1]} : vector<8x512xf32> to vector<8x128xf32>
    %258 = math.tanh %257 : vector<8x128xf32>
    %259 = vector.extract_strided_slice %240 {offsets = [0, 384], sizes = [8, 128], strides = [1, 1]} : vector<8x512xf32> to vector<8x128xf32>
    %cst_103 = arith.constant 5.000000e-01 : f32
    %260 = vector.broadcast %cst_103 : f32 to vector<8x128xf32>
    %261 = arith.mulf %260, %259 : vector<8x128xf32>
    %262 = math.tanh %261 : vector<8x128xf32>
    %cst_104 = arith.constant 5.000000e-01 : f32
    %263 = vector.broadcast %cst_104 : f32 to vector<8x128xf32>
    %264 = arith.mulf %263, %262 : vector<8x128xf32>
    %cst_105 = arith.constant 5.000000e-01 : f32
    %265 = vector.broadcast %cst_105 : f32 to vector<8x128xf32>
    %266 = arith.addf %264, %265 : vector<8x128xf32>
    %267 = arith.mulf %256, %194 : vector<8x128xf32>
    %268 = arith.mulf %248, %258 : vector<8x128xf32>
    %269 = arith.addf %267, %268 : vector<8x128xf32>
    %270 = math.tanh %269 : vector<8x128xf32>
    %271 = arith.mulf %266, %270 : vector<8x128xf32>
    %272 = arith.truncf %271 : vector<8x128xf32> to vector<8x128xbf16>
    %273 = arith.truncf %235 : vector<8x128xf32> to vector<8x128xbf16>
    %274 = tpu.concatenate %272, %273 in 1 : vector<8x128xbf16>, vector<8x128xbf16> -> vector<8x256xbf16>
    %c0_106 = arith.constant 0 : index
    %c0_107 = arith.constant 0 : index
    %275 = vector.load %arg4[%c0_106, %c0_107] : memref<256x512xbf16, #tpu.memory_space<vmem>>, vector<256x512xbf16>
    %cst_108 = arith.constant dense<0.000000e+00> : vector<8x512xf32>
    %276 = tpu.matmul %274, %275, %cst_108 {dimension_numbers = #tpu.dot_dimension_numbers<[1], [0], [0], [1], [0, 0, 1, 1], [], []>} : vector<8x256xbf16>, vector<256x512xbf16>, vector<8x512xf32> -> vector<8x512xf32>
    %c0_109 = arith.constant 0 : index
    %c0_110 = arith.constant 0 : index
    %277 = vector.load %arg5[%c0_109, %c0_110] : memref<1x512xf32, #tpu.memory_space<vmem>>, vector<1x512xf32>
    %278 = vector.broadcast %277 : vector<1x512xf32> to vector<8x512xf32>
    %279 = arith.addf %276, %278 : vector<8x512xf32>
    %280 = vector.extract_strided_slice %279 {offsets = [0, 0], sizes = [8, 128], strides = [1, 1]} : vector<8x512xf32> to vector<8x128xf32>
    %cst_111 = arith.constant 5.000000e-01 : f32
    %281 = vector.broadcast %cst_111 : f32 to vector<8x128xf32>
    %282 = arith.mulf %281, %280 : vector<8x128xf32>
    %283 = math.tanh %282 : vector<8x128xf32>
    %cst_112 = arith.constant 5.000000e-01 : f32
    %284 = vector.broadcast %cst_112 : f32 to vector<8x128xf32>
    %285 = arith.mulf %284, %283 : vector<8x128xf32>
    %cst_113 = arith.constant 5.000000e-01 : f32
    %286 = vector.broadcast %cst_113 : f32 to vector<8x128xf32>
    %287 = arith.addf %285, %286 : vector<8x128xf32>
    %288 = vector.extract_strided_slice %279 {offsets = [0, 128], sizes = [8, 128], strides = [1, 1]} : vector<8x512xf32> to vector<8x128xf32>
    %cst_114 = arith.constant 5.000000e-01 : f32
    %289 = vector.broadcast %cst_114 : f32 to vector<8x128xf32>
    %290 = arith.mulf %289, %288 : vector<8x128xf32>
    %291 = math.tanh %290 : vector<8x128xf32>
    %cst_115 = arith.constant 5.000000e-01 : f32
    %292 = vector.broadcast %cst_115 : f32 to vector<8x128xf32>
    %293 = arith.mulf %292, %291 : vector<8x128xf32>
    %cst_116 = arith.constant 5.000000e-01 : f32
    %294 = vector.broadcast %cst_116 : f32 to vector<8x128xf32>
    %295 = arith.addf %293, %294 : vector<8x128xf32>
    %296 = vector.extract_strided_slice %279 {offsets = [0, 256], sizes = [8, 128], strides = [1, 1]} : vector<8x512xf32> to vector<8x128xf32>
    %297 = math.tanh %296 : vector<8x128xf32>
    %298 = vector.extract_strided_slice %279 {offsets = [0, 384], sizes = [8, 128], strides = [1, 1]} : vector<8x512xf32> to vector<8x128xf32>
    %cst_117 = arith.constant 5.000000e-01 : f32
    %299 = vector.broadcast %cst_117 : f32 to vector<8x128xf32>
    %300 = arith.mulf %299, %298 : vector<8x128xf32>
    %301 = math.tanh %300 : vector<8x128xf32>
    %cst_118 = arith.constant 5.000000e-01 : f32
    %302 = vector.broadcast %cst_118 : f32 to vector<8x128xf32>
    %303 = arith.mulf %302, %301 : vector<8x128xf32>
    %cst_119 = arith.constant 5.000000e-01 : f32
    %304 = vector.broadcast %cst_119 : f32 to vector<8x128xf32>
    %305 = arith.addf %303, %304 : vector<8x128xf32>
    %306 = arith.mulf %295, %233 : vector<8x128xf32>
    %307 = arith.mulf %287, %297 : vector<8x128xf32>
    %308 = arith.addf %306, %307 : vector<8x128xf32>
    %309 = math.tanh %308 : vector<8x128xf32>
    %310 = arith.mulf %305, %309 : vector<8x128xf32>
    %c32 = arith.constant 32 : index
    %c0_120 = arith.constant 0 : index
    %311 = vector.load %arg9[%c32, %c0_120] : memref<64x512xf32, #tpu.memory_space<vmem>>, vector<8x512xf32>
    %312 = arith.truncf %271 : vector<8x128xf32> to vector<8x128xbf16>
    %c0_121 = arith.constant 0 : index
    %c0_122 = arith.constant 0 : index
    %313 = vector.load %arg3[%c0_121, %c0_122] : memref<128x512xbf16, #tpu.memory_space<vmem>>, vector<128x512xbf16>
    %cst_123 = arith.constant dense<0.000000e+00> : vector<8x512xf32>
    %314 = tpu.matmul %312, %313, %cst_123 {dimension_numbers = #tpu.dot_dimension_numbers<[1], [0], [0], [1], [0, 0, 1, 1], [], []>} : vector<8x128xbf16>, vector<128x512xbf16>, vector<8x512xf32> -> vector<8x512xf32>
    %315 = arith.addf %311, %314 : vector<8x512xf32>
    %316 = vector.extract_strided_slice %315 {offsets = [0, 0], sizes = [8, 128], strides = [1, 1]} : vector<8x512xf32> to vector<8x128xf32>
    %cst_124 = arith.constant 5.000000e-01 : f32
    %317 = vector.broadcast %cst_124 : f32 to vector<8x128xf32>
    %318 = arith.mulf %317, %316 : vector<8x128xf32>
    %319 = math.tanh %318 : vector<8x128xf32>
    %cst_125 = arith.constant 5.000000e-01 : f32
    %320 = vector.broadcast %cst_125 : f32 to vector<8x128xf32>
    %321 = arith.mulf %320, %319 : vector<8x128xf32>
    %cst_126 = arith.constant 5.000000e-01 : f32
    %322 = vector.broadcast %cst_126 : f32 to vector<8x128xf32>
    %323 = arith.addf %321, %322 : vector<8x128xf32>
    %324 = vector.extract_strided_slice %315 {offsets = [0, 128], sizes = [8, 128], strides = [1, 1]} : vector<8x512xf32> to vector<8x128xf32>
    %cst_127 = arith.constant 5.000000e-01 : f32
    %325 = vector.broadcast %cst_127 : f32 to vector<8x128xf32>
    %326 = arith.mulf %325, %324 : vector<8x128xf32>
    %327 = math.tanh %326 : vector<8x128xf32>
    %cst_128 = arith.constant 5.000000e-01 : f32
    %328 = vector.broadcast %cst_128 : f32 to vector<8x128xf32>
    %329 = arith.mulf %328, %327 : vector<8x128xf32>
    %cst_129 = arith.constant 5.000000e-01 : f32
    %330 = vector.broadcast %cst_129 : f32 to vector<8x128xf32>
    %331 = arith.addf %329, %330 : vector<8x128xf32>
    %332 = vector.extract_strided_slice %315 {offsets = [0, 256], sizes = [8, 128], strides = [1, 1]} : vector<8x512xf32> to vector<8x128xf32>
    %333 = math.tanh %332 : vector<8x128xf32>
    %334 = vector.extract_strided_slice %315 {offsets = [0, 384], sizes = [8, 128], strides = [1, 1]} : vector<8x512xf32> to vector<8x128xf32>
    %cst_130 = arith.constant 5.000000e-01 : f32
    %335 = vector.broadcast %cst_130 : f32 to vector<8x128xf32>
    %336 = arith.mulf %335, %334 : vector<8x128xf32>
    %337 = math.tanh %336 : vector<8x128xf32>
    %cst_131 = arith.constant 5.000000e-01 : f32
    %338 = vector.broadcast %cst_131 : f32 to vector<8x128xf32>
    %339 = arith.mulf %338, %337 : vector<8x128xf32>
    %cst_132 = arith.constant 5.000000e-01 : f32
    %340 = vector.broadcast %cst_132 : f32 to vector<8x128xf32>
    %341 = arith.addf %339, %340 : vector<8x128xf32>
    %342 = arith.mulf %331, %269 : vector<8x128xf32>
    %343 = arith.mulf %323, %333 : vector<8x128xf32>
    %344 = arith.addf %342, %343 : vector<8x128xf32>
    %345 = math.tanh %344 : vector<8x128xf32>
    %346 = arith.mulf %341, %345 : vector<8x128xf32>
    %347 = arith.truncf %346 : vector<8x128xf32> to vector<8x128xbf16>
    %348 = arith.truncf %310 : vector<8x128xf32> to vector<8x128xbf16>
    %349 = tpu.concatenate %347, %348 in 1 : vector<8x128xbf16>, vector<8x128xbf16> -> vector<8x256xbf16>
    %c0_133 = arith.constant 0 : index
    %c0_134 = arith.constant 0 : index
    %350 = vector.load %arg4[%c0_133, %c0_134] : memref<256x512xbf16, #tpu.memory_space<vmem>>, vector<256x512xbf16>
    %cst_135 = arith.constant dense<0.000000e+00> : vector<8x512xf32>
    %351 = tpu.matmul %349, %350, %cst_135 {dimension_numbers = #tpu.dot_dimension_numbers<[1], [0], [0], [1], [0, 0, 1, 1], [], []>} : vector<8x256xbf16>, vector<256x512xbf16>, vector<8x512xf32> -> vector<8x512xf32>
    %c0_136 = arith.constant 0 : index
    %c0_137 = arith.constant 0 : index
    %352 = vector.load %arg5[%c0_136, %c0_137] : memref<1x512xf32, #tpu.memory_space<vmem>>, vector<1x512xf32>
    %353 = vector.broadcast %352 : vector<1x512xf32> to vector<8x512xf32>
    %354 = arith.addf %351, %353 : vector<8x512xf32>
    %355 = vector.extract_strided_slice %354 {offsets = [0, 0], sizes = [8, 128], strides = [1, 1]} : vector<8x512xf32> to vector<8x128xf32>
    %cst_138 = arith.constant 5.000000e-01 : f32
    %356 = vector.broadcast %cst_138 : f32 to vector<8x128xf32>
    %357 = arith.mulf %356, %355 : vector<8x128xf32>
    %358 = math.tanh %357 : vector<8x128xf32>
    %cst_139 = arith.constant 5.000000e-01 : f32
    %359 = vector.broadcast %cst_139 : f32 to vector<8x128xf32>
    %360 = arith.mulf %359, %358 : vector<8x128xf32>
    %cst_140 = arith.constant 5.000000e-01 : f32
    %361 = vector.broadcast %cst_140 : f32 to vector<8x128xf32>
    %362 = arith.addf %360, %361 : vector<8x128xf32>
    %363 = vector.extract_strided_slice %354 {offsets = [0, 128], sizes = [8, 128], strides = [1, 1]} : vector<8x512xf32> to vector<8x128xf32>
    %cst_141 = arith.constant 5.000000e-01 : f32
    %364 = vector.broadcast %cst_141 : f32 to vector<8x128xf32>
    %365 = arith.mulf %364, %363 : vector<8x128xf32>
    %366 = math.tanh %365 : vector<8x128xf32>
    %cst_142 = arith.constant 5.000000e-01 : f32
    %367 = vector.broadcast %cst_142 : f32 to vector<8x128xf32>
    %368 = arith.mulf %367, %366 : vector<8x128xf32>
    %cst_143 = arith.constant 5.000000e-01 : f32
    %369 = vector.broadcast %cst_143 : f32 to vector<8x128xf32>
    %370 = arith.addf %368, %369 : vector<8x128xf32>
    %371 = vector.extract_strided_slice %354 {offsets = [0, 256], sizes = [8, 128], strides = [1, 1]} : vector<8x512xf32> to vector<8x128xf32>
    %372 = math.tanh %371 : vector<8x128xf32>
    %373 = vector.extract_strided_slice %354 {offsets = [0, 384], sizes = [8, 128], strides = [1, 1]} : vector<8x512xf32> to vector<8x128xf32>
    %cst_144 = arith.constant 5.000000e-01 : f32
    %374 = vector.broadcast %cst_144 : f32 to vector<8x128xf32>
    %375 = arith.mulf %374, %373 : vector<8x128xf32>
    %376 = math.tanh %375 : vector<8x128xf32>
    %cst_145 = arith.constant 5.000000e-01 : f32
    %377 = vector.broadcast %cst_145 : f32 to vector<8x128xf32>
    %378 = arith.mulf %377, %376 : vector<8x128xf32>
    %cst_146 = arith.constant 5.000000e-01 : f32
    %379 = vector.broadcast %cst_146 : f32 to vector<8x128xf32>
    %380 = arith.addf %378, %379 : vector<8x128xf32>
    %381 = arith.mulf %370, %308 : vector<8x128xf32>
    %382 = arith.mulf %362, %372 : vector<8x128xf32>
    %383 = arith.addf %381, %382 : vector<8x128xf32>
    %384 = math.tanh %383 : vector<8x128xf32>
    %385 = arith.mulf %380, %384 : vector<8x128xf32>
    %c40 = arith.constant 40 : index
    %c0_147 = arith.constant 0 : index
    %386 = vector.load %arg9[%c40, %c0_147] : memref<64x512xf32, #tpu.memory_space<vmem>>, vector<8x512xf32>
    %387 = arith.truncf %346 : vector<8x128xf32> to vector<8x128xbf16>
    %c0_148 = arith.constant 0 : index
    %c0_149 = arith.constant 0 : index
    %388 = vector.load %arg3[%c0_148, %c0_149] : memref<128x512xbf16, #tpu.memory_space<vmem>>, vector<128x512xbf16>
    %cst_150 = arith.constant dense<0.000000e+00> : vector<8x512xf32>
    %389 = tpu.matmul %387, %388, %cst_150 {dimension_numbers = #tpu.dot_dimension_numbers<[1], [0], [0], [1], [0, 0, 1, 1], [], []>} : vector<8x128xbf16>, vector<128x512xbf16>, vector<8x512xf32> -> vector<8x512xf32>
    %390 = arith.addf %386, %389 : vector<8x512xf32>
    %391 = vector.extract_strided_slice %390 {offsets = [0, 0], sizes = [8, 128], strides = [1, 1]} : vector<8x512xf32> to vector<8x128xf32>
    %cst_151 = arith.constant 5.000000e-01 : f32
    %392 = vector.broadcast %cst_151 : f32 to vector<8x128xf32>
    %393 = arith.mulf %392, %391 : vector<8x128xf32>
    %394 = math.tanh %393 : vector<8x128xf32>
    %cst_152 = arith.constant 5.000000e-01 : f32
    %395 = vector.broadcast %cst_152 : f32 to vector<8x128xf32>
    %396 = arith.mulf %395, %394 : vector<8x128xf32>
    %cst_153 = arith.constant 5.000000e-01 : f32
    %397 = vector.broadcast %cst_153 : f32 to vector<8x128xf32>
    %398 = arith.addf %396, %397 : vector<8x128xf32>
    %399 = vector.extract_strided_slice %390 {offsets = [0, 128], sizes = [8, 128], strides = [1, 1]} : vector<8x512xf32> to vector<8x128xf32>
    %cst_154 = arith.constant 5.000000e-01 : f32
    %400 = vector.broadcast %cst_154 : f32 to vector<8x128xf32>
    %401 = arith.mulf %400, %399 : vector<8x128xf32>
    %402 = math.tanh %401 : vector<8x128xf32>
    %cst_155 = arith.constant 5.000000e-01 : f32
    %403 = vector.broadcast %cst_155 : f32 to vector<8x128xf32>
    %404 = arith.mulf %403, %402 : vector<8x128xf32>
    %cst_156 = arith.constant 5.000000e-01 : f32
    %405 = vector.broadcast %cst_156 : f32 to vector<8x128xf32>
    %406 = arith.addf %404, %405 : vector<8x128xf32>
    %407 = vector.extract_strided_slice %390 {offsets = [0, 256], sizes = [8, 128], strides = [1, 1]} : vector<8x512xf32> to vector<8x128xf32>
    %408 = math.tanh %407 : vector<8x128xf32>
    %409 = vector.extract_strided_slice %390 {offsets = [0, 384], sizes = [8, 128], strides = [1, 1]} : vector<8x512xf32> to vector<8x128xf32>
    %cst_157 = arith.constant 5.000000e-01 : f32
    %410 = vector.broadcast %cst_157 : f32 to vector<8x128xf32>
    %411 = arith.mulf %410, %409 : vector<8x128xf32>
    %412 = math.tanh %411 : vector<8x128xf32>
    %cst_158 = arith.constant 5.000000e-01 : f32
    %413 = vector.broadcast %cst_158 : f32 to vector<8x128xf32>
    %414 = arith.mulf %413, %412 : vector<8x128xf32>
    %cst_159 = arith.constant 5.000000e-01 : f32
    %415 = vector.broadcast %cst_159 : f32 to vector<8x128xf32>
    %416 = arith.addf %414, %415 : vector<8x128xf32>
    %417 = arith.mulf %406, %344 : vector<8x128xf32>
    %418 = arith.mulf %398, %408 : vector<8x128xf32>
    %419 = arith.addf %417, %418 : vector<8x128xf32>
    %420 = math.tanh %419 : vector<8x128xf32>
    %421 = arith.mulf %416, %420 : vector<8x128xf32>
    %422 = arith.truncf %421 : vector<8x128xf32> to vector<8x128xbf16>
    %423 = arith.truncf %385 : vector<8x128xf32> to vector<8x128xbf16>
    %424 = tpu.concatenate %422, %423 in 1 : vector<8x128xbf16>, vector<8x128xbf16> -> vector<8x256xbf16>
    %c0_160 = arith.constant 0 : index
    %c0_161 = arith.constant 0 : index
    %425 = vector.load %arg4[%c0_160, %c0_161] : memref<256x512xbf16, #tpu.memory_space<vmem>>, vector<256x512xbf16>
    %cst_162 = arith.constant dense<0.000000e+00> : vector<8x512xf32>
    %426 = tpu.matmul %424, %425, %cst_162 {dimension_numbers = #tpu.dot_dimension_numbers<[1], [0], [0], [1], [0, 0, 1, 1], [], []>} : vector<8x256xbf16>, vector<256x512xbf16>, vector<8x512xf32> -> vector<8x512xf32>
    %c0_163 = arith.constant 0 : index
    %c0_164 = arith.constant 0 : index
    %427 = vector.load %arg5[%c0_163, %c0_164] : memref<1x512xf32, #tpu.memory_space<vmem>>, vector<1x512xf32>
    %428 = vector.broadcast %427 : vector<1x512xf32> to vector<8x512xf32>
    %429 = arith.addf %426, %428 : vector<8x512xf32>
    %430 = vector.extract_strided_slice %429 {offsets = [0, 0], sizes = [8, 128], strides = [1, 1]} : vector<8x512xf32> to vector<8x128xf32>
    %cst_165 = arith.constant 5.000000e-01 : f32
    %431 = vector.broadcast %cst_165 : f32 to vector<8x128xf32>
    %432 = arith.mulf %431, %430 : vector<8x128xf32>
    %433 = math.tanh %432 : vector<8x128xf32>
    %cst_166 = arith.constant 5.000000e-01 : f32
    %434 = vector.broadcast %cst_166 : f32 to vector<8x128xf32>
    %435 = arith.mulf %434, %433 : vector<8x128xf32>
    %cst_167 = arith.constant 5.000000e-01 : f32
    %436 = vector.broadcast %cst_167 : f32 to vector<8x128xf32>
    %437 = arith.addf %435, %436 : vector<8x128xf32>
    %438 = vector.extract_strided_slice %429 {offsets = [0, 128], sizes = [8, 128], strides = [1, 1]} : vector<8x512xf32> to vector<8x128xf32>
    %cst_168 = arith.constant 5.000000e-01 : f32
    %439 = vector.broadcast %cst_168 : f32 to vector<8x128xf32>
    %440 = arith.mulf %439, %438 : vector<8x128xf32>
    %441 = math.tanh %440 : vector<8x128xf32>
    %cst_169 = arith.constant 5.000000e-01 : f32
    %442 = vector.broadcast %cst_169 : f32 to vector<8x128xf32>
    %443 = arith.mulf %442, %441 : vector<8x128xf32>
    %cst_170 = arith.constant 5.000000e-01 : f32
    %444 = vector.broadcast %cst_170 : f32 to vector<8x128xf32>
    %445 = arith.addf %443, %444 : vector<8x128xf32>
    %446 = vector.extract_strided_slice %429 {offsets = [0, 256], sizes = [8, 128], strides = [1, 1]} : vector<8x512xf32> to vector<8x128xf32>
    %447 = math.tanh %446 : vector<8x128xf32>
    %448 = vector.extract_strided_slice %429 {offsets = [0, 384], sizes = [8, 128], strides = [1, 1]} : vector<8x512xf32> to vector<8x128xf32>
    %cst_171 = arith.constant 5.000000e-01 : f32
    %449 = vector.broadcast %cst_171 : f32 to vector<8x128xf32>
    %450 = arith.mulf %449, %448 : vector<8x128xf32>
    %451 = math.tanh %450 : vector<8x128xf32>
    %cst_172 = arith.constant 5.000000e-01 : f32
    %452 = vector.broadcast %cst_172 : f32 to vector<8x128xf32>
    %453 = arith.mulf %452, %451 : vector<8x128xf32>
    %cst_173 = arith.constant 5.000000e-01 : f32
    %454 = vector.broadcast %cst_173 : f32 to vector<8x128xf32>
    %455 = arith.addf %453, %454 : vector<8x128xf32>
    %456 = arith.mulf %445, %383 : vector<8x128xf32>
    %457 = arith.mulf %437, %447 : vector<8x128xf32>
    %458 = arith.addf %456, %457 : vector<8x128xf32>
    %459 = math.tanh %458 : vector<8x128xf32>
    %460 = arith.mulf %455, %459 : vector<8x128xf32>
    %c48 = arith.constant 48 : index
    %c0_174 = arith.constant 0 : index
    %461 = vector.load %arg9[%c48, %c0_174] : memref<64x512xf32, #tpu.memory_space<vmem>>, vector<8x512xf32>
    %462 = arith.truncf %421 : vector<8x128xf32> to vector<8x128xbf16>
    %c0_175 = arith.constant 0 : index
    %c0_176 = arith.constant 0 : index
    %463 = vector.load %arg3[%c0_175, %c0_176] : memref<128x512xbf16, #tpu.memory_space<vmem>>, vector<128x512xbf16>
    %cst_177 = arith.constant dense<0.000000e+00> : vector<8x512xf32>
    %464 = tpu.matmul %462, %463, %cst_177 {dimension_numbers = #tpu.dot_dimension_numbers<[1], [0], [0], [1], [0, 0, 1, 1], [], []>} : vector<8x128xbf16>, vector<128x512xbf16>, vector<8x512xf32> -> vector<8x512xf32>
    %465 = arith.addf %461, %464 : vector<8x512xf32>
    %466 = vector.extract_strided_slice %465 {offsets = [0, 0], sizes = [8, 128], strides = [1, 1]} : vector<8x512xf32> to vector<8x128xf32>
    %cst_178 = arith.constant 5.000000e-01 : f32
    %467 = vector.broadcast %cst_178 : f32 to vector<8x128xf32>
    %468 = arith.mulf %467, %466 : vector<8x128xf32>
    %469 = math.tanh %468 : vector<8x128xf32>
    %cst_179 = arith.constant 5.000000e-01 : f32
    %470 = vector.broadcast %cst_179 : f32 to vector<8x128xf32>
    %471 = arith.mulf %470, %469 : vector<8x128xf32>
    %cst_180 = arith.constant 5.000000e-01 : f32
    %472 = vector.broadcast %cst_180 : f32 to vector<8x128xf32>
    %473 = arith.addf %471, %472 : vector<8x128xf32>
    %474 = vector.extract_strided_slice %465 {offsets = [0, 128], sizes = [8, 128], strides = [1, 1]} : vector<8x512xf32> to vector<8x128xf32>
    %cst_181 = arith.constant 5.000000e-01 : f32
    %475 = vector.broadcast %cst_181 : f32 to vector<8x128xf32>
    %476 = arith.mulf %475, %474 : vector<8x128xf32>
    %477 = math.tanh %476 : vector<8x128xf32>
    %cst_182 = arith.constant 5.000000e-01 : f32
    %478 = vector.broadcast %cst_182 : f32 to vector<8x128xf32>
    %479 = arith.mulf %478, %477 : vector<8x128xf32>
    %cst_183 = arith.constant 5.000000e-01 : f32
    %480 = vector.broadcast %cst_183 : f32 to vector<8x128xf32>
    %481 = arith.addf %479, %480 : vector<8x128xf32>
    %482 = vector.extract_strided_slice %465 {offsets = [0, 256], sizes = [8, 128], strides = [1, 1]} : vector<8x512xf32> to vector<8x128xf32>
    %483 = math.tanh %482 : vector<8x128xf32>
    %484 = vector.extract_strided_slice %465 {offsets = [0, 384], sizes = [8, 128], strides = [1, 1]} : vector<8x512xf32> to vector<8x128xf32>
    %cst_184 = arith.constant 5.000000e-01 : f32
    %485 = vector.broadcast %cst_184 : f32 to vector<8x128xf32>
    %486 = arith.mulf %485, %484 : vector<8x128xf32>
    %487 = math.tanh %486 : vector<8x128xf32>
    %cst_185 = arith.constant 5.000000e-01 : f32
    %488 = vector.broadcast %cst_185 : f32 to vector<8x128xf32>
    %489 = arith.mulf %488, %487 : vector<8x128xf32>
    %cst_186 = arith.constant 5.000000e-01 : f32
    %490 = vector.broadcast %cst_186 : f32 to vector<8x128xf32>
    %491 = arith.addf %489, %490 : vector<8x128xf32>
    %492 = arith.mulf %481, %419 : vector<8x128xf32>
    %493 = arith.mulf %473, %483 : vector<8x128xf32>
    %494 = arith.addf %492, %493 : vector<8x128xf32>
    %495 = math.tanh %494 : vector<8x128xf32>
    %496 = arith.mulf %491, %495 : vector<8x128xf32>
    %497 = arith.truncf %496 : vector<8x128xf32> to vector<8x128xbf16>
    %498 = arith.truncf %460 : vector<8x128xf32> to vector<8x128xbf16>
    %499 = tpu.concatenate %497, %498 in 1 : vector<8x128xbf16>, vector<8x128xbf16> -> vector<8x256xbf16>
    %c0_187 = arith.constant 0 : index
    %c0_188 = arith.constant 0 : index
    %500 = vector.load %arg4[%c0_187, %c0_188] : memref<256x512xbf16, #tpu.memory_space<vmem>>, vector<256x512xbf16>
    %cst_189 = arith.constant dense<0.000000e+00> : vector<8x512xf32>
    %501 = tpu.matmul %499, %500, %cst_189 {dimension_numbers = #tpu.dot_dimension_numbers<[1], [0], [0], [1], [0, 0, 1, 1], [], []>} : vector<8x256xbf16>, vector<256x512xbf16>, vector<8x512xf32> -> vector<8x512xf32>
    %c0_190 = arith.constant 0 : index
    %c0_191 = arith.constant 0 : index
    %502 = vector.load %arg5[%c0_190, %c0_191] : memref<1x512xf32, #tpu.memory_space<vmem>>, vector<1x512xf32>
    %503 = vector.broadcast %502 : vector<1x512xf32> to vector<8x512xf32>
    %504 = arith.addf %501, %503 : vector<8x512xf32>
    %505 = vector.extract_strided_slice %504 {offsets = [0, 0], sizes = [8, 128], strides = [1, 1]} : vector<8x512xf32> to vector<8x128xf32>
    %cst_192 = arith.constant 5.000000e-01 : f32
    %506 = vector.broadcast %cst_192 : f32 to vector<8x128xf32>
    %507 = arith.mulf %506, %505 : vector<8x128xf32>
    %508 = math.tanh %507 : vector<8x128xf32>
    %cst_193 = arith.constant 5.000000e-01 : f32
    %509 = vector.broadcast %cst_193 : f32 to vector<8x128xf32>
    %510 = arith.mulf %509, %508 : vector<8x128xf32>
    %cst_194 = arith.constant 5.000000e-01 : f32
    %511 = vector.broadcast %cst_194 : f32 to vector<8x128xf32>
    %512 = arith.addf %510, %511 : vector<8x128xf32>
    %513 = vector.extract_strided_slice %504 {offsets = [0, 128], sizes = [8, 128], strides = [1, 1]} : vector<8x512xf32> to vector<8x128xf32>
    %cst_195 = arith.constant 5.000000e-01 : f32
    %514 = vector.broadcast %cst_195 : f32 to vector<8x128xf32>
    %515 = arith.mulf %514, %513 : vector<8x128xf32>
    %516 = math.tanh %515 : vector<8x128xf32>
    %cst_196 = arith.constant 5.000000e-01 : f32
    %517 = vector.broadcast %cst_196 : f32 to vector<8x128xf32>
    %518 = arith.mulf %517, %516 : vector<8x128xf32>
    %cst_197 = arith.constant 5.000000e-01 : f32
    %519 = vector.broadcast %cst_197 : f32 to vector<8x128xf32>
    %520 = arith.addf %518, %519 : vector<8x128xf32>
    %521 = vector.extract_strided_slice %504 {offsets = [0, 256], sizes = [8, 128], strides = [1, 1]} : vector<8x512xf32> to vector<8x128xf32>
    %522 = math.tanh %521 : vector<8x128xf32>
    %523 = vector.extract_strided_slice %504 {offsets = [0, 384], sizes = [8, 128], strides = [1, 1]} : vector<8x512xf32> to vector<8x128xf32>
    %cst_198 = arith.constant 5.000000e-01 : f32
    %524 = vector.broadcast %cst_198 : f32 to vector<8x128xf32>
    %525 = arith.mulf %524, %523 : vector<8x128xf32>
    %526 = math.tanh %525 : vector<8x128xf32>
    %cst_199 = arith.constant 5.000000e-01 : f32
    %527 = vector.broadcast %cst_199 : f32 to vector<8x128xf32>
    %528 = arith.mulf %527, %526 : vector<8x128xf32>
    %cst_200 = arith.constant 5.000000e-01 : f32
    %529 = vector.broadcast %cst_200 : f32 to vector<8x128xf32>
    %530 = arith.addf %528, %529 : vector<8x128xf32>
    %531 = arith.mulf %520, %458 : vector<8x128xf32>
    %532 = arith.mulf %512, %522 : vector<8x128xf32>
    %533 = arith.addf %531, %532 : vector<8x128xf32>
    %534 = math.tanh %533 : vector<8x128xf32>
    %535 = arith.mulf %530, %534 : vector<8x128xf32>
    %c56 = arith.constant 56 : index
    %c0_201 = arith.constant 0 : index
    %536 = vector.load %arg9[%c56, %c0_201] : memref<64x512xf32, #tpu.memory_space<vmem>>, vector<8x512xf32>
    %537 = arith.truncf %496 : vector<8x128xf32> to vector<8x128xbf16>
    %c0_202 = arith.constant 0 : index
    %c0_203 = arith.constant 0 : index
    %538 = vector.load %arg3[%c0_202, %c0_203] : memref<128x512xbf16, #tpu.memory_space<vmem>>, vector<128x512xbf16>
    %cst_204 = arith.constant dense<0.000000e+00> : vector<8x512xf32>
    %539 = tpu.matmul %537, %538, %cst_204 {dimension_numbers = #tpu.dot_dimension_numbers<[1], [0], [0], [1], [0, 0, 1, 1], [], []>} : vector<8x128xbf16>, vector<128x512xbf16>, vector<8x512xf32> -> vector<8x512xf32>
    %540 = arith.addf %536, %539 : vector<8x512xf32>
    %541 = vector.extract_strided_slice %540 {offsets = [0, 0], sizes = [8, 128], strides = [1, 1]} : vector<8x512xf32> to vector<8x128xf32>
    %cst_205 = arith.constant 5.000000e-01 : f32
    %542 = vector.broadcast %cst_205 : f32 to vector<8x128xf32>
    %543 = arith.mulf %542, %541 : vector<8x128xf32>
    %544 = math.tanh %543 : vector<8x128xf32>
    %cst_206 = arith.constant 5.000000e-01 : f32
    %545 = vector.broadcast %cst_206 : f32 to vector<8x128xf32>
    %546 = arith.mulf %545, %544 : vector<8x128xf32>
    %cst_207 = arith.constant 5.000000e-01 : f32
    %547 = vector.broadcast %cst_207 : f32 to vector<8x128xf32>
    %548 = arith.addf %546, %547 : vector<8x128xf32>
    %549 = vector.extract_strided_slice %540 {offsets = [0, 128], sizes = [8, 128], strides = [1, 1]} : vector<8x512xf32> to vector<8x128xf32>
    %cst_208 = arith.constant 5.000000e-01 : f32
    %550 = vector.broadcast %cst_208 : f32 to vector<8x128xf32>
    %551 = arith.mulf %550, %549 : vector<8x128xf32>
    %552 = math.tanh %551 : vector<8x128xf32>
    %cst_209 = arith.constant 5.000000e-01 : f32
    %553 = vector.broadcast %cst_209 : f32 to vector<8x128xf32>
    %554 = arith.mulf %553, %552 : vector<8x128xf32>
    %cst_210 = arith.constant 5.000000e-01 : f32
    %555 = vector.broadcast %cst_210 : f32 to vector<8x128xf32>
    %556 = arith.addf %554, %555 : vector<8x128xf32>
    %557 = vector.extract_strided_slice %540 {offsets = [0, 256], sizes = [8, 128], strides = [1, 1]} : vector<8x512xf32> to vector<8x128xf32>
    %558 = math.tanh %557 : vector<8x128xf32>
    %559 = vector.extract_strided_slice %540 {offsets = [0, 384], sizes = [8, 128], strides = [1, 1]} : vector<8x512xf32> to vector<8x128xf32>
    %cst_211 = arith.constant 5.000000e-01 : f32
    %560 = vector.broadcast %cst_211 : f32 to vector<8x128xf32>
    %561 = arith.mulf %560, %559 : vector<8x128xf32>
    %562 = math.tanh %561 : vector<8x128xf32>
    %cst_212 = arith.constant 5.000000e-01 : f32
    %563 = vector.broadcast %cst_212 : f32 to vector<8x128xf32>
    %564 = arith.mulf %563, %562 : vector<8x128xf32>
    %cst_213 = arith.constant 5.000000e-01 : f32
    %565 = vector.broadcast %cst_213 : f32 to vector<8x128xf32>
    %566 = arith.addf %564, %565 : vector<8x128xf32>
    %567 = arith.mulf %556, %494 : vector<8x128xf32>
    %568 = arith.mulf %548, %558 : vector<8x128xf32>
    %569 = arith.addf %567, %568 : vector<8x128xf32>
    %570 = math.tanh %569 : vector<8x128xf32>
    %571 = arith.mulf %566, %570 : vector<8x128xf32>
    %572 = arith.truncf %571 : vector<8x128xf32> to vector<8x128xbf16>
    %573 = arith.truncf %535 : vector<8x128xf32> to vector<8x128xbf16>
    %574 = tpu.concatenate %572, %573 in 1 : vector<8x128xbf16>, vector<8x128xbf16> -> vector<8x256xbf16>
    %c0_214 = arith.constant 0 : index
    %c0_215 = arith.constant 0 : index
    %575 = vector.load %arg4[%c0_214, %c0_215] : memref<256x512xbf16, #tpu.memory_space<vmem>>, vector<256x512xbf16>
    %cst_216 = arith.constant dense<0.000000e+00> : vector<8x512xf32>
    %576 = tpu.matmul %574, %575, %cst_216 {dimension_numbers = #tpu.dot_dimension_numbers<[1], [0], [0], [1], [0, 0, 1, 1], [], []>} : vector<8x256xbf16>, vector<256x512xbf16>, vector<8x512xf32> -> vector<8x512xf32>
    %c0_217 = arith.constant 0 : index
    %c0_218 = arith.constant 0 : index
    %577 = vector.load %arg5[%c0_217, %c0_218] : memref<1x512xf32, #tpu.memory_space<vmem>>, vector<1x512xf32>
    %578 = vector.broadcast %577 : vector<1x512xf32> to vector<8x512xf32>
    %579 = arith.addf %576, %578 : vector<8x512xf32>
    %580 = vector.extract_strided_slice %579 {offsets = [0, 0], sizes = [8, 128], strides = [1, 1]} : vector<8x512xf32> to vector<8x128xf32>
    %cst_219 = arith.constant 5.000000e-01 : f32
    %581 = vector.broadcast %cst_219 : f32 to vector<8x128xf32>
    %582 = arith.mulf %581, %580 : vector<8x128xf32>
    %583 = math.tanh %582 : vector<8x128xf32>
    %cst_220 = arith.constant 5.000000e-01 : f32
    %584 = vector.broadcast %cst_220 : f32 to vector<8x128xf32>
    %585 = arith.mulf %584, %583 : vector<8x128xf32>
    %cst_221 = arith.constant 5.000000e-01 : f32
    %586 = vector.broadcast %cst_221 : f32 to vector<8x128xf32>
    %587 = arith.addf %585, %586 : vector<8x128xf32>
    %588 = vector.extract_strided_slice %579 {offsets = [0, 128], sizes = [8, 128], strides = [1, 1]} : vector<8x512xf32> to vector<8x128xf32>
    %cst_222 = arith.constant 5.000000e-01 : f32
    %589 = vector.broadcast %cst_222 : f32 to vector<8x128xf32>
    %590 = arith.mulf %589, %588 : vector<8x128xf32>
    %591 = math.tanh %590 : vector<8x128xf32>
    %cst_223 = arith.constant 5.000000e-01 : f32
    %592 = vector.broadcast %cst_223 : f32 to vector<8x128xf32>
    %593 = arith.mulf %592, %591 : vector<8x128xf32>
    %cst_224 = arith.constant 5.000000e-01 : f32
    %594 = vector.broadcast %cst_224 : f32 to vector<8x128xf32>
    %595 = arith.addf %593, %594 : vector<8x128xf32>
    %596 = vector.extract_strided_slice %579 {offsets = [0, 256], sizes = [8, 128], strides = [1, 1]} : vector<8x512xf32> to vector<8x128xf32>
    %597 = math.tanh %596 : vector<8x128xf32>
    %598 = vector.extract_strided_slice %579 {offsets = [0, 384], sizes = [8, 128], strides = [1, 1]} : vector<8x512xf32> to vector<8x128xf32>
    %cst_225 = arith.constant 5.000000e-01 : f32
    %599 = vector.broadcast %cst_225 : f32 to vector<8x128xf32>
    %600 = arith.mulf %599, %598 : vector<8x128xf32>
    %601 = math.tanh %600 : vector<8x128xf32>
    %cst_226 = arith.constant 5.000000e-01 : f32
    %602 = vector.broadcast %cst_226 : f32 to vector<8x128xf32>
    %603 = arith.mulf %602, %601 : vector<8x128xf32>
    %cst_227 = arith.constant 5.000000e-01 : f32
    %604 = vector.broadcast %cst_227 : f32 to vector<8x128xf32>
    %605 = arith.addf %603, %604 : vector<8x128xf32>
    %606 = arith.mulf %595, %533 : vector<8x128xf32>
    %607 = arith.mulf %587, %597 : vector<8x128xf32>
    %608 = arith.addf %606, %607 : vector<8x128xf32>
    %609 = math.tanh %608 : vector<8x128xf32>
    %610 = arith.mulf %605, %609 : vector<8x128xf32>
    %c0_228 = arith.constant 0 : index
    %c0_229 = arith.constant 0 : index
    %611 = vector.load %arg6[%c0_228, %c0_229] : memref<128x1xf32, #tpu.memory_space<vmem>>, vector<128x1xf32>
    %cst_230 = arith.constant dense<0.000000e+00> : vector<8x1xf32>
    %612 = tpu.matmul %610, %611, %cst_230 {dimension_numbers = #tpu.dot_dimension_numbers<[1], [0], [0], [1], [0, 0, 1, 1], [], []>} : vector<8x128xf32>, vector<128x1xf32>, vector<8x1xf32> -> vector<8x1xf32>
    %c0_231 = arith.constant 0 : index
    %c0_232 = arith.constant 0 : index
    %613 = vector.load %arg7[%c0_231, %c0_232] : memref<1x1xf32, #tpu.memory_space<vmem>>, vector<1x1xf32>
    %614 = vector.broadcast %613 : vector<1x1xf32> to vector<8x1xf32>
    %615 = arith.addf %612, %614 : vector<8x1xf32>
    %c0_233 = arith.constant 0 : index
    %c0_234 = arith.constant 0 : index
    %616 = vector.load %arg8[%c0_233, %c0_234] : memref<8x1xf32, #tpu.memory_space<vmem>>, vector<8x1xf32>
    tpu.vector_store %arg8[%c0_233, %c0_234], %615 {strides = array<i32>} : memref<8x1xf32, #tpu.memory_space<vmem>>, vector<8x1xf32>,
    return
  }
}

</mosaic_0001>

<llo_original>
// kernel: tpu_custom_call.1
$region0: #{tpu_custom_call.1}
  #allocation0 [shape = 'u32[]', space=smem, size = 0x4, offset = 0x4, fixed_abs, tag = 'smem constant byte address 0x4 - core index']
  #allocation1 [shape = 'u32[144,128]{1,0:T(1,128)}', space=vmem, size = 0x12000, scoped, tag = 'internal scratch']
  #allocation2 [shape = 'f32[64,512]{1,0:T(8,128)}', space=vmem, size = 0x20000, scoped, tag = 'scratch operand']
  #allocation3 [shape = 'f32[1,1]{1,0:T(1,128)S(1)}', space=vmem, size = 0x200, scoped, tag = 'scoped memory for tpu_custom_call.1']
  %s0 = inlined_call_operand.vmem [shape: f32[64,16], index: 0, kind: input, shape index: {}]
  %s1 = inlined_call_operand.vmem [shape: f32[16,512], index: 1, kind: input, shape index: {}]
  %s2 = inlined_call_operand.vmem [shape: f32[1,512], index: 2, kind: input, shape index: {}]
  %s3 = inlined_call_operand.hbm [shape: bf16[128,512], index: 3, kind: input, shape index: {}]
  %s4 = inlined_call_operand.hbm [shape: bf16[256,512], index: 4, kind: input, shape index: {}]
  %s5 = inlined_call_operand.vmem [shape: f32[1,512], index: 5, kind: input, shape index: {}]
  %s6 = inlined_call_operand.vmem [shape: f32[128,1], index: 6, kind: input, shape index: {}]
  %s7 = inlined_call_operand.<no memory space> [shape: f32[1,1], index: 7, kind: input, shape index: {}]
  %s8 = inlined_call_operand.vmem [shape: f32[8,1], index: 8, kind: output, shape index: {}]
  %s9 = sld [smem:[#allocation0]]
  $region50: #{tpu_custom_call.1} parent=0
    _
  %s11 = ssub.s32 1, %s9
  %s12 = scalar_select 0, %s11, %s9
  %v13 = vstv %s7
  %14 = vst [vmem:[#allocation3] sm:$0x1] %v13
  $region1: #{tpu_custom_call.1} parent=0
    #allocation4 [shape = 'u8[131072]{0}', space=vmem, size = 0x20000, scoped, tag = 'input window, operand 3, single buffered']
    #allocation5 [shape = 's32[1]{0}', space=sflag, size = 0x4, scoped, tag = 'scoped memory for tpu_custom_call.1']
    #allocation6 [shape = 'u8[262144]{0}', space=vmem, size = 0x40000, scoped, tag = 'input window, operand 4, single buffered']
    #allocation7 [shape = 's32[1]{0}', space=sflag, size = 0x4, scoped, tag = 'scoped memory for tpu_custom_call.1']
    %15 = vsyncpa [#allocation5], 0
    %16 = vsyncpa [#allocation7], 0
    // Predicated region
    $region2: #{tpu_custom_call.1} parent=1 // pred_check
      _
    $region3: #{tpu_custom_call.1} parent=1 // pred_check_branch
      %18 = sbr.rel (0) target = $region5
    $region4: #{tpu_custom_call.1} parent=1 // pred_region
      _
    $region5: #{tpu_custom_call.1} parent=1 // pred_fallthru
      _
    // Predicated region
    $region6: #{tpu_custom_call.1} parent=1 // pred_check
      _
    $region7: #{tpu_custom_call.1} parent=1 // pred_check_branch
      %20 = sbr.rel (0) target = $region9
    $region8: #{tpu_custom_call.1} parent=1 // pred_region
      _
    $region9: #{tpu_custom_call.1} parent=1 // pred_fallthru
      _
    // Predicated region
    $region10: #{tpu_custom_call.1} parent=1 // pred_check
      _
    $region11: #{tpu_custom_call.1} parent=1 // pred_check_branch
      %22 = sbr.rel (0) target = $region13
    $region12: #{tpu_custom_call.1} parent=1 // pred_region
      _
    $region13: #{tpu_custom_call.1} parent=1 // pred_fallthru
      _
    // Predicated region
    $region14: #{tpu_custom_call.1} parent=1 // pred_check
      _
    $region15: #{tpu_custom_call.1} parent=1 // pred_check_branch
      %24 = sbr.rel (0) target = $region17
    $region16: #{tpu_custom_call.1} parent=1 // pred_region
      %s26 = ssub.s32 4096, 4096
      %27 = vsyncadd [#allocation5], %s26
      %s28 = sshll.u32 [#allocation4], 4
      %s29 = int_to_ptr.vmem [resolvable:$true] %s28
      %34 = dma.hbm_to_vmem [thread:$0]  %s3, 4096, %s29, [#allocation5], 256, 256, 16
    $region17: #{tpu_custom_call.1} parent=1 // pred_fallthru
      _
    // Predicated region
    $region18: #{tpu_custom_call.1} parent=1 // pred_check
      _
    $region19: #{tpu_custom_call.1} parent=1 // pred_check_branch
      %36 = sbr.rel (0) target = $region21
    $region20: #{tpu_custom_call.1} parent=1 // pred_region
      %s38 = ssub.s32 8192, 8192
      %39 = vsyncadd [#allocation7], %s38
      %s40 = sshll.u32 [#allocation6], 4
      %s41 = int_to_ptr.vmem [resolvable:$true] %s40
      %46 = dma.hbm_to_vmem [thread:$0]  %s4, 8192, %s41, [#allocation7], 256, 256, 16
    $region21: #{tpu_custom_call.1} parent=1 // pred_fallthru
      _
    // Predicated region
    $region22: #{tpu_custom_call.1} parent=1 // pred_check
      _
    $region23: #{tpu_custom_call.1} parent=1 // pred_check_branch
      %48 = sbr.rel (0) target = $region25
    $region24: #{tpu_custom_call.1} parent=1 // pred_region
      _
    $region25: #{tpu_custom_call.1} parent=1 // pred_fallthru
      _
    // Predicated region
    $region26: #{tpu_custom_call.1} parent=1 // pred_check
      _
    $region27: #{tpu_custom_call.1} parent=1 // pred_check_branch
      %50 = sbr.rel (0) target = $region29
    $region28: #{tpu_custom_call.1} parent=1 // pred_region
      _
    $region29: #{tpu_custom_call.1} parent=1 // pred_fallthru
      _
    // Predicated region
    $region30: #{tpu_custom_call.1} parent=1 // pred_check
      _
    $region31: #{tpu_custom_call.1} parent=1 // pred_check_branch
      %52 = sbr.rel (0) target = $region33
    $region32: #{tpu_custom_call.1} parent=1 // pred_region
      _
    $region33: #{tpu_custom_call.1} parent=1 // pred_fallthru
      _
    // Predicated region
    $region34: #{tpu_custom_call.1} parent=1 // pred_check
      _
    $region35: #{tpu_custom_call.1} parent=1 // pred_check_branch
      %54 = sbr.rel (0) target = $region37
    $region36: #{tpu_custom_call.1} parent=1 // pred_region
      %55 = dma.done [#allocation5], 4096
    $region37: #{tpu_custom_call.1} parent=1 // pred_fallthru
      _
    // Predicated region
    $region38: #{tpu_custom_call.1} parent=1 // pred_check
      _
    $region39: #{tpu_custom_call.1} parent=1 // pred_check_branch
      %57 = sbr.rel (0) target = $region41
    $region40: #{tpu_custom_call.1} parent=1 // pred_region
      %58 = dma.done [#allocation7], 8192
    $region41: #{tpu_custom_call.1} parent=1 // pred_fallthru
      _
    %v60 = vld [vmem:[%s0] sm:$0xff]
    %v61 = vld [vmem:[%s0 + $0x8] sm:$0xff]
    %v62 = vld [vmem:[%s0 + $0x10] sm:$0xff]
    %v63 = vld [vmem:[%s0 + $0x18] sm:$0xff]
    %v64 = vld [vmem:[%s0 + $0x20] sm:$0xff]
    %v65 = vld [vmem:[%s0 + $0x28] sm:$0xff]
    %v66 = vld [vmem:[%s0 + $0x30] sm:$0xff]
    %v67 = vld [vmem:[%s0 + $0x38] sm:$0xff]
    %v68 = vld [vmem:[%s1] sm:$0xff]
    %v69 = vld [vmem:[%s1 + $0x8] sm:$0xff]
    %v70 = vld [vmem:[%s1 + $0x10] sm:$0xff]
    %v71 = vld [vmem:[%s1 + $0x18] sm:$0xff]
    %v72 = vld [vmem:[%s1 + $0x20] sm:$0xff]
    %v73 = vld [vmem:[%s1 + $0x28] sm:$0xff]
    %v74 = vld [vmem:[%s1 + $0x30] sm:$0xff]
    %v75 = vld [vmem:[%s1 + $0x38] sm:$0xff]
    %v76 = vld [vmem:[%s2] sm:$0xf]
    %v78 = vlaneseq
    %v79 = vshrl.u32 %v78, 7
    %v80 = vsub.s32 0, %v79
    %v81 = vrot.slane %v76, %v80
    %v82 = vlaneseq
    %v83 = vshrl.u32 %v82, 7
    %v84 = vsub.s32 1, %v83
    %v85 = vrot.slane %v76, %v84
    %v86 = vlaneseq
    %v87 = vshrl.u32 %v86, 7
    %v88 = vsub.s32 2, %v87
    %v89 = vrot.slane %v76, %v88
    %v90 = vlaneseq
    %v91 = vshrl.u32 %v90, 7
    %v92 = vsub.s32 3, %v91
    %v93 = vrot.slane %v76, %v92
    %vm98 = vcmask 130048
    %v100 = vsel %vm98, %v60, 0
    %v103 = vsel %vm98, %v61, 0
    %v106 = vsel %vm98, %v62, 0
    %v109 = vsel %vm98, %v63, 0
    %v112 = vsel %vm98, %v64, 0
    %v115 = vsel %vm98, %v65, 0
    %v118 = vsel %vm98, %v66, 0
    %v121 = vsel %vm98, %v67, 0
    %123 = vmatprep.subr.mxu0 %v69
    %124 = vmatpush1.msra.mxu0 %v68
    %125 = vmatprep.subr.mxu0 %v73
    %126 = vmatpush1.msra.mxu0 %v72
    %127 = vmatprep.subr.mxu0 0.0
    %128 = vmatpush1.msra.mxu0 0.0
    %129 = vmatprep.subr.mxu0 0.0
    %130 = vmatpush1.msra.mxu0 0.0
    %131 = vmatprep.subr.mxu0 0.0
    %132 = vmatpush1.msra.mxu0 0.0
    %133 = vmatprep.subr.mxu0 0.0
    %134 = vmatpush1.msra.mxu0 0.0
    %135 = vmatprep.subr.mxu0 0.0
    %136 = vmatpush1.msra.mxu0 0.0
    %137 = vmatprep.subr.mxu0 0.0
    %138 = vmatpush1.msra.mxu0 0.0
    %139 = vmatprep.subr.mxu0 0.0
    %140 = vmatpush1.msra.mxu0 0.0
    %141 = vmatprep.subr.mxu0 0.0
    %142 = vmatpush1.msra.mxu0 0.0
    %143 = vmatprep.subr.mxu0 0.0
    %144 = vmatpush1.msra.mxu0 0.0
    %145 = vmatprep.subr.mxu0 0.0
    %146 = vmatpush1.msra.mxu0 0.0
    %147 = vmatprep.subr.mxu0 0.0
    %148 = vmatpush1.msra.mxu0 0.0
    %149 = vmatprep.subr.mxu0 0.0
    %150 = vmatpush1.msra.mxu0 0.0
    %151 = vmatprep.subr.mxu0 0.0
    %152 = vmatpush1.msra.mxu0 0.0
    %153 = vmatprep.subr.mxu0 0.0
    %154 = vmatpush1.msra.mxu0 0.0
    %155 = vmatprep.subr.mxu0 0.0
    %156 = vmatpush1.msra.mxu0 0.0
    %157 = vmatprep.subr.mxu0 0.0
    %158 = vmatpush1.msra.mxu0 0.0
    %159 = vmatprep.subr.mxu0 0.0
    %160 = vmatpush1.msra.mxu0 0.0
    %161 = vmatprep.subr.mxu0 0.0
    %162 = vmatpush1.msra.mxu0 0.0
    %163 = vmatprep.subr.mxu0 0.0
    %164 = vmatpush1.msra.mxu0 0.0
    %165 = vmatprep.subr.mxu0 0.0
    %166 = vmatpush1.msra.mxu0 0.0
    %167 = vmatprep.subr.mxu0 0.0
    %168 = vmatpush1.msra.mxu0 0.0
    %169 = vmatprep.subr.mxu0 0.0
    %170 = vmatpush1.msra.mxu0 0.0
    %171 = vmatprep.subr.mxu0 0.0
    %172 = vmatpush1.msra.mxu0 0.0
    %173 = vmatprep.subr.mxu0 0.0
    %174 = vmatpush1.msra.mxu0 0.0
    %175 = vmatprep.subr.mxu0 0.0
    %176 = vmatpush1.msra.mxu0 0.0
    %177 = vmatprep.subr.mxu0 0.0
    %178 = vmatpush1.msra.mxu0 0.0
    %179 = vmatprep.subr.mxu0 0.0
    %180 = vmatpush1.msra.mxu0 0.0
    %181 = vmatprep.subr.mxu0 0.0
    %182 = vmatpush1.msra.mxu0 0.0
    %183 = vmatprep.subr.mxu0 0.0
    %184 = vmatpush1.msra.mxu0 0.0
    %185 = vmatprep.subr.mxu0 0.0
    %186 = vmatpush1.msra.mxu0 0.0
    %187 = vmatprep.mubr.f32.mxu0 0.0
    %188 = vmatmul.mubr.f32.gmra.mrb[0].mxu0 %v100
    %v189 = vpop.f32.mrb[0].mxu0
    %v190 = vadd.f32 %v81, %v189
    %v191 = vpop.f32.mrb[0].mxu0
    %v192 = vadd.f32 %v85, %v191
    %193 = vmatprep.mubr.f32.mxu0 0.0
    %194 = vmatmul.mubr.f32.gmra.mrb[0].mxu0 %v103
    %v195 = vpop.f32.mrb[0].mxu0
    %v196 = vadd.f32 %v81, %v195
    %v197 = vpop.f32.mrb[0].mxu0
    %v198 = vadd.f32 %v85, %v197
    %199 = vmatprep.mubr.f32.mxu0 0.0
    %200 = vmatmul.mubr.f32.gmra.mrb[0].mxu0 %v106
    %v201 = vpop.f32.mrb[0].mxu0
    %v202 = vadd.f32 %v81, %v201
    %v203 = vpop.f32.mrb[0].mxu0
    %v204 = vadd.f32 %v85, %v203
    %205 = vmatprep.mubr.f32.mxu0 0.0
    %206 = vmatmul.mubr.f32.gmra.mrb[0].mxu0 %v109
    %v207 = vpop.f32.mrb[0].mxu0
    %v208 = vadd.f32 %v81, %v207
    %v209 = vpop.f32.mrb[0].mxu0
    %v210 = vadd.f32 %v85, %v209
    %211 = vmatprep.mubr.f32.mxu0 0.0
    %212 = vmatmul.mubr.f32.gmra.mrb[0].mxu0 %v112
    %v213 = vpop.f32.mrb[0].mxu0
    %v214 = vadd.f32 %v81, %v213
    %v215 = vpop.f32.mrb[0].mxu0
    %v216 = vadd.f32 %v85, %v215
    %217 = vmatprep.mubr.f32.mxu0 0.0
    %218 = vmatmul.mubr.f32.gmra.mrb[0].mxu0 %v115
    %v219 = vpop.f32.mrb[0].mxu0
    %v220 = vadd.f32 %v81, %v219
    %v221 = vpop.f32.mrb[0].mxu0
    %v222 = vadd.f32 %v85, %v221
    %223 = vmatprep.mubr.f32.mxu0 0.0
    %224 = vmatmul.mubr.f32.gmra.mrb[0].mxu0 %v118
    %v225 = vpop.f32.mrb[0].mxu0
    %v226 = vadd.f32 %v81, %v225
    %v227 = vpop.f32.mrb[0].mxu0
    %v228 = vadd.f32 %v85, %v227
    %229 = vmatprep.mubr.f32.mxu0 0.0
    %230 = vmatmul.mubr.f32.gmra.mrb[0].mxu0 %v121
    %v231 = vpop.f32.mrb[0].mxu0
    %v232 = vadd.f32 %v81, %v231
    %v233 = vpop.f32.mrb[0].mxu0
    %v234 = vadd.f32 %v85, %v233
    %235 = vdwg.mxu0
    %236 = vmatprep.subr.mxu0 %v71
    %237 = vmatpush1.msra.mxu0 %v70
    %238 = vmatprep.subr.mxu0 %v75
    %239 = vmatpush1.msra.mxu0 %v74
    %240 = vmatprep.subr.mxu0 0.0
    %241 = vmatpush1.msra.mxu0 0.0
    %242 = vmatprep.subr.mxu0 0.0
    %243 = vmatpush1.msra.mxu0 0.0
    %244 = vmatprep.subr.mxu0 0.0
    %245 = vmatpush1.msra.mxu0 0.0
    %246 = vmatprep.subr.mxu0 0.0
    %247 = vmatpush1.msra.mxu0 0.0
    %248 = vmatprep.subr.mxu0 0.0
    %249 = vmatpush1.msra.mxu0 0.0
    %250 = vmatprep.subr.mxu0 0.0
    %251 = vmatpush1.msra.mxu0 0.0
    %252 = vmatprep.subr.mxu0 0.0
    %253 = vmatpush1.msra.mxu0 0.0
    %254 = vmatprep.subr.mxu0 0.0
    %255 = vmatpush1.msra.mxu0 0.0
    %256 = vmatprep.subr.mxu0 0.0
    %257 = vmatpush1.msra.mxu0 0.0
    %258 = vmatprep.subr.mxu0 0.0
    %259 = vmatpush1.msra.mxu0 0.0
    %260 = vmatprep.subr.mxu0 0.0
    %261 = vmatpush1.msra.mxu0 0.0
    %262 = vmatprep.subr.mxu0 0.0
    %263 = vmatpush1.msra.mxu0 0.0
    %264 = vmatprep.subr.mxu0 0.0
    %265 = vmatpush1.msra.mxu0 0.0
    %266 = vmatprep.subr.mxu0 0.0
    %267 = vmatpush1.msra.mxu0 0.0
    %268 = vmatprep.subr.mxu0 0.0
    %269 = vmatpush1.msra.mxu0 0.0
    %270 = vmatprep.subr.mxu0 0.0
    %271 = vmatpush1.msra.mxu0 0.0
    %272 = vmatprep.subr.mxu0 0.0
    %273 = vmatpush1.msra.mxu0 0.0
    %274 = vmatprep.subr.mxu0 0.0
    %275 = vmatpush1.msra.mxu0 0.0
    %276 = vmatprep.subr.mxu0 0.0
    %277 = vmatpush1.msra.mxu0 0.0
    %278 = vmatprep.subr.mxu0 0.0
    %279 = vmatpush1.msra.mxu0 0.0
    %280 = vmatprep.subr.mxu0 0.0
    %281 = vmatpush1.msra.mxu0 0.0
    %282 = vmatprep.subr.mxu0 0.0
    %283 = vmatpush1.msra.mxu0 0.0
    %284 = vmatprep.subr.mxu0 0.0
    %285 = vmatpush1.msra.mxu0 0.0
    %286 = vmatprep.subr.mxu0 0.0
    %287 = vmatpush1.msra.mxu0 0.0
    %288 = vmatprep.subr.mxu0 0.0
    %289 = vmatpush1.msra.mxu0 0.0
    %290 = vmatprep.subr.mxu0 0.0
    %291 = vmatpush1.msra.mxu0 0.0
    %292 = vmatprep.subr.mxu0 0.0
    %293 = vmatpush1.msra.mxu0 0.0
    %294 = vmatprep.subr.mxu0 0.0
    %295 = vmatpush1.msra.mxu0 0.0
    %296 = vmatprep.subr.mxu0 0.0
    %297 = vmatpush1.msra.mxu0 0.0
    %298 = vmatprep.subr.mxu0 0.0
    %299 = vmatpush1.msra.mxu0 0.0
    %300 = vmatprep.mubr.f32.mxu0 0.0
    %301 = vmatmul.mubr.f32.gmra.mrb[0].mxu0 %v100
    %v302 = vpop.f32.mrb[0].mxu0
    %v303 = vadd.f32 %v89, %v302
    %v304 = vpop.f32.mrb[0].mxu0
    %v305 = vadd.f32 %v93, %v304
    %306 = vmatprep.mubr.f32.mxu0 0.0
    %307 = vmatmul.mubr.f32.gmra.mrb[0].mxu0 %v103
    %v308 = vpop.f32.mrb[0].mxu0
    %v309 = vadd.f32 %v89, %v308
    %v310 = vpop.f32.mrb[0].mxu0
    %v311 = vadd.f32 %v93, %v310
    %312 = vmatprep.mubr.f32.mxu0 0.0
    %313 = vmatmul.mubr.f32.gmra.mrb[0].mxu0 %v106
    %v314 = vpop.f32.mrb[0].mxu0
    %v315 = vadd.f32 %v89, %v314
    %v316 = vpop.f32.mrb[0].mxu0
    %v317 = vadd.f32 %v93, %v316
    %318 = vmatprep.mubr.f32.mxu0 0.0
    %319 = vmatmul.mubr.f32.gmra.mrb[0].mxu0 %v109
    %v320 = vpop.f32.mrb[0].mxu0
    %v321 = vadd.f32 %v89, %v320
    %v322 = vpop.f32.mrb[0].mxu0
    %v323 = vadd.f32 %v93, %v322
    %324 = vmatprep.mubr.f32.mxu0 0.0
    %325 = vmatmul.mubr.f32.gmra.mrb[0].mxu0 %v112
    %v326 = vpop.f32.mrb[0].mxu0
    %v327 = vadd.f32 %v89, %v326
    %v328 = vpop.f32.mrb[0].mxu0
    %v329 = vadd.f32 %v93, %v328
    %330 = vmatprep.mubr.f32.mxu0 0.0
    %331 = vmatmul.mubr.f32.gmra.mrb[0].mxu0 %v115
    %v332 = vpop.f32.mrb[0].mxu0
    %v333 = vadd.f32 %v89, %v332
    %v334 = vpop.f32.mrb[0].mxu0
    %v335 = vadd.f32 %v93, %v334
    %336 = vmatprep.mubr.f32.mxu0 0.0
    %337 = vmatmul.mubr.f32.gmra.mrb[0].mxu0 %v118
    %v338 = vpop.f32.mrb[0].mxu0
    %v339 = vadd.f32 %v89, %v338
    %v340 = vpop.f32.mrb[0].mxu0
    %v341 = vadd.f32 %v93, %v340
    %342 = vmatprep.mubr.f32.mxu0 0.0
    %343 = vmatmul.mubr.f32.gmra.mrb[0].mxu0 %v121
    %v344 = vpop.f32.mrb[0].mxu0
    %v345 = vadd.f32 %v89, %v344
    %v346 = vpop.f32.mrb[0].mxu0
    %v347 = vadd.f32 %v93, %v346
    %348 = vdwg.mxu0
    %349 = vst [vmem:[#allocation2] sm:$0xff] %v190
    %350 = vst [vmem:[#allocation2 + $0x8] sm:$0xff] %v192
    %351 = vst [vmem:[#allocation2 + $0x10] sm:$0xff] %v303
    %352 = vst [vmem:[#allocation2 + $0x18] sm:$0xff] %v305
    %353 = vst [vmem:[#allocation2 + $0x20] sm:$0xff] %v196
    %354 = vst [vmem:[#allocation2 + $0x28] sm:$0xff] %v198
    %355 = vst [vmem:[#allocation2 + $0x30] sm:$0xff] %v309
    %356 = vst [vmem:[#allocation2 + $0x38] sm:$0xff] %v311
    %357 = vst [vmem:[#allocation2 + $0x40] sm:$0xff] %v202
    %358 = vst [vmem:[#allocation2 + $0x48] sm:$0xff] %v204
    %359 = vst [vmem:[#allocation2 + $0x50] sm:$0xff] %v315
    %360 = vst [vmem:[#allocation2 + $0x58] sm:$0xff] %v317
    %361 = vst [vmem:[#allocation2 + $0x60] sm:$0xff] %v208
    %362 = vst [vmem:[#allocation2 + $0x68] sm:$0xff] %v210
    %363 = vst [vmem:[#allocation2 + $0x70] sm:$0xff] %v321
    %364 = vst [vmem:[#allocation2 + $0x78] sm:$0xff] %v323
    %365 = vst [vmem:[#allocation2 + $0x80] sm:$0xff] %v214
    %366 = vst [vmem:[#allocation2 + $0x88] sm:$0xff] %v216
    %367 = vst [vmem:[#allocation2 + $0x90] sm:$0xff] %v327
    %368 = vst [vmem:[#allocation2 + $0x98] sm:$0xff] %v329
    %369 = vst [vmem:[#allocation2 + $0xa0] sm:$0xff] %v220
    %370 = vst [vmem:[#allocation2 + $0xa8] sm:$0xff] %v222
    %371 = vst [vmem:[#allocation2 + $0xb0] sm:$0xff] %v333
    %372 = vst [vmem:[#allocation2 + $0xb8] sm:$0xff] %v335
    %373 = vst [vmem:[#allocation2 + $0xc0] sm:$0xff] %v226
    %374 = vst [vmem:[#allocation2 + $0xc8] sm:$0xff] %v228
    %375 = vst [vmem:[#allocation2 + $0xd0] sm:$0xff] %v339
    %376 = vst [vmem:[#allocation2 + $0xd8] sm:$0xff] %v341
    %377 = vst [vmem:[#allocation2 + $0xe0] sm:$0xff] %v232
    %378 = vst [vmem:[#allocation2 + $0xe8] sm:$0xff] %v234
    %379 = vst [vmem:[#allocation2 + $0xf0] sm:$0xff] %v345
    %380 = vst [vmem:[#allocation2 + $0xf8] sm:$0xff] %v347
    %v381 = vld [vmem:[#allocation2] sm:$0xff]
    %v382 = vld [vmem:[#allocation2 + $0x8] sm:$0xff]
    %v383 = vld [vmem:[#allocation2 + $0x10] sm:$0xff]
    %v384 = vld [vmem:[#allocation2 + $0x18] sm:$0xff]
    %v385 = vld [vmem:[#allocation4] sm:$0xff]
    %v386 = vld [vmem:[#allocation4 + $0x8] sm:$0xff]
    %v387 = vld [vmem:[#allocation4 + $0x10] sm:$0xff]
    %v388 = vld [vmem:[#allocation4 + $0x18] sm:$0xff]
    %v389 = vld [vmem:[#allocation4 + $0x20] sm:$0xff]
    %v390 = vld [vmem:[#allocation4 + $0x28] sm:$0xff]
    %v391 = vld [vmem:[#allocation4 + $0x30] sm:$0xff]
    %v392 = vld [vmem:[#allocation4 + $0x38] sm:$0xff]
    %v393 = vld [vmem:[#allocation4 + $0x40] sm:$0xff]
    %v394 = vld [vmem:[#allocation4 + $0x48] sm:$0xff]
    %v395 = vld [vmem:[#allocation4 + $0x50] sm:$0xff]
    %v396 = vld [vmem:[#allocation4 + $0x58] sm:$0xff]
    %v397 = vld [vmem:[#allocation4 + $0x60] sm:$0xff]
    %v398 = vld [vmem:[#allocation4 + $0x68] sm:$0xff]
    %v399 = vld [vmem:[#allocation4 + $0x70] sm:$0xff]
    %v400 = vld [vmem:[#allocation4 + $0x78] sm:$0xff]
    %v401 = vld [vmem:[#allocation4 + $0x80] sm:$0xff]
    %v402 = vld [vmem:[#allocation4 + $0x88] sm:$0xff]
    %v403 = vld [vmem:[#allocation4 + $0x90] sm:$0xff]
    %v404 = vld [vmem:[#allocation4 + $0x98] sm:$0xff]
    %v405 = vld [vmem:[#allocation4 + $0xa0] sm:$0xff]
    %v406 = vld [vmem:[#allocation4 + $0xa8] sm:$0xff]
    %v407 = vld [vmem:[#allocation4 + $0xb0] sm:$0xff]
    %v408 = vld [vmem:[#allocation4 + $0xb8] sm:$0xff]
    %v409 = vld [vmem:[#allocation4 + $0xc0] sm:$0xff]
    %v410 = vld [vmem:[#allocation4 + $0xc8] sm:$0xff]
    %v411 = vld [vmem:[#allocation4 + $0xd0] sm:$0xff]
    %v412 = vld [vmem:[#allocation4 + $0xd8] sm:$0xff]
    %v413 = vld [vmem:[#allocation4 + $0xe0] sm:$0xff]
    %v414 = vld [vmem:[#allocation4 + $0xe8] sm:$0xff]
    %v415 = vld [vmem:[#allocation4 + $0xf0] sm:$0xff]
    %v416 = vld [vmem:[#allocation4 + $0xf8] sm:$0xff]
    %v449 = vunpack.c.l.b16 %v385
    %v450 = vunpack.c.h.b16 %v385
    %v451 = vunpack.c.l.b16 %v386
    %v452 = vunpack.c.h.b16 %v386
    %v453 = vunpack.c.l.b16 %v387
    %v454 = vunpack.c.h.b16 %v387
    %v455 = vunpack.c.l.b16 %v388
    %v456 = vunpack.c.h.b16 %v388
    %v457 = vunpack.c.l.b16 %v389
    %v458 = vunpack.c.h.b16 %v389
    %v459 = vunpack.c.l.b16 %v390
    %v460 = vunpack.c.h.b16 %v390
    %v461 = vunpack.c.l.b16 %v391
    %v462 = vunpack.c.h.b16 %v391
    %v463 = vunpack.c.l.b16 %v392
    %v464 = vunpack.c.h.b16 %v392
    %v465 = vunpack.c.l.b16 %v393
    %v466 = vunpack.c.h.b16 %v393
    %v467 = vunpack.c.l.b16 %v394
    %v468 = vunpack.c.h.b16 %v394
    %v469 = vunpack.c.l.b16 %v395
    %v470 = vunpack.c.h.b16 %v395
    %v471 = vunpack.c.l.b16 %v396
    %v472 = vunpack.c.h.b16 %v396
    %v473 = vunpack.c.l.b16 %v397
    %v474 = vunpack.c.h.b16 %v397
    %v475 = vunpack.c.l.b16 %v398
    %v476 = vunpack.c.h.b16 %v398
    %v477 = vunpack.c.l.b16 %v399
    %v478 = vunpack.c.h.b16 %v399
    %v479 = vunpack.c.l.b16 %v400
    %v480 = vunpack.c.h.b16 %v400
    %v481 = vunpack.c.l.b16 %v401
    %v482 = vunpack.c.h.b16 %v401
    %v483 = vunpack.c.l.b16 %v402
    %v484 = vunpack.c.h.b16 %v402
    %v485 = vunpack.c.l.b16 %v403
    %v486 = vunpack.c.h.b16 %v403
    %v487 = vunpack.c.l.b16 %v404
    %v488 = vunpack.c.h.b16 %v404
    %v489 = vunpack.c.l.b16 %v405
    %v490 = vunpack.c.h.b16 %v405
    %v491 = vunpack.c.l.b16 %v406
    %v492 = vunpack.c.h.b16 %v406
    %v493 = vunpack.c.l.b16 %v407
    %v494 = vunpack.c.h.b16 %v407
    %v495 = vunpack.c.l.b16 %v408
    %v496 = vunpack.c.h.b16 %v408
    %v497 = vunpack.c.l.b16 %v409
    %v498 = vunpack.c.h.b16 %v409
    %v499 = vunpack.c.l.b16 %v410
    %v500 = vunpack.c.h.b16 %v410
    %v501 = vunpack.c.l.b16 %v411
    %v502 = vunpack.c.h.b16 %v411
    %v503 = vunpack.c.l.b16 %v412
    %v504 = vunpack.c.h.b16 %v412
    %v505 = vunpack.c.l.b16 %v413
    %v506 = vunpack.c.h.b16 %v413
    %v507 = vunpack.c.l.b16 %v414
    %v508 = vunpack.c.h.b16 %v414
    %v509 = vunpack.c.l.b16 %v415
    %v510 = vunpack.c.h.b16 %v415
    %v511 = vunpack.c.l.b16 %v416
    %v512 = vunpack.c.h.b16 %v416
    %v513 = vpack.c.b16 %v453, %v449
    %v514 = vpack.c.b16 %v454, %v450
    %v515 = vpack.c.b16 %v455, %v451
    %v516 = vpack.c.b16 %v456, %v452
    %v517 = vpack.c.b16 %v461, %v457
    %v518 = vpack.c.b16 %v462, %v458
    %v519 = vpack.c.b16 %v463, %v459
    %v520 = vpack.c.b16 %v464, %v460
    %v521 = vpack.c.b16 %v469, %v465
    %v522 = vpack.c.b16 %v470, %v466
    %v523 = vpack.c.b16 %v471, %v467
    %v524 = vpack.c.b16 %v472, %v468
    %v525 = vpack.c.b16 %v477, %v473
    %v526 = vpack.c.b16 %v478, %v474
    %v527 = vpack.c.b16 %v479, %v475
    %v528 = vpack.c.b16 %v480, %v476
    %v529 = vpack.c.b16 %v485, %v481
    %v530 = vpack.c.b16 %v486, %v482
    %v531 = vpack.c.b16 %v487, %v483
    %v532 = vpack.c.b16 %v488, %v484
    %v533 = vpack.c.b16 %v493, %v489
    %v534 = vpack.c.b16 %v494, %v490
    %v535 = vpack.c.b16 %v495, %v491
    %v536 = vpack.c.b16 %v496, %v492
    %v537 = vpack.c.b16 %v501, %v497
    %v538 = vpack.c.b16 %v502, %v498
    %v539 = vpack.c.b16 %v503, %v499
    %v540 = vpack.c.b16 %v504, %v500
    %v541 = vpack.c.b16 %v509, %v505
    %v542 = vpack.c.b16 %v510, %v506
    %v543 = vpack.c.b16 %v511, %v507
    %v544 = vpack.c.b16 %v512, %v508
    %577 = vmatprep.subr.bf16.mxu0 %v514
    %578 = vmatpush1.bf16.msra.mxu0 %v513
    %579 = vmatprep.subr.bf16.mxu0 %v518
    %580 = vmatpush1.bf16.msra.mxu0 %v517
    %581 = vmatprep.subr.bf16.mxu0 %v522
    %582 = vmatpush1.bf16.msra.mxu0 %v521
    %583 = vmatprep.subr.bf16.mxu0 %v526
    %584 = vmatpush1.bf16.msra.mxu0 %v525
    %585 = vmatprep.subr.bf16.mxu0 %v530
    %586 = vmatpush1.bf16.msra.mxu0 %v529
    %587 = vmatprep.subr.bf16.mxu0 %v534
    %588 = vmatpush1.bf16.msra.mxu0 %v533
    %589 = vmatprep.subr.bf16.mxu0 %v538
    %590 = vmatpush1.bf16.msra.mxu0 %v537
    %591 = vmatprep.subr.bf16.mxu0 %v542
    %592 = vmatpush1.bf16.msra.mxu0 %v541
    %593 = vmatprep.subr.bf16.mxu0 0
    %594 = vmatpush1.bf16.msra.mxu0 0
    %595 = vmatprep.subr.bf16.mxu0 0
    %596 = vmatpush1.bf16.msra.mxu0 0
    %597 = vmatprep.subr.bf16.mxu0 0
    %598 = vmatpush1.bf16.msra.mxu0 0
    %599 = vmatprep.subr.bf16.mxu0 0
    %600 = vmatpush1.bf16.msra.mxu0 0
    %601 = vmatprep.subr.bf16.mxu0 0
    %602 = vmatpush1.bf16.msra.mxu0 0
    %603 = vmatprep.subr.bf16.mxu0 0
    %604 = vmatpush1.bf16.msra.mxu0 0
    %605 = vmatprep.subr.bf16.mxu0 0
    %606 = vmatpush1.bf16.msra.mxu0 0
    %607 = vmatprep.subr.bf16.mxu0 0
    %608 = vmatpush1.bf16.msra.mxu0 0
    %609 = vmatprep.mubr.bf16.mxu0 0
    %610 = vmatmul.mubr.bf16.gmra.mrb[0].mxu0 0
    %v611 = vpop.f32.mrb[0].mxu0
    %v612 = vadd.f32 0.0, %v611
    %v613 = vpop.f32.mrb[0].mxu0
    %v614 = vadd.f32 0.0, %v613
    %v615 = vpop.f32.mrb[0].mxu0
    %v616 = vpop.f32.mrb[0].mxu0
    %617 = vdwg.mxu0
    %618 = vmatprep.subr.bf16.mxu0 %v516
    %619 = vmatpush1.bf16.msra.mxu0 %v515
    %620 = vmatprep.subr.bf16.mxu0 %v520
    %621 = vmatpush1.bf16.msra.mxu0 %v519
    %622 = vmatprep.subr.bf16.mxu0 %v524
    %623 = vmatpush1.bf16.msra.mxu0 %v523
    %624 = vmatprep.subr.bf16.mxu0 %v528
    %625 = vmatpush1.bf16.msra.mxu0 %v527
    %626 = vmatprep.subr.bf16.mxu0 %v532
    %627 = vmatpush1.bf16.msra.mxu0 %v531
    %628 = vmatprep.subr.bf16.mxu0 %v536
    %629 = vmatpush1.bf16.msra.mxu0 %v535
    %630 = vmatprep.subr.bf16.mxu0 %v540
    %631 = vmatpush1.bf16.msra.mxu0 %v539
    %632 = vmatprep.subr.bf16.mxu0 %v544
    %633 = vmatpush1.bf16.msra.mxu0 %v543
    %634 = vmatprep.subr.bf16.mxu0 0
    %635 = vmatpush1.bf16.msra.mxu0 0
    %636 = vmatprep.subr.bf16.mxu0 0
    %637 = vmatpush1.bf16.msra.mxu0 0
    %638 = vmatprep.subr.bf16.mxu0 0
    %639 = vmatpush1.bf16.msra.mxu0 0
    %640 = vmatprep.subr.bf16.mxu0 0
    %641 = vmatpush1.bf16.msra.mxu0 0
    %642 = vmatprep.subr.bf16.mxu0 0
    %643 = vmatpush1.bf16.msra.mxu0 0
    %644 = vmatprep.subr.bf16.mxu0 0
    %645 = vmatpush1.bf16.msra.mxu0 0
    %646 = vmatprep.subr.bf16.mxu0 0
    %647 = vmatpush1.bf16.msra.mxu0 0
    %648 = vmatprep.subr.bf16.mxu0 0
    %649 = vmatpush1.bf16.msra.mxu0 0
    %650 = vmatprep.mubr.bf16.mxu0 0
    %651 = vmatmul.mubr.bf16.gmra.mrb[0].mxu0 0
    %v652 = vpop.f32.mrb[0].mxu0
    %v653 = vadd.f32 0.0, %v652
    %v654 = vpop.f32.mrb[0].mxu0
    %v655 = vadd.f32 0.0, %v654
    %v656 = vpop.f32.mrb[0].mxu0
    %v657 = vpop.f32.mrb[0].mxu0
    %658 = vdwg.mxu0
    %v659 = vadd.f32 %v381, %v612
    %v660 = vadd.f32 %v382, %v614
    %v661 = vadd.f32 %v383, %v653
    %v662 = vadd.f32 %v384, %v655
    %v663 = vmul.f32 %v659, 0.5
    %v664 = vtanh.pop %v663
    %v665 = vmul.f32 %v664, 0.5
    %v666 = vadd.f32 %v665, 0.5
    %v667 = vmul.f32 %v660, 0.5
    %v668 = vtanh.pop %v667
    %v669 = vmul.f32 %v668, 0.5
    %v670 = vadd.f32 %v669, 0.5
    %v671 = vtanh.pop %v661
    %v672 = vmul.f32 %v662, 0.5
    %v673 = vtanh.pop %v672
    %v674 = vmul.f32 %v673, 0.5
    %v675 = vadd.f32 %v674, 0.5
    %v676 = vmul.f32 %v670, 0.0
    %v677 = vmul.f32 %v666, %v671
    %v678 = vadd.f32 %v676, %v677
    %v679 = vtanh.pop %v678
    %v680 = vmul.f32 %v675, %v679
    %v681 = vpack.c.bf16 %v680, %v680
    %v682 = vld [vmem:[#allocation6] sm:$0xff]
    %v683 = vld [vmem:[#allocation6 + $0x8] sm:$0xff]
    %v684 = vld [vmem:[#allocation6 + $0x10] sm:$0xff]
    %v685 = vld [vmem:[#allocation6 + $0x18] sm:$0xff]
    %v686 = vld [vmem:[#allocation6 + $0x20] sm:$0xff]
    %v687 = vld [vmem:[#allocation6 + $0x28] sm:$0xff]
    %v688 = vld [vmem:[#allocation6 + $0x30] sm:$0xff]
    %v689 = vld [vmem:[#allocation6 + $0x38] sm:$0xff]
    %v690 = vld [vmem:[#allocation6 + $0x40] sm:$0xff]
    %v691 = vld [vmem:[#allocation6 + $0x48] sm:$0xff]
    %v692 = vld [vmem:[#allocation6 + $0x50] sm:$0xff]
    %v693 = vld [vmem:[#allocation6 + $0x58] sm:$0xff]
    %v694 = vld [vmem:[#allocation6 + $0x60] sm:$0xff]
    %v695 = vld [vmem:[#allocation6 + $0x68] sm:$0xff]
    %v696 = vld [vmem:[#allocation6 + $0x70] sm:$0xff]
    %v697 = vld [vmem:[#allocation6 + $0x78] sm:$0xff]
    %v698 = vld [vmem:[#allocation6 + $0x80] sm:$0xff]
    %v699 = vld [vmem:[#allocation6 + $0x88] sm:$0xff]
    %v700 = vld [vmem:[#allocation6 + $0x90] sm:$0xff]
    %v701 = vld [vmem:[#allocation6 + $0x98] sm:$0xff]
    %v702 = vld [vmem:[#allocation6 + $0xa0] sm:$0xff]
    %v703 = vld [vmem:[#allocation6 + $0xa8] sm:$0xff]
    %v704 = vld [vmem:[#allocation6 + $0xb0] sm:$0xff]
    %v705 = vld [vmem:[#allocation6 + $0xb8] sm:$0xff]
    %v706 = vld [vmem:[#allocation6 + $0xc0] sm:$0xff]
    %v707 = vld [vmem:[#allocation6 + $0xc8] sm:$0xff]
    %v708 = vld [vmem:[#allocation6 + $0xd0] sm:$0xff]
    %v709 = vld [vmem:[#allocation6 + $0xd8] sm:$0xff]
    %v710 = vld [vmem:[#allocation6 + $0xe0] sm:$0xff]
    %v711 = vld [vmem:[#allocation6 + $0xe8] sm:$0xff]
    %v712 = vld [vmem:[#allocation6 + $0xf0] sm:$0xff]
    %v713 = vld [vmem:[#allocation6 + $0xf8] sm:$0xff]
    %v714 = vld [vmem:[#allocation6 + $0x100] sm:$0xff]
    %v715 = vld [vmem:[#allocation6 + $0x108] sm:$0xff]
    %v716 = vld [vmem:[#allocation6 + $0x110] sm:$0xff]
    %v717 = vld [vmem:[#allocation6 + $0x118] sm:$0xff]
    %v718 = vld [vmem:[#allocation6 + $0x120] sm:$0xff]
    %v719 = vld [vmem:[#allocation6 + $0x128] sm:$0xff]
    %v720 = vld [vmem:[#allocation6 + $0x130] sm:$0xff]
    %v721 = vld [vmem:[#allocation6 + $0x138] sm:$0xff]
    %v722 = vld [vmem:[#allocation6 + $0x140] sm:$0xff]
    %v723 = vld [vmem:[#allocation6 + $0x148] sm:$0xff]
    %v724 = vld [vmem:[#allocation6 + $0x150] sm:$0xff]
    %v725 = vld [vmem:[#allocation6 + $0x158] sm:$0xff]
    %v726 = vld [vmem:[#allocation6 + $0x160] sm:$0xff]
    %v727 = vld [vmem:[#allocation6 + $0x168] sm:$0xff]
    %v728 = vld [vmem:[#allocation6 + $0x170] sm:$0xff]
    %v729 = vld [vmem:[#allocation6 + $0x178] sm:$0xff]
    %v730 = vld [vmem:[#allocation6 + $0x180] sm:$0xff]
    %v731 = vld [vmem:[#allocation6 + $0x188] sm:$0xff]
    %v732 = vld [vmem:[#allocation6 + $0x190] sm:$0xff]
    %v733 = vld [vmem:[#allocation6 + $0x198] sm:$0xff]
    %v734 = vld [vmem:[#allocation6 + $0x1a0] sm:$0xff]
    %v735 = vld [vmem:[#allocation6 + $0x1a8] sm:$0xff]
    %v736 = vld [vmem:[#allocation6 + $0x1b0] sm:$0xff]
    %v737 = vld [vmem:[#allocation6 + $0x1b8] sm:$0xff]
    %v738 = vld [vmem:[#allocation6 + $0x1c0] sm:$0xff]
    %v739 = vld [vmem:[#allocation6 + $0x1c8] sm:$0xff]
    %v740 = vld [vmem:[#allocation6 + $0x1d0] sm:$0xff]
    %v741 = vld [vmem:[#allocation6 + $0x1d8] sm:$0xff]
    %v742 = vld [vmem:[#allocation6 + $0x1e0] sm:$0xff]
    %v743 = vld [vmem:[#allocation6 + $0x1e8] sm:$0xff]
    %v744 = vld [vmem:[#allocation6 + $0x1f0] sm:$0xff]
    %v745 = vld [vmem:[#allocation6 + $0x1f8] sm:$0xff]
    %v746 = vld [vmem:[%s5] sm:$0xf]
    %v748 = vlaneseq
    %v749 = vshrl.u32 %v748, 7
    %v750 = vsub.s32 0, %v749
    %v751 = vrot.slane %v746, %v750
    %v752 = vlaneseq
    %v753 = vshrl.u32 %v752, 7
    %v754 = vsub.s32 1, %v753
    %v755 = vrot.slane %v746, %v754
    %v756 = vlaneseq
    %v757 = vshrl.u32 %v756, 7
    %v758 = vsub.s32 2, %v757
    %v759 = vrot.slane %v746, %v758
    %v760 = vlaneseq
    %v761 = vshrl.u32 %v760, 7
    %v762 = vsub.s32 3, %v761
    %v763 = vrot.slane %v746, %v762
    %v832 = vunpack.c.l.b16 %v682
    %v833 = vunpack.c.h.b16 %v682
    %v834 = vunpack.c.l.b16 %v683
    %v835 = vunpack.c.h.b16 %v683
    %v836 = vunpack.c.l.b16 %v684
    %v837 = vunpack.c.h.b16 %v684
    %v838 = vunpack.c.l.b16 %v685
    %v839 = vunpack.c.h.b16 %v685
    %v840 = vunpack.c.l.b16 %v686
    %v841 = vunpack.c.h.b16 %v686
    %v842 = vunpack.c.l.b16 %v687
    %v843 = vunpack.c.h.b16 %v687
    %v844 = vunpack.c.l.b16 %v688
    %v845 = vunpack.c.h.b16 %v688
    %v846 = vunpack.c.l.b16 %v689
    %v847 = vunpack.c.h.b16 %v689
    %v848 = vunpack.c.l.b16 %v690
    %v849 = vunpack.c.h.b16 %v690
    %v850 = vunpack.c.l.b16 %v691
    %v851 = vunpack.c.h.b16 %v691
    %v852 = vunpack.c.l.b16 %v692
    %v853 = vunpack.c.h.b16 %v692
    %v854 = vunpack.c.l.b16 %v693
    %v855 = vunpack.c.h.b16 %v693
    %v856 = vunpack.c.l.b16 %v694
    %v857 = vunpack.c.h.b16 %v694
    %v858 = vunpack.c.l.b16 %v695
    %v859 = vunpack.c.h.b16 %v695
    %v860 = vunpack.c.l.b16 %v696
    %v861 = vunpack.c.h.b16 %v696
    %v862 = vunpack.c.l.b16 %v697
    %v863 = vunpack.c.h.b16 %v697
    %v864 = vunpack.c.l.b16 %v698
    %v865 = vunpack.c.h.b16 %v698
    %v866 = vunpack.c.l.b16 %v699
    %v867 = vunpack.c.h.b16 %v699
    %v868 = vunpack.c.l.b16 %v700
    %v869 = vunpack.c.h.b16 %v700
    %v870 = vunpack.c.l.b16 %v701
    %v871 = vunpack.c.h.b16 %v701
    %v872 = vunpack.c.l.b16 %v702
    %v873 = vunpack.c.h.b16 %v702
    %v874 = vunpack.c.l.b16 %v703
    %v875 = vunpack.c.h.b16 %v703
    %v876 = vunpack.c.l.b16 %v704
    %v877 = vunpack.c.h.b16 %v704
    %v878 = vunpack.c.l.b16 %v705
    %v879 = vunpack.c.h.b16 %v705
    %v880 = vunpack.c.l.b16 %v706
    %v881 = vunpack.c.h.b16 %v706
    %v882 = vunpack.c.l.b16 %v707
    %v883 = vunpack.c.h.b16 %v707
    %v884 = vunpack.c.l.b16 %v708
    %v885 = vunpack.c.h.b16 %v708
    %v886 = vunpack.c.l.b16 %v709
    %v887 = vunpack.c.h.b16 %v709
    %v888 = vunpack.c.l.b16 %v710
    %v889 = vunpack.c.h.b16 %v710
    %v890 = vunpack.c.l.b16 %v711
    %v891 = vunpack.c.h.b16 %v711
    %v892 = vunpack.c.l.b16 %v712
    %v893 = vunpack.c.h.b16 %v712
    %v894 = vunpack.c.l.b16 %v713
    %v895 = vunpack.c.h.b16 %v713
    %v896 = vunpack.c.l.b16 %v714
    %v897 = vunpack.c.h.b16 %v714
    %v898 = vunpack.c.l.b16 %v715
    %v899 = vunpack.c.h.b16 %v715
    %v900 = vunpack.c.l.b16 %v716
    %v901 = vunpack.c.h.b16 %v716
    %v902 = vunpack.c.l.b16 %v717
    %v903 = vunpack.c.h.b16 %v717
    %v904 = vunpack.c.l.b16 %v718
    %v905 = vunpack.c.h.b16 %v718
    %v906 = vunpack.c.l.b16 %v719
    %v907 = vunpack.c.h.b16 %v719
    %v908 = vunpack.c.l.b16 %v720
    %v909 = vunpack.c.h.b16 %v720
    %v910 = vunpack.c.l.b16 %v721
    %v911 = vunpack.c.h.b16 %v721
    %v912 = vunpack.c.l.b16 %v722
    %v913 = vunpack.c.h.b16 %v722
    %v914 = vunpack.c.l.b16 %v723
    %v915 = vunpack.c.h.b16 %v723
    %v916 = vunpack.c.l.b16 %v724
    %v917 = vunpack.c.h.b16 %v724
    %v918 = vunpack.c.l.b16 %v725
    %v919 = vunpack.c.h.b16 %v725
    %v920 = vunpack.c.l.b16 %v726
    %v921 = vunpack.c.h.b16 %v726
    %v922 = vunpack.c.l.b16 %v727
    %v923 = vunpack.c.h.b16 %v727
    %v924 = vunpack.c.l.b16 %v728
    %v925 = vunpack.c.h.b16 %v728
    %v926 = vunpack.c.l.b16 %v729
    %v927 = vunpack.c.h.b16 %v729
    %v928 = vunpack.c.l.b16 %v730
    %v929 = vunpack.c.h.b16 %v730
    %v930 = vunpack.c.l.b16 %v731
    %v931 = vunpack.c.h.b16 %v731
    %v932 = vunpack.c.l.b16 %v732
    %v933 = vunpack.c.h.b16 %v732
    %v934 = vunpack.c.l.b16 %v733
    %v935 = vunpack.c.h.b16 %v733
    %v936 = vunpack.c.l.b16 %v734
    %v937 = vunpack.c.h.b16 %v734
    %v938 = vunpack.c.l.b16 %v735
    %v939 = vunpack.c.h.b16 %v735
    %v940 = vunpack.c.l.b16 %v736
    %v941 = vunpack.c.h.b16 %v736
    %v942 = vunpack.c.l.b16 %v737
    %v943 = vunpack.c.h.b16 %v737
    %v944 = vunpack.c.l.b16 %v738
    %v945 = vunpack.c.h.b16 %v738
    %v946 = vunpack.c.l.b16 %v739
    %v947 = vunpack.c.h.b16 %v739
    %v948 = vunpack.c.l.b16 %v740
    %v949 = vunpack.c.h.b16 %v740
    %v950 = vunpack.c.l.b16 %v741
    %v951 = vunpack.c.h.b16 %v741
    %v952 = vunpack.c.l.b16 %v742
    %v953 = vunpack.c.h.b16 %v742
    %v954 = vunpack.c.l.b16 %v743
    %v955 = vunpack.c.h.b16 %v743
    %v956 = vunpack.c.l.b16 %v744
    %v957 = vunpack.c.h.b16 %v744
    %v958 = vunpack.c.l.b16 %v745
    %v959 = vunpack.c.h.b16 %v745
    %v960 = vpack.c.b16 %v836, %v832
    %v961 = vpack.c.b16 %v837, %v833
    %v962 = vpack.c.b16 %v838, %v834
    %v963 = vpack.c.b16 %v839, %v835
    %v964 = vpack.c.b16 %v844, %v840
    %v965 = vpack.c.b16 %v845, %v841
    %v966 = vpack.c.b16 %v846, %v842
    %v967 = vpack.c.b16 %v847, %v843
    %v968 = vpack.c.b16 %v852, %v848
    %v969 = vpack.c.b16 %v853, %v849
    %v970 = vpack.c.b16 %v854, %v850
    %v971 = vpack.c.b16 %v855, %v851
    %v972 = vpack.c.b16 %v860, %v856
    %v973 = vpack.c.b16 %v861, %v857
    %v974 = vpack.c.b16 %v862, %v858
    %v975 = vpack.c.b16 %v863, %v859
    %v976 = vpack.c.b16 %v868, %v864
    %v977 = vpack.c.b16 %v869, %v865
    %v978 = vpack.c.b16 %v870, %v866
    %v979 = vpack.c.b16 %v871, %v867
    %v980 = vpack.c.b16 %v876, %v872
    %v981 = vpack.c.b16 %v877, %v873
    %v982 = vpack.c.b16 %v878, %v874
    %v983 = vpack.c.b16 %v879, %v875
    %v984 = vpack.c.b16 %v884, %v880
    %v985 = vpack.c.b16 %v885, %v881
    %v986 = vpack.c.b16 %v886, %v882
    %v987 = vpack.c.b16 %v887, %v883
    %v988 = vpack.c.b16 %v892, %v888
    %v989 = vpack.c.b16 %v893, %v889
    %v990 = vpack.c.b16 %v894, %v890
    %v991 = vpack.c.b16 %v895, %v891
    %v992 = vpack.c.b16 %v900, %v896
    %v993 = vpack.c.b16 %v901, %v897
    %v994 = vpack.c.b16 %v902, %v898
    %v995 = vpack.c.b16 %v903, %v899
    %v996 = vpack.c.b16 %v908, %v904
    %v997 = vpack.c.b16 %v909, %v905
    %v998 = vpack.c.b16 %v910, %v906
    %v999 = vpack.c.b16 %v911, %v907
    %v1000 = vpack.c.b16 %v916, %v912
    %v1001 = vpack.c.b16 %v917, %v913
    %v1002 = vpack.c.b16 %v918, %v914
    %v1003 = vpack.c.b16 %v919, %v915
    %v1004 = vpack.c.b16 %v924, %v920
    %v1005 = vpack.c.b16 %v925, %v921
    %v1006 = vpack.c.b16 %v926, %v922
    %v1007 = vpack.c.b16 %v927, %v923
    %v1008 = vpack.c.b16 %v932, %v928
    %v1009 = vpack.c.b16 %v933, %v929
    %v1010 = vpack.c.b16 %v934, %v930
    %v1011 = vpack.c.b16 %v935, %v931
    %v1012 = vpack.c.b16 %v940, %v936
    %v1013 = vpack.c.b16 %v941, %v937
    %v1014 = vpack.c.b16 %v942, %v938
    %v1015 = vpack.c.b16 %v943, %v939
    %v1016 = vpack.c.b16 %v948, %v944
    %v1017 = vpack.c.b16 %v949, %v945
    %v1018 = vpack.c.b16 %v950, %v946
    %v1019 = vpack.c.b16 %v951, %v947
    %v1020 = vpack.c.b16 %v956, %v952
    %v1021 = vpack.c.b16 %v957, %v953
    %v1022 = vpack.c.b16 %v958, %v954
    %v1023 = vpack.c.b16 %v959, %v955
    %1088 = vmatprep.subr.bf16.mxu0 %v961
    %1089 = vmatpush1.bf16.msra.mxu0 %v960
    %1090 = vmatprep.subr.bf16.mxu0 %v965
    %1091 = vmatpush1.bf16.msra.mxu0 %v964
    %1092 = vmatprep.subr.bf16.mxu0 %v969
    %1093 = vmatpush1.bf16.msra.mxu0 %v968
    %1094 = vmatprep.subr.bf16.mxu0 %v973
    %1095 = vmatpush1.bf16.msra.mxu0 %v972
    %1096 = vmatprep.subr.bf16.mxu0 %v977
    %1097 = vmatpush1.bf16.msra.mxu0 %v976
    %1098 = vmatprep.subr.bf16.mxu0 %v981
    %1099 = vmatpush1.bf16.msra.mxu0 %v980
    %1100 = vmatprep.subr.bf16.mxu0 %v985
    %1101 = vmatpush1.bf16.msra.mxu0 %v984
    %1102 = vmatprep.subr.bf16.mxu0 %v989
    %1103 = vmatpush1.bf16.msra.mxu0 %v988
    %1104 = vmatprep.subr.bf16.mxu0 %v993
    %1105 = vmatpush1.bf16.msra.mxu0 %v992
    %1106 = vmatprep.subr.bf16.mxu0 %v997
    %1107 = vmatpush1.bf16.msra.mxu0 %v996
    %1108 = vmatprep.subr.bf16.mxu0 %v1001
    %1109 = vmatpush1.bf16.msra.mxu0 %v1000
    %1110 = vmatprep.subr.bf16.mxu0 %v1005
    %1111 = vmatpush1.bf16.msra.mxu0 %v1004
    %1112 = vmatprep.subr.bf16.mxu0 %v1009
    %1113 = vmatpush1.bf16.msra.mxu0 %v1008
    %1114 = vmatprep.subr.bf16.mxu0 %v1013
    %1115 = vmatpush1.bf16.msra.mxu0 %v1012
    %1116 = vmatprep.subr.bf16.mxu0 %v1017
    %1117 = vmatpush1.bf16.msra.mxu0 %v1016
    %1118 = vmatprep.subr.bf16.mxu0 %v1021
    %1119 = vmatpush1.bf16.msra.mxu0 %v1020
    %1120 = vmatprep.mubr.bf16.mxu0 0
    %1121 = vmatmul.mubr.bf16.gmra.mrb[0].mxu0 %v681
    %v1122 = vpop.f32.mrb[0].mxu0
    %v1123 = vadd.f32 %v751, %v1122
    %v1124 = vpop.f32.mrb[0].mxu0
    %v1125 = vadd.f32 %v755, %v1124
    %v1126 = vpop.f32.mrb[0].mxu0
    %v1127 = vpop.f32.mrb[0].mxu0
    %1128 = vdwg.mxu0
    %1129 = vmatprep.subr.bf16.mxu0 %v963
    %1130 = vmatpush1.bf16.msra.mxu0 %v962
    %1131 = vmatprep.subr.bf16.mxu0 %v967
    %1132 = vmatpush1.bf16.msra.mxu0 %v966
    %1133 = vmatprep.subr.bf16.mxu0 %v971
    %1134 = vmatpush1.bf16.msra.mxu0 %v970
    %1135 = vmatprep.subr.bf16.mxu0 %v975
    %1136 = vmatpush1.bf16.msra.mxu0 %v974
    %1137 = vmatprep.subr.bf16.mxu0 %v979
    %1138 = vmatpush1.bf16.msra.mxu0 %v978
    %1139 = vmatprep.subr.bf16.mxu0 %v983
    %1140 = vmatpush1.bf16.msra.mxu0 %v982
    %1141 = vmatprep.subr.bf16.mxu0 %v987
    %1142 = vmatpush1.bf16.msra.mxu0 %v986
    %1143 = vmatprep.subr.bf16.mxu0 %v991
    %1144 = vmatpush1.bf16.msra.mxu0 %v990
    %1145 = vmatprep.subr.bf16.mxu0 %v995
    %1146 = vmatpush1.bf16.msra.mxu0 %v994
    %1147 = vmatprep.subr.bf16.mxu0 %v999
    %1148 = vmatpush1.bf16.msra.mxu0 %v998
    %1149 = vmatprep.subr.bf16.mxu0 %v1003
    %1150 = vmatpush1.bf16.msra.mxu0 %v1002
    %1151 = vmatprep.subr.bf16.mxu0 %v1007
    %1152 = vmatpush1.bf16.msra.mxu0 %v1006
    %1153 = vmatprep.subr.bf16.mxu0 %v1011
    %1154 = vmatpush1.bf16.msra.mxu0 %v1010
    %1155 = vmatprep.subr.bf16.mxu0 %v1015
    %1156 = vmatpush1.bf16.msra.mxu0 %v1014
    %1157 = vmatprep.subr.bf16.mxu0 %v1019
    %1158 = vmatpush1.bf16.msra.mxu0 %v1018
    %1159 = vmatprep.subr.bf16.mxu0 %v1023
    %1160 = vmatpush1.bf16.msra.mxu0 %v1022
    %1161 = vmatprep.mubr.bf16.mxu0 0
    %1162 = vmatmul.mubr.bf16.gmra.mrb[0].mxu0 %v681
    %v1163 = vpop.f32.mrb[0].mxu0
    %v1164 = vadd.f32 %v759, %v1163
    %v1165 = vpop.f32.mrb[0].mxu0
    %v1166 = vadd.f32 %v763, %v1165
    %v1167 = vpop.f32.mrb[0].mxu0
    %v1168 = vpop.f32.mrb[0].mxu0
    %1169 = vdwg.mxu0
    %v1170 = vmul.f32 %v1123, 0.5
    %v1171 = vtanh.pop %v1170
    %v1172 = vmul.f32 %v1171, 0.5
    %v1173 = vadd.f32 %v1172, 0.5
    %v1174 = vmul.f32 %v1125, 0.5
    %v1175 = vtanh.pop %v1174
    %v1176 = vmul.f32 %v1175, 0.5
    %v1177 = vadd.f32 %v1176, 0.5
    %v1178 = vtanh.pop %v1164
    %v1179 = vmul.f32 %v1166, 0.5
    %v1180 = vtanh.pop %v1179
    %v1181 = vmul.f32 %v1180, 0.5
    %v1182 = vadd.f32 %v1181, 0.5
    %v1183 = vmul.f32 %v1177, 0.0
    %v1184 = vmul.f32 %v1173, %v1178
    %v1185 = vadd.f32 %v1183, %v1184
    %v1186 = vtanh.pop %v1185
    %v1187 = vmul.f32 %v1182, %v1186
    %v1188 = vld [vmem:[#allocation2 + $0x20] sm:$0xff]
    %v1189 = vld [vmem:[#allocation2 + $0x28] sm:$0xff]
    %v1190 = vld [vmem:[#allocation2 + $0x30] sm:$0xff]
    %v1191 = vld [vmem:[#allocation2 + $0x38] sm:$0xff]
    %1192 = vmatprep.subr.bf16.mxu0 %v514
    %1193 = vmatpush1.bf16.msra.mxu0 %v513
    %1194 = vmatprep.subr.bf16.mxu0 %v518
    %1195 = vmatpush1.bf16.msra.mxu0 %v517
    %1196 = vmatprep.subr.bf16.mxu0 %v522
    %1197 = vmatpush1.bf16.msra.mxu0 %v521
    %1198 = vmatprep.subr.bf16.mxu0 %v526
    %1199 = vmatpush1.bf16.msra.mxu0 %v525
    %1200 = vmatprep.subr.bf16.mxu0 %v530
    %1201 = vmatpush1.bf16.msra.mxu0 %v529
    %1202 = vmatprep.subr.bf16.mxu0 %v534
    %1203 = vmatpush1.bf16.msra.mxu0 %v533
    %1204 = vmatprep.subr.bf16.mxu0 %v538
    %1205 = vmatpush1.bf16.msra.mxu0 %v537
    %1206 = vmatprep.subr.bf16.mxu0 %v542
    %1207 = vmatpush1.bf16.msra.mxu0 %v541
    %1208 = vmatprep.subr.bf16.mxu0 0
    %1209 = vmatpush1.bf16.msra.mxu0 0
    %1210 = vmatprep.subr.bf16.mxu0 0
    %1211 = vmatpush1.bf16.msra.mxu0 0
    %1212 = vmatprep.subr.bf16.mxu0 0
    %1213 = vmatpush1.bf16.msra.mxu0 0
    %1214 = vmatprep.subr.bf16.mxu0 0
    %1215 = vmatpush1.bf16.msra.mxu0 0
    %1216 = vmatprep.subr.bf16.mxu0 0
    %1217 = vmatpush1.bf16.msra.mxu0 0
    %1218 = vmatprep.subr.bf16.mxu0 0
    %1219 = vmatpush1.bf16.msra.mxu0 0
    %1220 = vmatprep.subr.bf16.mxu0 0
    %1221 = vmatpush1.bf16.msra.mxu0 0
    %1222 = vmatprep.subr.bf16.mxu0 0
    %1223 = vmatpush1.bf16.msra.mxu0 0
    %1224 = vmatprep.mubr.bf16.mxu0 0
    %1225 = vmatmul.mubr.bf16.gmra.mrb[0].mxu0 %v681
    %v1226 = vpop.f32.mrb[0].mxu0
    %v1227 = vadd.f32 0.0, %v1226
    %v1228 = vpop.f32.mrb[0].mxu0
    %v1229 = vadd.f32 0.0, %v1228
    %v1230 = vpop.f32.mrb[0].mxu0
    %v1231 = vpop.f32.mrb[0].mxu0
    %1232 = vdwg.mxu0
    %1233 = vmatprep.subr.bf16.mxu0 %v516
    %1234 = vmatpush1.bf16.msra.mxu0 %v515
    %1235 = vmatprep.subr.bf16.mxu0 %v520
    %1236 = vmatpush1.bf16.msra.mxu0 %v519
    %1237 = vmatprep.subr.bf16.mxu0 %v524
    %1238 = vmatpush1.bf16.msra.mxu0 %v523
    %1239 = vmatprep.subr.bf16.mxu0 %v528
    %1240 = vmatpush1.bf16.msra.mxu0 %v527
    %1241 = vmatprep.subr.bf16.mxu0 %v532
    %1242 = vmatpush1.bf16.msra.mxu0 %v531
    %1243 = vmatprep.subr.bf16.mxu0 %v536
    %1244 = vmatpush1.bf16.msra.mxu0 %v535
    %1245 = vmatprep.subr.bf16.mxu0 %v540
    %1246 = vmatpush1.bf16.msra.mxu0 %v539
    %1247 = vmatprep.subr.bf16.mxu0 %v544
    %1248 = vmatpush1.bf16.msra.mxu0 %v543
    %1249 = vmatprep.subr.bf16.mxu0 0
    %1250 = vmatpush1.bf16.msra.mxu0 0
    %1251 = vmatprep.subr.bf16.mxu0 0
    %1252 = vmatpush1.bf16.msra.mxu0 0
    %1253 = vmatprep.subr.bf16.mxu0 0
    %1254 = vmatpush1.bf16.msra.mxu0 0
    %1255 = vmatprep.subr.bf16.mxu0 0
    %1256 = vmatpush1.bf16.msra.mxu0 0
    %1257 = vmatprep.subr.bf16.mxu0 0
    %1258 = vmatpush1.bf16.msra.mxu0 0
    %1259 = vmatprep.subr.bf16.mxu0 0
    %1260 = vmatpush1.bf16.msra.mxu0 0
    %1261 = vmatprep.subr.bf16.mxu0 0
    %1262 = vmatpush1.bf16.msra.mxu0 0
    %1263 = vmatprep.subr.bf16.mxu0 0
    %1264 = vmatpush1.bf16.msra.mxu0 0
    %1265 = vmatprep.mubr.bf16.mxu0 0
    %1266 = vmatmul.mubr.bf16.gmra.mrb[0].mxu0 %v681
    %v1267 = vpop.f32.mrb[0].mxu0
    %v1268 = vadd.f32 0.0, %v1267
    %v1269 = vpop.f32.mrb[0].mxu0
    %v1270 = vadd.f32 0.0, %v1269
    %v1271 = vpop.f32.mrb[0].mxu0
    %v1272 = vpop.f32.mrb[0].mxu0
    %1273 = vdwg.mxu0
    %v1274 = vadd.f32 %v1188, %v1227
    %v1275 = vadd.f32 %v1189, %v1229
    %v1276 = vadd.f32 %v1190, %v1268
    %v1277 = vadd.f32 %v1191, %v1270
    %v1278 = vmul.f32 %v1274, 0.5
    %v1279 = vtanh.pop %v1278
    %v1280 = vmul.f32 %v1279, 0.5
    %v1281 = vadd.f32 %v1280, 0.5
    %v1282 = vmul.f32 %v1275, 0.5
    %v1283 = vtanh.pop %v1282
    %v1284 = vmul.f32 %v1283, 0.5
    %v1285 = vadd.f32 %v1284, 0.5
    %v1286 = vtanh.pop %v1276
    %v1287 = vmul.f32 %v1277, 0.5
    %v1288 = vtanh.pop %v1287
    %v1289 = vmul.f32 %v1288, 0.5
    %v1290 = vadd.f32 %v1289, 0.5
    %v1291 = vmul.f32 %v1285, %v678
    %v1292 = vmul.f32 %v1281, %v1286
    %v1293 = vadd.f32 %v1291, %v1292
    %v1294 = vtanh.pop %v1293
    %v1295 = vmul.f32 %v1290, %v1294
    %v1296 = vpack.c.bf16 %v1295, %v1295
    %v1297 = vpack.c.bf16 %v1187, %v1187
    %1298 = vmatprep.subr.bf16.mxu0 %v961
    %1299 = vmatpush1.bf16.msra.mxu0 %v960
    %1300 = vmatprep.subr.bf16.mxu0 %v965
    %1301 = vmatpush1.bf16.msra.mxu0 %v964
    %1302 = vmatprep.subr.bf16.mxu0 %v969
    %1303 = vmatpush1.bf16.msra.mxu0 %v968
    %1304 = vmatprep.subr.bf16.mxu0 %v973
    %1305 = vmatpush1.bf16.msra.mxu0 %v972
    %1306 = vmatprep.subr.bf16.mxu0 %v977
    %1307 = vmatpush1.bf16.msra.mxu0 %v976
    %1308 = vmatprep.subr.bf16.mxu0 %v981
    %1309 = vmatpush1.bf16.msra.mxu0 %v980
    %1310 = vmatprep.subr.bf16.mxu0 %v985
    %1311 = vmatpush1.bf16.msra.mxu0 %v984
    %1312 = vmatprep.subr.bf16.mxu0 %v989
    %1313 = vmatpush1.bf16.msra.mxu0 %v988
    %1314 = vmatprep.subr.bf16.mxu0 %v993
    %1315 = vmatpush1.bf16.msra.mxu0 %v992
    %1316 = vmatprep.subr.bf16.mxu0 %v997
    %1317 = vmatpush1.bf16.msra.mxu0 %v996
    %1318 = vmatprep.subr.bf16.mxu0 %v1001
    %1319 = vmatpush1.bf16.msra.mxu0 %v1000
    %1320 = vmatprep.subr.bf16.mxu0 %v1005
    %1321 = vmatpush1.bf16.msra.mxu0 %v1004
    %1322 = vmatprep.subr.bf16.mxu0 %v1009
    %1323 = vmatpush1.bf16.msra.mxu0 %v1008
    %1324 = vmatprep.subr.bf16.mxu0 %v1013
    %1325 = vmatpush1.bf16.msra.mxu0 %v1012
    %1326 = vmatprep.subr.bf16.mxu0 %v1017
    %1327 = vmatpush1.bf16.msra.mxu0 %v1016
    %1328 = vmatprep.subr.bf16.mxu0 %v1021
    %1329 = vmatpush1.bf16.msra.mxu0 %v1020
    %1330 = vmatprep.mubr.bf16.mxu0 %v1297
    %1331 = vmatmul.mubr.bf16.gmra.mrb[0].mxu0 %v1296
    %v1332 = vpop.f32.mrb[0].mxu0
    %v1333 = vadd.f32 %v751, %v1332
    %v1334 = vpop.f32.mrb[0].mxu0
    %v1335 = vadd.f32 %v755, %v1334
    %v1336 = vpop.f32.mrb[0].mxu0
    %v1337 = vpop.f32.mrb[0].mxu0
    %1338 = vdwg.mxu0
    %1339 = vmatprep.subr.bf16.mxu0 %v963
    %1340 = vmatpush1.bf16.msra.mxu0 %v962
    %1341 = vmatprep.subr.bf16.mxu0 %v967
    %1342 = vmatpush1.bf16.msra.mxu0 %v966
    %1343 = vmatprep.subr.bf16.mxu0 %v971
    %1344 = vmatpush1.bf16.msra.mxu0 %v970
    %1345 = vmatprep.subr.bf16.mxu0 %v975
    %1346 = vmatpush1.bf16.msra.mxu0 %v974
    %1347 = vmatprep.subr.bf16.mxu0 %v979
    %1348 = vmatpush1.bf16.msra.mxu0 %v978
    %1349 = vmatprep.subr.bf16.mxu0 %v983
    %1350 = vmatpush1.bf16.msra.mxu0 %v982
    %1351 = vmatprep.subr.bf16.mxu0 %v987
    %1352 = vmatpush1.bf16.msra.mxu0 %v986
    %1353 = vmatprep.subr.bf16.mxu0 %v991
    %1354 = vmatpush1.bf16.msra.mxu0 %v990
    %1355 = vmatprep.subr.bf16.mxu0 %v995
    %1356 = vmatpush1.bf16.msra.mxu0 %v994
    %1357 = vmatprep.subr.bf16.mxu0 %v999
    %1358 = vmatpush1.bf16.msra.mxu0 %v998
    %1359 = vmatprep.subr.bf16.mxu0 %v1003
    %1360 = vmatpush1.bf16.msra.mxu0 %v1002
    %1361 = vmatprep.subr.bf16.mxu0 %v1007
    %1362 = vmatpush1.bf16.msra.mxu0 %v1006
    %1363 = vmatprep.subr.bf16.mxu0 %v1011
    %1364 = vmatpush1.bf16.msra.mxu0 %v1010
    %1365 = vmatprep.subr.bf16.mxu0 %v1015
    %1366 = vmatpush1.bf16.msra.mxu0 %v1014
    %1367 = vmatprep.subr.bf16.mxu0 %v1019
    %1368 = vmatpush1.bf16.msra.mxu0 %v1018
    %1369 = vmatprep.subr.bf16.mxu0 %v1023
    %1370 = vmatpush1.bf16.msra.mxu0 %v1022
    %1371 = vmatprep.mubr.bf16.mxu0 %v1297
    %1372 = vmatmul.mubr.bf16.gmra.mrb[0].mxu0 %v1296
    %v1373 = vpop.f32.mrb[0].mxu0
    %v1374 = vadd.f32 %v759, %v1373
    %v1375 = vpop.f32.mrb[0].mxu0
    %v1376 = vadd.f32 %v763, %v1375
    %v1377 = vpop.f32.mrb[0].mxu0
    %v1378 = vpop.f32.mrb[0].mxu0
    %1379 = vdwg.mxu0
    %v1380 = vmul.f32 %v1333, 0.5
    %v1381 = vtanh.pop %v1380
    %v1382 = vmul.f32 %v1381, 0.5
    %v1383 = vadd.f32 %v1382, 0.5
    %v1384 = vmul.f32 %v1335, 0.5
    %v1385 = vtanh.pop %v1384
    %v1386 = vmul.f32 %v1385, 0.5
    %v1387 = vadd.f32 %v1386, 0.5
    %v1388 = vtanh.pop %v1374
    %v1389 = vmul.f32 %v1376, 0.5
    %v1390 = vtanh.pop %v1389
    %v1391 = vmul.f32 %v1390, 0.5
    %v1392 = vadd.f32 %v1391, 0.5
    %v1393 = vmul.f32 %v1387, %v1185
    %v1394 = vmul.f32 %v1383, %v1388
    %v1395 = vadd.f32 %v1393, %v1394
    %v1396 = vtanh.pop %v1395
    %v1397 = vmul.f32 %v1392, %v1396
    %v1398 = vld [vmem:[#allocation2 + $0x40] sm:$0xff]
    %v1399 = vld [vmem:[#allocation2 + $0x48] sm:$0xff]
    %v1400 = vld [vmem:[#allocation2 + $0x50] sm:$0xff]
    %v1401 = vld [vmem:[#allocation2 + $0x58] sm:$0xff]
    %1402 = vmatprep.subr.bf16.mxu0 %v514
    %1403 = vmatpush1.bf16.msra.mxu0 %v513
    %1404 = vmatprep.subr.bf16.mxu0 %v518
    %1405 = vmatpush1.bf16.msra.mxu0 %v517
    %1406 = vmatprep.subr.bf16.mxu0 %v522
    %1407 = vmatpush1.bf16.msra.mxu0 %v521
    %1408 = vmatprep.subr.bf16.mxu0 %v526
    %1409 = vmatpush1.bf16.msra.mxu0 %v525
    %1410 = vmatprep.subr.bf16.mxu0 %v530
    %1411 = vmatpush1.bf16.msra.mxu0 %v529
    %1412 = vmatprep.subr.bf16.mxu0 %v534
    %1413 = vmatpush1.bf16.msra.mxu0 %v533
    %1414 = vmatprep.subr.bf16.mxu0 %v538
    %1415 = vmatpush1.bf16.msra.mxu0 %v537
    %1416 = vmatprep.subr.bf16.mxu0 %v542
    %1417 = vmatpush1.bf16.msra.mxu0 %v541
    %1418 = vmatprep.subr.bf16.mxu0 0
    %1419 = vmatpush1.bf16.msra.mxu0 0
    %1420 = vmatprep.subr.bf16.mxu0 0
    %1421 = vmatpush1.bf16.msra.mxu0 0
    %1422 = vmatprep.subr.bf16.mxu0 0
    %1423 = vmatpush1.bf16.msra.mxu0 0
    %1424 = vmatprep.subr.bf16.mxu0 0
    %1425 = vmatpush1.bf16.msra.mxu0 0
    %1426 = vmatprep.subr.bf16.mxu0 0
    %1427 = vmatpush1.bf16.msra.mxu0 0
    %1428 = vmatprep.subr.bf16.mxu0 0
    %1429 = vmatpush1.bf16.msra.mxu0 0
    %1430 = vmatprep.subr.bf16.mxu0 0
    %1431 = vmatpush1.bf16.msra.mxu0 0
    %1432 = vmatprep.subr.bf16.mxu0 0
    %1433 = vmatpush1.bf16.msra.mxu0 0
    %1434 = vmatprep.mubr.bf16.mxu0 0
    %1435 = vmatmul.mubr.bf16.gmra.mrb[0].mxu0 %v1296
    %v1436 = vpop.f32.mrb[0].mxu0
    %v1437 = vadd.f32 0.0, %v1436
    %v1438 = vpop.f32.mrb[0].mxu0
    %v1439 = vadd.f32 0.0, %v1438
    %v1440 = vpop.f32.mrb[0].mxu0
    %v1441 = vpop.f32.mrb[0].mxu0
    %1442 = vdwg.mxu0
    %1443 = vmatprep.subr.bf16.mxu0 %v516
    %1444 = vmatpush1.bf16.msra.mxu0 %v515
    %1445 = vmatprep.subr.bf16.mxu0 %v520
    %1446 = vmatpush1.bf16.msra.mxu0 %v519
    %1447 = vmatprep.subr.bf16.mxu0 %v524
    %1448 = vmatpush1.bf16.msra.mxu0 %v523
    %1449 = vmatprep.subr.bf16.mxu0 %v528
    %1450 = vmatpush1.bf16.msra.mxu0 %v527
    %1451 = vmatprep.subr.bf16.mxu0 %v532
    %1452 = vmatpush1.bf16.msra.mxu0 %v531
    %1453 = vmatprep.subr.bf16.mxu0 %v536
    %1454 = vmatpush1.bf16.msra.mxu0 %v535
    %1455 = vmatprep.subr.bf16.mxu0 %v540
    %1456 = vmatpush1.bf16.msra.mxu0 %v539
    %1457 = vmatprep.subr.bf16.mxu0 %v544
    %1458 = vmatpush1.bf16.msra.mxu0 %v543
    %1459 = vmatprep.subr.bf16.mxu0 0
    %1460 = vmatpush1.bf16.msra.mxu0 0
    %1461 = vmatprep.subr.bf16.mxu0 0
    %1462 = vmatpush1.bf16.msra.mxu0 0
    %1463 = vmatprep.subr.bf16.mxu0 0
    %1464 = vmatpush1.bf16.msra.mxu0 0
    %1465 = vmatprep.subr.bf16.mxu0 0
    %1466 = vmatpush1.bf16.msra.mxu0 0
    %1467 = vmatprep.subr.bf16.mxu0 0
    %1468 = vmatpush1.bf16.msra.mxu0 0
    %1469 = vmatprep.subr.bf16.mxu0 0
    %1470 = vmatpush1.bf16.msra.mxu0 0
    %1471 = vmatprep.subr.bf16.mxu0 0
    %1472 = vmatpush1.bf16.msra.mxu0 0
    %1473 = vmatprep.subr.bf16.mxu0 0
    %1474 = vmatpush1.bf16.msra.mxu0 0
    %1475 = vmatprep.mubr.bf16.mxu0 0
    %1476 = vmatmul.mubr.bf16.gmra.mrb[0].mxu0 %v1296
    %v1477 = vpop.f32.mrb[0].mxu0
    %v1478 = vadd.f32 0.0, %v1477
    %v1479 = vpop.f32.mrb[0].mxu0
    %v1480 = vadd.f32 0.0, %v1479
    %v1481 = vpop.f32.mrb[0].mxu0
    %v1482 = vpop.f32.mrb[0].mxu0
    %1483 = vdwg.mxu0
    %v1484 = vadd.f32 %v1398, %v1437
    %v1485 = vadd.f32 %v1399, %v1439
    %v1486 = vadd.f32 %v1400, %v1478
    %v1487 = vadd.f32 %v1401, %v1480
    %v1488 = vmul.f32 %v1484, 0.5
    %v1489 = vtanh.pop %v1488
    %v1490 = vmul.f32 %v1489, 0.5
    %v1491 = vadd.f32 %v1490, 0.5
    %v1492 = vmul.f32 %v1485, 0.5
    %v1493 = vtanh.pop %v1492
    %v1494 = vmul.f32 %v1493, 0.5
    %v1495 = vadd.f32 %v1494, 0.5
    %v1496 = vtanh.pop %v1486
    %v1497 = vmul.f32 %v1487, 0.5
    %v1498 = vtanh.pop %v1497
    %v1499 = vmul.f32 %v1498, 0.5
    %v1500 = vadd.f32 %v1499, 0.5
    %v1501 = vmul.f32 %v1495, %v1293
    %v1502 = vmul.f32 %v1491, %v1496
    %v1503 = vadd.f32 %v1501, %v1502
    %v1504 = vtanh.pop %v1503
    %v1505 = vmul.f32 %v1500, %v1504
    %v1506 = vpack.c.bf16 %v1505, %v1505
    %v1507 = vpack.c.bf16 %v1397, %v1397
    %1508 = vmatprep.subr.bf16.mxu0 %v961
    %1509 = vmatpush1.bf16.msra.mxu0 %v960
    %1510 = vmatprep.subr.bf16.mxu0 %v965
    %1511 = vmatpush1.bf16.msra.mxu0 %v964
    %1512 = vmatprep.subr.bf16.mxu0 %v969
    %1513 = vmatpush1.bf16.msra.mxu0 %v968
    %1514 = vmatprep.subr.bf16.mxu0 %v973
    %1515 = vmatpush1.bf16.msra.mxu0 %v972
    %1516 = vmatprep.subr.bf16.mxu0 %v977
    %1517 = vmatpush1.bf16.msra.mxu0 %v976
    %1518 = vmatprep.subr.bf16.mxu0 %v981
    %1519 = vmatpush1.bf16.msra.mxu0 %v980
    %1520 = vmatprep.subr.bf16.mxu0 %v985
    %1521 = vmatpush1.bf16.msra.mxu0 %v984
    %1522 = vmatprep.subr.bf16.mxu0 %v989
    %1523 = vmatpush1.bf16.msra.mxu0 %v988
    %1524 = vmatprep.subr.bf16.mxu0 %v993
    %1525 = vmatpush1.bf16.msra.mxu0 %v992
    %1526 = vmatprep.subr.bf16.mxu0 %v997
    %1527 = vmatpush1.bf16.msra.mxu0 %v996
    %1528 = vmatprep.subr.bf16.mxu0 %v1001
    %1529 = vmatpush1.bf16.msra.mxu0 %v1000
    %1530 = vmatprep.subr.bf16.mxu0 %v1005
    %1531 = vmatpush1.bf16.msra.mxu0 %v1004
    %1532 = vmatprep.subr.bf16.mxu0 %v1009
    %1533 = vmatpush1.bf16.msra.mxu0 %v1008
    %1534 = vmatprep.subr.bf16.mxu0 %v1013
    %1535 = vmatpush1.bf16.msra.mxu0 %v1012
    %1536 = vmatprep.subr.bf16.mxu0 %v1017
    %1537 = vmatpush1.bf16.msra.mxu0 %v1016
    %1538 = vmatprep.subr.bf16.mxu0 %v1021
    %1539 = vmatpush1.bf16.msra.mxu0 %v1020
    %1540 = vmatprep.mubr.bf16.mxu0 %v1507
    %1541 = vmatmul.mubr.bf16.gmra.mrb[0].mxu0 %v1506
    %v1542 = vpop.f32.mrb[0].mxu0
    %v1543 = vadd.f32 %v751, %v1542
    %v1544 = vpop.f32.mrb[0].mxu0
    %v1545 = vadd.f32 %v755, %v1544
    %v1546 = vpop.f32.mrb[0].mxu0
    %v1547 = vpop.f32.mrb[0].mxu0
    %1548 = vdwg.mxu0
    %1549 = vmatprep.subr.bf16.mxu0 %v963
    %1550 = vmatpush1.bf16.msra.mxu0 %v962
    %1551 = vmatprep.subr.bf16.mxu0 %v967
    %1552 = vmatpush1.bf16.msra.mxu0 %v966
    %1553 = vmatprep.subr.bf16.mxu0 %v971
    %1554 = vmatpush1.bf16.msra.mxu0 %v970
    %1555 = vmatprep.subr.bf16.mxu0 %v975
    %1556 = vmatpush1.bf16.msra.mxu0 %v974
    %1557 = vmatprep.subr.bf16.mxu0 %v979
    %1558 = vmatpush1.bf16.msra.mxu0 %v978
    %1559 = vmatprep.subr.bf16.mxu0 %v983
    %1560 = vmatpush1.bf16.msra.mxu0 %v982
    %1561 = vmatprep.subr.bf16.mxu0 %v987
    %1562 = vmatpush1.bf16.msra.mxu0 %v986
    %1563 = vmatprep.subr.bf16.mxu0 %v991
    %1564 = vmatpush1.bf16.msra.mxu0 %v990
    %1565 = vmatprep.subr.bf16.mxu0 %v995
    %1566 = vmatpush1.bf16.msra.mxu0 %v994
    %1567 = vmatprep.subr.bf16.mxu0 %v999
    %1568 = vmatpush1.bf16.msra.mxu0 %v998
    %1569 = vmatprep.subr.bf16.mxu0 %v1003
    %1570 = vmatpush1.bf16.msra.mxu0 %v1002
    %1571 = vmatprep.subr.bf16.mxu0 %v1007
    %1572 = vmatpush1.bf16.msra.mxu0 %v1006
    %1573 = vmatprep.subr.bf16.mxu0 %v1011
    %1574 = vmatpush1.bf16.msra.mxu0 %v1010
    %1575 = vmatprep.subr.bf16.mxu0 %v1015
    %1576 = vmatpush1.bf16.msra.mxu0 %v1014
    %1577 = vmatprep.subr.bf16.mxu0 %v1019
    %1578 = vmatpush1.bf16.msra.mxu0 %v1018
    %1579 = vmatprep.subr.bf16.mxu0 %v1023
    %1580 = vmatpush1.bf16.msra.mxu0 %v1022
    %1581 = vmatprep.mubr.bf16.mxu0 %v1507
    %1582 = vmatmul.mubr.bf16.gmra.mrb[0].mxu0 %v1506
    %v1583 = vpop.f32.mrb[0].mxu0
    %v1584 = vadd.f32 %v759, %v1583
    %v1585 = vpop.f32.mrb[0].mxu0
    %v1586 = vadd.f32 %v763, %v1585
    %v1587 = vpop.f32.mrb[0].mxu0
    %v1588 = vpop.f32.mrb[0].mxu0
    %1589 = vdwg.mxu0
    %v1590 = vmul.f32 %v1543, 0.5
    %v1591 = vtanh.pop %v1590
    %v1592 = vmul.f32 %v1591, 0.5
    %v1593 = vadd.f32 %v1592, 0.5
    %v1594 = vmul.f32 %v1545, 0.5
    %v1595 = vtanh.pop %v1594
    %v1596 = vmul.f32 %v1595, 0.5
    %v1597 = vadd.f32 %v1596, 0.5
    %v1598 = vtanh.pop %v1584
    %v1599 = vmul.f32 %v1586, 0.5
    %v1600 = vtanh.pop %v1599
    %v1601 = vmul.f32 %v1600, 0.5
    %v1602 = vadd.f32 %v1601, 0.5
    %v1603 = vmul.f32 %v1597, %v1395
    %v1604 = vmul.f32 %v1593, %v1598
    %v1605 = vadd.f32 %v1603, %v1604
    %v1606 = vtanh.pop %v1605
    %v1607 = vmul.f32 %v1602, %v1606
    %v1608 = vld [vmem:[#allocation2 + $0x60] sm:$0xff]
    %v1609 = vld [vmem:[#allocation2 + $0x68] sm:$0xff]
    %v1610 = vld [vmem:[#allocation2 + $0x70] sm:$0xff]
    %v1611 = vld [vmem:[#allocation2 + $0x78] sm:$0xff]
    %1612 = vmatprep.subr.bf16.mxu0 %v514
    %1613 = vmatpush1.bf16.msra.mxu0 %v513
    %1614 = vmatprep.subr.bf16.mxu0 %v518
    %1615 = vmatpush1.bf16.msra.mxu0 %v517
    %1616 = vmatprep.subr.bf16.mxu0 %v522
    %1617 = vmatpush1.bf16.msra.mxu0 %v521
    %1618 = vmatprep.subr.bf16.mxu0 %v526
    %1619 = vmatpush1.bf16.msra.mxu0 %v525
    %1620 = vmatprep.subr.bf16.mxu0 %v530
    %1621 = vmatpush1.bf16.msra.mxu0 %v529
    %1622 = vmatprep.subr.bf16.mxu0 %v534
    %1623 = vmatpush1.bf16.msra.mxu0 %v533
    %1624 = vmatprep.subr.bf16.mxu0 %v538
    %1625 = vmatpush1.bf16.msra.mxu0 %v537
    %1626 = vmatprep.subr.bf16.mxu0 %v542
    %1627 = vmatpush1.bf16.msra.mxu0 %v541
    %1628 = vmatprep.subr.bf16.mxu0 0
    %1629 = vmatpush1.bf16.msra.mxu0 0
    %1630 = vmatprep.subr.bf16.mxu0 0
    %1631 = vmatpush1.bf16.msra.mxu0 0
    %1632 = vmatprep.subr.bf16.mxu0 0
    %1633 = vmatpush1.bf16.msra.mxu0 0
    %1634 = vmatprep.subr.bf16.mxu0 0
    %1635 = vmatpush1.bf16.msra.mxu0 0
    %1636 = vmatprep.subr.bf16.mxu0 0
    %1637 = vmatpush1.bf16.msra.mxu0 0
    %1638 = vmatprep.subr.bf16.mxu0 0
    %1639 = vmatpush1.bf16.msra.mxu0 0
    %1640 = vmatprep.subr.bf16.mxu0 0
    %1641 = vmatpush1.bf16.msra.mxu0 0
    %1642 = vmatprep.subr.bf16.mxu0 0
    %1643 = vmatpush1.bf16.msra.mxu0 0
    %1644 = vmatprep.mubr.bf16.mxu0 0
    %1645 = vmatmul.mubr.bf16.gmra.mrb[0].mxu0 %v1506
    %v1646 = vpop.f32.mrb[0].mxu0
    %v1647 = vadd.f32 0.0, %v1646
    %v1648 = vpop.f32.mrb[0].mxu0
    %v1649 = vadd.f32 0.0, %v1648
    %v1650 = vpop.f32.mrb[0].mxu0
    %v1651 = vpop.f32.mrb[0].mxu0
    %1652 = vdwg.mxu0
    %1653 = vmatprep.subr.bf16.mxu0 %v516
    %1654 = vmatpush1.bf16.msra.mxu0 %v515
    %1655 = vmatprep.subr.bf16.mxu0 %v520
    %1656 = vmatpush1.bf16.msra.mxu0 %v519
    %1657 = vmatprep.subr.bf16.mxu0 %v524
    %1658 = vmatpush1.bf16.msra.mxu0 %v523
    %1659 = vmatprep.subr.bf16.mxu0 %v528
    %1660 = vmatpush1.bf16.msra.mxu0 %v527
    %1661 = vmatprep.subr.bf16.mxu0 %v532
    %1662 = vmatpush1.bf16.msra.mxu0 %v531
    %1663 = vmatprep.subr.bf16.mxu0 %v536
    %1664 = vmatpush1.bf16.msra.mxu0 %v535
    %1665 = vmatprep.subr.bf16.mxu0 %v540
    %1666 = vmatpush1.bf16.msra.mxu0 %v539
    %1667 = vmatprep.subr.bf16.mxu0 %v544
    %1668 = vmatpush1.bf16.msra.mxu0 %v543
    %1669 = vmatprep.subr.bf16.mxu0 0
    %1670 = vmatpush1.bf16.msra.mxu0 0
    %1671 = vmatprep.subr.bf16.mxu0 0
    %1672 = vmatpush1.bf16.msra.mxu0 0
    %1673 = vmatprep.subr.bf16.mxu0 0
    %1674 = vmatpush1.bf16.msra.mxu0 0
    %1675 = vmatprep.subr.bf16.mxu0 0
    %1676 = vmatpush1.bf16.msra.mxu0 0
    %1677 = vmatprep.subr.bf16.mxu0 0
    %1678 = vmatpush1.bf16.msra.mxu0 0
    %1679 = vmatprep.subr.bf16.mxu0 0
    %1680 = vmatpush1.bf16.msra.mxu0 0
    %1681 = vmatprep.subr.bf16.mxu0 0
    %1682 = vmatpush1.bf16.msra.mxu0 0
    %1683 = vmatprep.subr.bf16.mxu0 0
    %1684 = vmatpush1.bf16.msra.mxu0 0
    %1685 = vmatprep.mubr.bf16.mxu0 0
    %1686 = vmatmul.mubr.bf16.gmra.mrb[0].mxu0 %v1506
    %v1687 = vpop.f32.mrb[0].mxu0
    %v1688 = vadd.f32 0.0, %v1687
    %v1689 = vpop.f32.mrb[0].mxu0
    %v1690 = vadd.f32 0.0, %v1689
    %v1691 = vpop.f32.mrb[0].mxu0
    %v1692 = vpop.f32.mrb[0].mxu0
    %1693 = vdwg.mxu0
    %v1694 = vadd.f32 %v1608, %v1647
    %v1695 = vadd.f32 %v1609, %v1649
    %v1696 = vadd.f32 %v1610, %v1688
    %v1697 = vadd.f32 %v1611, %v1690
    %v1698 = vmul.f32 %v1694, 0.5
    %v1699 = vtanh.pop %v1698
    %v1700 = vmul.f32 %v1699, 0.5
    %v1701 = vadd.f32 %v1700, 0.5
    %v1702 = vmul.f32 %v1695, 0.5
    %v1703 = vtanh.pop %v1702
    %v1704 = vmul.f32 %v1703, 0.5
    %v1705 = vadd.f32 %v1704, 0.5
    %v1706 = vtanh.pop %v1696
    %v1707 = vmul.f32 %v1697, 0.5
    %v1708 = vtanh.pop %v1707
    %v1709 = vmul.f32 %v1708, 0.5
    %v1710 = vadd.f32 %v1709, 0.5
    %v1711 = vmul.f32 %v1705, %v1503
    %v1712 = vmul.f32 %v1701, %v1706
    %v1713 = vadd.f32 %v1711, %v1712
    %v1714 = vtanh.pop %v1713
    %v1715 = vmul.f32 %v1710, %v1714
    %v1716 = vpack.c.bf16 %v1715, %v1715
    %v1717 = vpack.c.bf16 %v1607, %v1607
    %1718 = vmatprep.subr.bf16.mxu0 %v961
    %1719 = vmatpush1.bf16.msra.mxu0 %v960
    %1720 = vmatprep.subr.bf16.mxu0 %v965
    %1721 = vmatpush1.bf16.msra.mxu0 %v964
    %1722 = vmatprep.subr.bf16.mxu0 %v969
    %1723 = vmatpush1.bf16.msra.mxu0 %v968
    %1724 = vmatprep.subr.bf16.mxu0 %v973
    %1725 = vmatpush1.bf16.msra.mxu0 %v972
    %1726 = vmatprep.subr.bf16.mxu0 %v977
    %1727 = vmatpush1.bf16.msra.mxu0 %v976
    %1728 = vmatprep.subr.bf16.mxu0 %v981
    %1729 = vmatpush1.bf16.msra.mxu0 %v980
    %1730 = vmatprep.subr.bf16.mxu0 %v985
    %1731 = vmatpush1.bf16.msra.mxu0 %v984
    %1732 = vmatprep.subr.bf16.mxu0 %v989
    %1733 = vmatpush1.bf16.msra.mxu0 %v988
    %1734 = vmatprep.subr.bf16.mxu0 %v993
    %1735 = vmatpush1.bf16.msra.mxu0 %v992
    %1736 = vmatprep.subr.bf16.mxu0 %v997
    %1737 = vmatpush1.bf16.msra.mxu0 %v996
    %1738 = vmatprep.subr.bf16.mxu0 %v1001
    %1739 = vmatpush1.bf16.msra.mxu0 %v1000
    %1740 = vmatprep.subr.bf16.mxu0 %v1005
    %1741 = vmatpush1.bf16.msra.mxu0 %v1004
    %1742 = vmatprep.subr.bf16.mxu0 %v1009
    %1743 = vmatpush1.bf16.msra.mxu0 %v1008
    %1744 = vmatprep.subr.bf16.mxu0 %v1013
    %1745 = vmatpush1.bf16.msra.mxu0 %v1012
    %1746 = vmatprep.subr.bf16.mxu0 %v1017
    %1747 = vmatpush1.bf16.msra.mxu0 %v1016
    %1748 = vmatprep.subr.bf16.mxu0 %v1021
    %1749 = vmatpush1.bf16.msra.mxu0 %v1020
    %1750 = vmatprep.mubr.bf16.mxu0 %v1717
    %1751 = vmatmul.mubr.bf16.gmra.mrb[0].mxu0 %v1716
    %v1752 = vpop.f32.mrb[0].mxu0
    %v1753 = vadd.f32 %v751, %v1752
    %v1754 = vpop.f32.mrb[0].mxu0
    %v1755 = vadd.f32 %v755, %v1754
    %v1756 = vpop.f32.mrb[0].mxu0
    %v1757 = vpop.f32.mrb[0].mxu0
    %1758 = vdwg.mxu0
    %1759 = vmatprep.subr.bf16.mxu0 %v963
    %1760 = vmatpush1.bf16.msra.mxu0 %v962
    %1761 = vmatprep.subr.bf16.mxu0 %v967
    %1762 = vmatpush1.bf16.msra.mxu0 %v966
    %1763 = vmatprep.subr.bf16.mxu0 %v971
    %1764 = vmatpush1.bf16.msra.mxu0 %v970
    %1765 = vmatprep.subr.bf16.mxu0 %v975
    %1766 = vmatpush1.bf16.msra.mxu0 %v974
    %1767 = vmatprep.subr.bf16.mxu0 %v979
    %1768 = vmatpush1.bf16.msra.mxu0 %v978
    %1769 = vmatprep.subr.bf16.mxu0 %v983
    %1770 = vmatpush1.bf16.msra.mxu0 %v982
    %1771 = vmatprep.subr.bf16.mxu0 %v987
    %1772 = vmatpush1.bf16.msra.mxu0 %v986
    %1773 = vmatprep.subr.bf16.mxu0 %v991
    %1774 = vmatpush1.bf16.msra.mxu0 %v990
    %1775 = vmatprep.subr.bf16.mxu0 %v995
    %1776 = vmatpush1.bf16.msra.mxu0 %v994
    %1777 = vmatprep.subr.bf16.mxu0 %v999
    %1778 = vmatpush1.bf16.msra.mxu0 %v998
    %1779 = vmatprep.subr.bf16.mxu0 %v1003
    %1780 = vmatpush1.bf16.msra.mxu0 %v1002
    %1781 = vmatprep.subr.bf16.mxu0 %v1007
    %1782 = vmatpush1.bf16.msra.mxu0 %v1006
    %1783 = vmatprep.subr.bf16.mxu0 %v1011
    %1784 = vmatpush1.bf16.msra.mxu0 %v1010
    %1785 = vmatprep.subr.bf16.mxu0 %v1015
    %1786 = vmatpush1.bf16.msra.mxu0 %v1014
    %1787 = vmatprep.subr.bf16.mxu0 %v1019
    %1788 = vmatpush1.bf16.msra.mxu0 %v1018
    %1789 = vmatprep.subr.bf16.mxu0 %v1023
    %1790 = vmatpush1.bf16.msra.mxu0 %v1022
    %1791 = vmatprep.mubr.bf16.mxu0 %v1717
    %1792 = vmatmul.mubr.bf16.gmra.mrb[0].mxu0 %v1716
    %v1793 = vpop.f32.mrb[0].mxu0
    %v1794 = vadd.f32 %v759, %v1793
    %v1795 = vpop.f32.mrb[0].mxu0
    %v1796 = vadd.f32 %v763, %v1795
    %v1797 = vpop.f32.mrb[0].mxu0
    %v1798 = vpop.f32.mrb[0].mxu0
    %1799 = vdwg.mxu0
    %v1800 = vmul.f32 %v1753, 0.5
    %v1801 = vtanh.pop %v1800
    %v1802 = vmul.f32 %v1801, 0.5
    %v1803 = vadd.f32 %v1802, 0.5
    %v1804 = vmul.f32 %v1755, 0.5
    %v1805 = vtanh.pop %v1804
    %v1806 = vmul.f32 %v1805, 0.5
    %v1807 = vadd.f32 %v1806, 0.5
    %v1808 = vtanh.pop %v1794
    %v1809 = vmul.f32 %v1796, 0.5
    %v1810 = vtanh.pop %v1809
    %v1811 = vmul.f32 %v1810, 0.5
    %v1812 = vadd.f32 %v1811, 0.5
    %v1813 = vmul.f32 %v1807, %v1605
    %v1814 = vmul.f32 %v1803, %v1808
    %v1815 = vadd.f32 %v1813, %v1814
    %v1816 = vtanh.pop %v1815
    %v1817 = vmul.f32 %v1812, %v1816
    %v1818 = vld [vmem:[#allocation2 + $0x80] sm:$0xff]
    %v1819 = vld [vmem:[#allocation2 + $0x88] sm:$0xff]
    %v1820 = vld [vmem:[#allocation2 + $0x90] sm:$0xff]
    %v1821 = vld [vmem:[#allocation2 + $0x98] sm:$0xff]
    %1822 = vmatprep.subr.bf16.mxu0 %v514
    %1823 = vmatpush1.bf16.msra.mxu0 %v513
    %1824 = vmatprep.subr.bf16.mxu0 %v518
    %1825 = vmatpush1.bf16.msra.mxu0 %v517
    %1826 = vmatprep.subr.bf16.mxu0 %v522
    %1827 = vmatpush1.bf16.msra.mxu0 %v521
    %1828 = vmatprep.subr.bf16.mxu0 %v526
    %1829 = vmatpush1.bf16.msra.mxu0 %v525
    %1830 = vmatprep.subr.bf16.mxu0 %v530
    %1831 = vmatpush1.bf16.msra.mxu0 %v529
    %1832 = vmatprep.subr.bf16.mxu0 %v534
    %1833 = vmatpush1.bf16.msra.mxu0 %v533
    %1834 = vmatprep.subr.bf16.mxu0 %v538
    %1835 = vmatpush1.bf16.msra.mxu0 %v537
    %1836 = vmatprep.subr.bf16.mxu0 %v542
    %1837 = vmatpush1.bf16.msra.mxu0 %v541
    %1838 = vmatprep.subr.bf16.mxu0 0
    %1839 = vmatpush1.bf16.msra.mxu0 0
    %1840 = vmatprep.subr.bf16.mxu0 0
    %1841 = vmatpush1.bf16.msra.mxu0 0
    %1842 = vmatprep.subr.bf16.mxu0 0
    %1843 = vmatpush1.bf16.msra.mxu0 0
    %1844 = vmatprep.subr.bf16.mxu0 0
    %1845 = vmatpush1.bf16.msra.mxu0 0
    %1846 = vmatprep.subr.bf16.mxu0 0
    %1847 = vmatpush1.bf16.msra.mxu0 0
    %1848 = vmatprep.subr.bf16.mxu0 0
    %1849 = vmatpush1.bf16.msra.mxu0 0
    %1850 = vmatprep.subr.bf16.mxu0 0
    %1851 = vmatpush1.bf16.msra.mxu0 0
    %1852 = vmatprep.subr.bf16.mxu0 0
    %1853 = vmatpush1.bf16.msra.mxu0 0
    %1854 = vmatprep.mubr.bf16.mxu0 0
    %1855 = vmatmul.mubr.bf16.gmra.mrb[0].mxu0 %v1716
    %v1856 = vpop.f32.mrb[0].mxu0
    %v1857 = vadd.f32 0.0, %v1856
    %v1858 = vpop.f32.mrb[0].mxu0
    %v1859 = vadd.f32 0.0, %v1858
    %v1860 = vpop.f32.mrb[0].mxu0
    %v1861 = vpop.f32.mrb[0].mxu0
    %1862 = vdwg.mxu0
    %1863 = vmatprep.subr.bf16.mxu0 %v516
    %1864 = vmatpush1.bf16.msra.mxu0 %v515
    %1865 = vmatprep.subr.bf16.mxu0 %v520
    %1866 = vmatpush1.bf16.msra.mxu0 %v519
    %1867 = vmatprep.subr.bf16.mxu0 %v524
    %1868 = vmatpush1.bf16.msra.mxu0 %v523
    %1869 = vmatprep.subr.bf16.mxu0 %v528
    %1870 = vmatpush1.bf16.msra.mxu0 %v527
    %1871 = vmatprep.subr.bf16.mxu0 %v532
    %1872 = vmatpush1.bf16.msra.mxu0 %v531
    %1873 = vmatprep.subr.bf16.mxu0 %v536
    %1874 = vmatpush1.bf16.msra.mxu0 %v535
    %1875 = vmatprep.subr.bf16.mxu0 %v540
    %1876 = vmatpush1.bf16.msra.mxu0 %v539
    %1877 = vmatprep.subr.bf16.mxu0 %v544
    %1878 = vmatpush1.bf16.msra.mxu0 %v543
    %1879 = vmatprep.subr.bf16.mxu0 0
    %1880 = vmatpush1.bf16.msra.mxu0 0
    %1881 = vmatprep.subr.bf16.mxu0 0
    %1882 = vmatpush1.bf16.msra.mxu0 0
    %1883 = vmatprep.subr.bf16.mxu0 0
    %1884 = vmatpush1.bf16.msra.mxu0 0
    %1885 = vmatprep.subr.bf16.mxu0 0
    %1886 = vmatpush1.bf16.msra.mxu0 0
    %1887 = vmatprep.subr.bf16.mxu0 0
    %1888 = vmatpush1.bf16.msra.mxu0 0
    %1889 = vmatprep.subr.bf16.mxu0 0
    %1890 = vmatpush1.bf16.msra.mxu0 0
    %1891 = vmatprep.subr.bf16.mxu0 0
    %1892 = vmatpush1.bf16.msra.mxu0 0
    %1893 = vmatprep.subr.bf16.mxu0 0
    %1894 = vmatpush1.bf16.msra.mxu0 0
    %1895 = vmatprep.mubr.bf16.mxu0 0
    %1896 = vmatmul.mubr.bf16.gmra.mrb[0].mxu0 %v1716
    %v1897 = vpop.f32.mrb[0].mxu0
    %v1898 = vadd.f32 0.0, %v1897
    %v1899 = vpop.f32.mrb[0].mxu0
    %v1900 = vadd.f32 0.0, %v1899
    %v1901 = vpop.f32.mrb[0].mxu0
    %v1902 = vpop.f32.mrb[0].mxu0
    %1903 = vdwg.mxu0
    %v1904 = vadd.f32 %v1818, %v1857
    %v1905 = vadd.f32 %v1819, %v1859
    %v1906 = vadd.f32 %v1820, %v1898
    %v1907 = vadd.f32 %v1821, %v1900
    %v1908 = vmul.f32 %v1904, 0.5
    %v1909 = vtanh.pop %v1908
    %v1910 = vmul.f32 %v1909, 0.5
    %v1911 = vadd.f32 %v1910, 0.5
    %v1912 = vmul.f32 %v1905, 0.5
    %v1913 = vtanh.pop %v1912
    %v1914 = vmul.f32 %v1913, 0.5
    %v1915 = vadd.f32 %v1914, 0.5
    %v1916 = vtanh.pop %v1906
    %v1917 = vmul.f32 %v1907, 0.5
    %v1918 = vtanh.pop %v1917
    %v1919 = vmul.f32 %v1918, 0.5
    %v1920 = vadd.f32 %v1919, 0.5
    %v1921 = vmul.f32 %v1915, %v1713
    %v1922 = vmul.f32 %v1911, %v1916
    %v1923 = vadd.f32 %v1921, %v1922
    %v1924 = vtanh.pop %v1923
    %v1925 = vmul.f32 %v1920, %v1924
    %v1926 = vpack.c.bf16 %v1925, %v1925
    %v1927 = vpack.c.bf16 %v1817, %v1817
    %1928 = vmatprep.subr.bf16.mxu0 %v961
    %1929 = vmatpush1.bf16.msra.mxu0 %v960
    %1930 = vmatprep.subr.bf16.mxu0 %v965
    %1931 = vmatpush1.bf16.msra.mxu0 %v964
    %1932 = vmatprep.subr.bf16.mxu0 %v969
    %1933 = vmatpush1.bf16.msra.mxu0 %v968
    %1934 = vmatprep.subr.bf16.mxu0 %v973
    %1935 = vmatpush1.bf16.msra.mxu0 %v972
    %1936 = vmatprep.subr.bf16.mxu0 %v977
    %1937 = vmatpush1.bf16.msra.mxu0 %v976
    %1938 = vmatprep.subr.bf16.mxu0 %v981
    %1939 = vmatpush1.bf16.msra.mxu0 %v980
    %1940 = vmatprep.subr.bf16.mxu0 %v985
    %1941 = vmatpush1.bf16.msra.mxu0 %v984
    %1942 = vmatprep.subr.bf16.mxu0 %v989
    %1943 = vmatpush1.bf16.msra.mxu0 %v988
    %1944 = vmatprep.subr.bf16.mxu0 %v993
    %1945 = vmatpush1.bf16.msra.mxu0 %v992
    %1946 = vmatprep.subr.bf16.mxu0 %v997
    %1947 = vmatpush1.bf16.msra.mxu0 %v996
    %1948 = vmatprep.subr.bf16.mxu0 %v1001
    %1949 = vmatpush1.bf16.msra.mxu0 %v1000
    %1950 = vmatprep.subr.bf16.mxu0 %v1005
    %1951 = vmatpush1.bf16.msra.mxu0 %v1004
    %1952 = vmatprep.subr.bf16.mxu0 %v1009
    %1953 = vmatpush1.bf16.msra.mxu0 %v1008
    %1954 = vmatprep.subr.bf16.mxu0 %v1013
    %1955 = vmatpush1.bf16.msra.mxu0 %v1012
    %1956 = vmatprep.subr.bf16.mxu0 %v1017
    %1957 = vmatpush1.bf16.msra.mxu0 %v1016
    %1958 = vmatprep.subr.bf16.mxu0 %v1021
    %1959 = vmatpush1.bf16.msra.mxu0 %v1020
    %1960 = vmatprep.mubr.bf16.mxu0 %v1927
    %1961 = vmatmul.mubr.bf16.gmra.mrb[0].mxu0 %v1926
    %v1962 = vpop.f32.mrb[0].mxu0
    %v1963 = vadd.f32 %v751, %v1962
    %v1964 = vpop.f32.mrb[0].mxu0
    %v1965 = vadd.f32 %v755, %v1964
    %v1966 = vpop.f32.mrb[0].mxu0
    %v1967 = vpop.f32.mrb[0].mxu0
    %1968 = vdwg.mxu0
    %1969 = vmatprep.subr.bf16.mxu0 %v963
    %1970 = vmatpush1.bf16.msra.mxu0 %v962
    %1971 = vmatprep.subr.bf16.mxu0 %v967
    %1972 = vmatpush1.bf16.msra.mxu0 %v966
    %1973 = vmatprep.subr.bf16.mxu0 %v971
    %1974 = vmatpush1.bf16.msra.mxu0 %v970
    %1975 = vmatprep.subr.bf16.mxu0 %v975
    %1976 = vmatpush1.bf16.msra.mxu0 %v974
    %1977 = vmatprep.subr.bf16.mxu0 %v979
    %1978 = vmatpush1.bf16.msra.mxu0 %v978
    %1979 = vmatprep.subr.bf16.mxu0 %v983
    %1980 = vmatpush1.bf16.msra.mxu0 %v982
    %1981 = vmatprep.subr.bf16.mxu0 %v987
    %1982 = vmatpush1.bf16.msra.mxu0 %v986
    %1983 = vmatprep.subr.bf16.mxu0 %v991
    %1984 = vmatpush1.bf16.msra.mxu0 %v990
    %1985 = vmatprep.subr.bf16.mxu0 %v995
    %1986 = vmatpush1.bf16.msra.mxu0 %v994
    %1987 = vmatprep.subr.bf16.mxu0 %v999
    %1988 = vmatpush1.bf16.msra.mxu0 %v998
    %1989 = vmatprep.subr.bf16.mxu0 %v1003
    %1990 = vmatpush1.bf16.msra.mxu0 %v1002
    %1991 = vmatprep.subr.bf16.mxu0 %v1007
    %1992 = vmatpush1.bf16.msra.mxu0 %v1006
    %1993 = vmatprep.subr.bf16.mxu0 %v1011
    %1994 = vmatpush1.bf16.msra.mxu0 %v1010
    %1995 = vmatprep.subr.bf16.mxu0 %v1015
    %1996 = vmatpush1.bf16.msra.mxu0 %v1014
    %1997 = vmatprep.subr.bf16.mxu0 %v1019
    %1998 = vmatpush1.bf16.msra.mxu0 %v1018
    %1999 = vmatprep.subr.bf16.mxu0 %v1023
    %2000 = vmatpush1.bf16.msra.mxu0 %v1022
    %2001 = vmatprep.mubr.bf16.mxu0 %v1927
    %2002 = vmatmul.mubr.bf16.gmra.mrb[0].mxu0 %v1926
    %v2003 = vpop.f32.mrb[0].mxu0
    %v2004 = vadd.f32 %v759, %v2003
    %v2005 = vpop.f32.mrb[0].mxu0
    %v2006 = vadd.f32 %v763, %v2005
    %v2007 = vpop.f32.mrb[0].mxu0
    %v2008 = vpop.f32.mrb[0].mxu0
    %2009 = vdwg.mxu0
    %v2010 = vmul.f32 %v1963, 0.5
    %v2011 = vtanh.pop %v2010
    %v2012 = vmul.f32 %v2011, 0.5
    %v2013 = vadd.f32 %v2012, 0.5
    %v2014 = vmul.f32 %v1965, 0.5
    %v2015 = vtanh.pop %v2014
    %v2016 = vmul.f32 %v2015, 0.5
    %v2017 = vadd.f32 %v2016, 0.5
    %v2018 = vtanh.pop %v2004
    %v2019 = vmul.f32 %v2006, 0.5
    %v2020 = vtanh.pop %v2019
    %v2021 = vmul.f32 %v2020, 0.5
    %v2022 = vadd.f32 %v2021, 0.5
    %v2023 = vmul.f32 %v2017, %v1815
    %v2024 = vmul.f32 %v2013, %v2018
    %v2025 = vadd.f32 %v2023, %v2024
    %v2026 = vtanh.pop %v2025
    %v2027 = vmul.f32 %v2022, %v2026
    %v2028 = vld [vmem:[#allocation2 + $0xa0] sm:$0xff]
    %v2029 = vld [vmem:[#allocation2 + $0xa8] sm:$0xff]
    %v2030 = vld [vmem:[#allocation2 + $0xb0] sm:$0xff]
    %v2031 = vld [vmem:[#allocation2 + $0xb8] sm:$0xff]
    %2032 = vmatprep.subr.bf16.mxu0 %v514
    %2033 = vmatpush1.bf16.msra.mxu0 %v513
    %2034 = vmatprep.subr.bf16.mxu0 %v518
    %2035 = vmatpush1.bf16.msra.mxu0 %v517
    %2036 = vmatprep.subr.bf16.mxu0 %v522
    %2037 = vmatpush1.bf16.msra.mxu0 %v521
    %2038 = vmatprep.subr.bf16.mxu0 %v526
    %2039 = vmatpush1.bf16.msra.mxu0 %v525
    %2040 = vmatprep.subr.bf16.mxu0 %v530
    %2041 = vmatpush1.bf16.msra.mxu0 %v529
    %2042 = vmatprep.subr.bf16.mxu0 %v534
    %2043 = vmatpush1.bf16.msra.mxu0 %v533
    %2044 = vmatprep.subr.bf16.mxu0 %v538
    %2045 = vmatpush1.bf16.msra.mxu0 %v537
    %2046 = vmatprep.subr.bf16.mxu0 %v542
    %2047 = vmatpush1.bf16.msra.mxu0 %v541
    %2048 = vmatprep.subr.bf16.mxu0 0
    %2049 = vmatpush1.bf16.msra.mxu0 0
    %2050 = vmatprep.subr.bf16.mxu0 0
    %2051 = vmatpush1.bf16.msra.mxu0 0
    %2052 = vmatprep.subr.bf16.mxu0 0
    %2053 = vmatpush1.bf16.msra.mxu0 0
    %2054 = vmatprep.subr.bf16.mxu0 0
    %2055 = vmatpush1.bf16.msra.mxu0 0
    %2056 = vmatprep.subr.bf16.mxu0 0
    %2057 = vmatpush1.bf16.msra.mxu0 0
    %2058 = vmatprep.subr.bf16.mxu0 0
    %2059 = vmatpush1.bf16.msra.mxu0 0
    %2060 = vmatprep.subr.bf16.mxu0 0
    %2061 = vmatpush1.bf16.msra.mxu0 0
    %2062 = vmatprep.subr.bf16.mxu0 0
    %2063 = vmatpush1.bf16.msra.mxu0 0
    %2064 = vmatprep.mubr.bf16.mxu0 0
    %2065 = vmatmul.mubr.bf16.gmra.mrb[0].mxu0 %v1926
    %v2066 = vpop.f32.mrb[0].mxu0
    %v2067 = vadd.f32 0.0, %v2066
    %v2068 = vpop.f32.mrb[0].mxu0
    %v2069 = vadd.f32 0.0, %v2068
    %v2070 = vpop.f32.mrb[0].mxu0
    %v2071 = vpop.f32.mrb[0].mxu0
    %2072 = vdwg.mxu0
    %2073 = vmatprep.subr.bf16.mxu0 %v516
    %2074 = vmatpush1.bf16.msra.mxu0 %v515
    %2075 = vmatprep.subr.bf16.mxu0 %v520
    %2076 = vmatpush1.bf16.msra.mxu0 %v519
    %2077 = vmatprep.subr.bf16.mxu0 %v524
    %2078 = vmatpush1.bf16.msra.mxu0 %v523
    %2079 = vmatprep.subr.bf16.mxu0 %v528
    %2080 = vmatpush1.bf16.msra.mxu0 %v527
    %2081 = vmatprep.subr.bf16.mxu0 %v532
    %2082 = vmatpush1.bf16.msra.mxu0 %v531
    %2083 = vmatprep.subr.bf16.mxu0 %v536
    %2084 = vmatpush1.bf16.msra.mxu0 %v535
    %2085 = vmatprep.subr.bf16.mxu0 %v540
    %2086 = vmatpush1.bf16.msra.mxu0 %v539
    %2087 = vmatprep.subr.bf16.mxu0 %v544
    %2088 = vmatpush1.bf16.msra.mxu0 %v543
    %2089 = vmatprep.subr.bf16.mxu0 0
    %2090 = vmatpush1.bf16.msra.mxu0 0
    %2091 = vmatprep.subr.bf16.mxu0 0
    %2092 = vmatpush1.bf16.msra.mxu0 0
    %2093 = vmatprep.subr.bf16.mxu0 0
    %2094 = vmatpush1.bf16.msra.mxu0 0
    %2095 = vmatprep.subr.bf16.mxu0 0
    %2096 = vmatpush1.bf16.msra.mxu0 0
    %2097 = vmatprep.subr.bf16.mxu0 0
    %2098 = vmatpush1.bf16.msra.mxu0 0
    %2099 = vmatprep.subr.bf16.mxu0 0
    %2100 = vmatpush1.bf16.msra.mxu0 0
    %2101 = vmatprep.subr.bf16.mxu0 0
    %2102 = vmatpush1.bf16.msra.mxu0 0
    %2103 = vmatprep.subr.bf16.mxu0 0
    %2104 = vmatpush1.bf16.msra.mxu0 0
    %2105 = vmatprep.mubr.bf16.mxu0 0
    %2106 = vmatmul.mubr.bf16.gmra.mrb[0].mxu0 %v1926
    %v2107 = vpop.f32.mrb[0].mxu0
    %v2108 = vadd.f32 0.0, %v2107
    %v2109 = vpop.f32.mrb[0].mxu0
    %v2110 = vadd.f32 0.0, %v2109
    %v2111 = vpop.f32.mrb[0].mxu0
    %v2112 = vpop.f32.mrb[0].mxu0
    %2113 = vdwg.mxu0
    %v2114 = vadd.f32 %v2028, %v2067
    %v2115 = vadd.f32 %v2029, %v2069
    %v2116 = vadd.f32 %v2030, %v2108
    %v2117 = vadd.f32 %v2031, %v2110
    %v2118 = vmul.f32 %v2114, 0.5
    %v2119 = vtanh.pop %v2118
    %v2120 = vmul.f32 %v2119, 0.5
    %v2121 = vadd.f32 %v2120, 0.5
    %v2122 = vmul.f32 %v2115, 0.5
    %v2123 = vtanh.pop %v2122
    %v2124 = vmul.f32 %v2123, 0.5
    %v2125 = vadd.f32 %v2124, 0.5
    %v2126 = vtanh.pop %v2116
    %v2127 = vmul.f32 %v2117, 0.5
    %v2128 = vtanh.pop %v2127
    %v2129 = vmul.f32 %v2128, 0.5
    %v2130 = vadd.f32 %v2129, 0.5
    %v2131 = vmul.f32 %v2125, %v1923
    %v2132 = vmul.f32 %v2121, %v2126
    %v2133 = vadd.f32 %v2131, %v2132
    %v2134 = vtanh.pop %v2133
    %v2135 = vmul.f32 %v2130, %v2134
    %v2136 = vpack.c.bf16 %v2135, %v2135
    %v2137 = vpack.c.bf16 %v2027, %v2027
    %2138 = vmatprep.subr.bf16.mxu0 %v961
    %2139 = vmatpush1.bf16.msra.mxu0 %v960
    %2140 = vmatprep.subr.bf16.mxu0 %v965
    %2141 = vmatpush1.bf16.msra.mxu0 %v964
    %2142 = vmatprep.subr.bf16.mxu0 %v969
    %2143 = vmatpush1.bf16.msra.mxu0 %v968
    %2144 = vmatprep.subr.bf16.mxu0 %v973
    %2145 = vmatpush1.bf16.msra.mxu0 %v972
    %2146 = vmatprep.subr.bf16.mxu0 %v977
    %2147 = vmatpush1.bf16.msra.mxu0 %v976
    %2148 = vmatprep.subr.bf16.mxu0 %v981
    %2149 = vmatpush1.bf16.msra.mxu0 %v980
    %2150 = vmatprep.subr.bf16.mxu0 %v985
    %2151 = vmatpush1.bf16.msra.mxu0 %v984
    %2152 = vmatprep.subr.bf16.mxu0 %v989
    %2153 = vmatpush1.bf16.msra.mxu0 %v988
    %2154 = vmatprep.subr.bf16.mxu0 %v993
    %2155 = vmatpush1.bf16.msra.mxu0 %v992
    %2156 = vmatprep.subr.bf16.mxu0 %v997
    %2157 = vmatpush1.bf16.msra.mxu0 %v996
    %2158 = vmatprep.subr.bf16.mxu0 %v1001
    %2159 = vmatpush1.bf16.msra.mxu0 %v1000
    %2160 = vmatprep.subr.bf16.mxu0 %v1005
    %2161 = vmatpush1.bf16.msra.mxu0 %v1004
    %2162 = vmatprep.subr.bf16.mxu0 %v1009
    %2163 = vmatpush1.bf16.msra.mxu0 %v1008
    %2164 = vmatprep.subr.bf16.mxu0 %v1013
    %2165 = vmatpush1.bf16.msra.mxu0 %v1012
    %2166 = vmatprep.subr.bf16.mxu0 %v1017
    %2167 = vmatpush1.bf16.msra.mxu0 %v1016
    %2168 = vmatprep.subr.bf16.mxu0 %v1021
    %2169 = vmatpush1.bf16.msra.mxu0 %v1020
    %2170 = vmatprep.mubr.bf16.mxu0 %v2137
    %2171 = vmatmul.mubr.bf16.gmra.mrb[0].mxu0 %v2136
    %v2172 = vpop.f32.mrb[0].mxu0
    %v2173 = vadd.f32 %v751, %v2172
    %v2174 = vpop.f32.mrb[0].mxu0
    %v2175 = vadd.f32 %v755, %v2174
    %v2176 = vpop.f32.mrb[0].mxu0
    %v2177 = vpop.f32.mrb[0].mxu0
    %2178 = vdwg.mxu0
    %2179 = vmatprep.subr.bf16.mxu0 %v963
    %2180 = vmatpush1.bf16.msra.mxu0 %v962
    %2181 = vmatprep.subr.bf16.mxu0 %v967
    %2182 = vmatpush1.bf16.msra.mxu0 %v966
    %2183 = vmatprep.subr.bf16.mxu0 %v971
    %2184 = vmatpush1.bf16.msra.mxu0 %v970
    %2185 = vmatprep.subr.bf16.mxu0 %v975
    %2186 = vmatpush1.bf16.msra.mxu0 %v974
    %2187 = vmatprep.subr.bf16.mxu0 %v979
    %2188 = vmatpush1.bf16.msra.mxu0 %v978
    %2189 = vmatprep.subr.bf16.mxu0 %v983
    %2190 = vmatpush1.bf16.msra.mxu0 %v982
    %2191 = vmatprep.subr.bf16.mxu0 %v987
    %2192 = vmatpush1.bf16.msra.mxu0 %v986
    %2193 = vmatprep.subr.bf16.mxu0 %v991
    %2194 = vmatpush1.bf16.msra.mxu0 %v990
    %2195 = vmatprep.subr.bf16.mxu0 %v995
    %2196 = vmatpush1.bf16.msra.mxu0 %v994
    %2197 = vmatprep.subr.bf16.mxu0 %v999
    %2198 = vmatpush1.bf16.msra.mxu0 %v998
    %2199 = vmatprep.subr.bf16.mxu0 %v1003
    %2200 = vmatpush1.bf16.msra.mxu0 %v1002
    %2201 = vmatprep.subr.bf16.mxu0 %v1007
    %2202 = vmatpush1.bf16.msra.mxu0 %v1006
    %2203 = vmatprep.subr.bf16.mxu0 %v1011
    %2204 = vmatpush1.bf16.msra.mxu0 %v1010
    %2205 = vmatprep.subr.bf16.mxu0 %v1015
    %2206 = vmatpush1.bf16.msra.mxu0 %v1014
    %2207 = vmatprep.subr.bf16.mxu0 %v1019
    %2208 = vmatpush1.bf16.msra.mxu0 %v1018
    %2209 = vmatprep.subr.bf16.mxu0 %v1023
    %2210 = vmatpush1.bf16.msra.mxu0 %v1022
    %2211 = vmatprep.mubr.bf16.mxu0 %v2137
    %2212 = vmatmul.mubr.bf16.gmra.mrb[0].mxu0 %v2136
    %v2213 = vpop.f32.mrb[0].mxu0
    %v2214 = vadd.f32 %v759, %v2213
    %v2215 = vpop.f32.mrb[0].mxu0
    %v2216 = vadd.f32 %v763, %v2215
    %v2217 = vpop.f32.mrb[0].mxu0
    %v2218 = vpop.f32.mrb[0].mxu0
    %2219 = vdwg.mxu0
    %v2220 = vmul.f32 %v2173, 0.5
    %v2221 = vtanh.pop %v2220
    %v2222 = vmul.f32 %v2221, 0.5
    %v2223 = vadd.f32 %v2222, 0.5
    %v2224 = vmul.f32 %v2175, 0.5
    %v2225 = vtanh.pop %v2224
    %v2226 = vmul.f32 %v2225, 0.5
    %v2227 = vadd.f32 %v2226, 0.5
    %v2228 = vtanh.pop %v2214
    %v2229 = vmul.f32 %v2216, 0.5
    %v2230 = vtanh.pop %v2229
    %v2231 = vmul.f32 %v2230, 0.5
    %v2232 = vadd.f32 %v2231, 0.5
    %v2233 = vmul.f32 %v2227, %v2025
    %v2234 = vmul.f32 %v2223, %v2228
    %v2235 = vadd.f32 %v2233, %v2234
    %v2236 = vtanh.pop %v2235
    %v2237 = vmul.f32 %v2232, %v2236
    %v2238 = vld [vmem:[#allocation2 + $0xc0] sm:$0xff]
    %v2239 = vld [vmem:[#allocation2 + $0xc8] sm:$0xff]
    %v2240 = vld [vmem:[#allocation2 + $0xd0] sm:$0xff]
    %v2241 = vld [vmem:[#allocation2 + $0xd8] sm:$0xff]
    %2242 = vmatprep.subr.bf16.mxu0 %v514
    %2243 = vmatpush1.bf16.msra.mxu0 %v513
    %2244 = vmatprep.subr.bf16.mxu0 %v518
    %2245 = vmatpush1.bf16.msra.mxu0 %v517
    %2246 = vmatprep.subr.bf16.mxu0 %v522
    %2247 = vmatpush1.bf16.msra.mxu0 %v521
    %2248 = vmatprep.subr.bf16.mxu0 %v526
    %2249 = vmatpush1.bf16.msra.mxu0 %v525
    %2250 = vmatprep.subr.bf16.mxu0 %v530
    %2251 = vmatpush1.bf16.msra.mxu0 %v529
    %2252 = vmatprep.subr.bf16.mxu0 %v534
    %2253 = vmatpush1.bf16.msra.mxu0 %v533
    %2254 = vmatprep.subr.bf16.mxu0 %v538
    %2255 = vmatpush1.bf16.msra.mxu0 %v537
    %2256 = vmatprep.subr.bf16.mxu0 %v542
    %2257 = vmatpush1.bf16.msra.mxu0 %v541
    %2258 = vmatprep.subr.bf16.mxu0 0
    %2259 = vmatpush1.bf16.msra.mxu0 0
    %2260 = vmatprep.subr.bf16.mxu0 0
    %2261 = vmatpush1.bf16.msra.mxu0 0
    %2262 = vmatprep.subr.bf16.mxu0 0
    %2263 = vmatpush1.bf16.msra.mxu0 0
    %2264 = vmatprep.subr.bf16.mxu0 0
    %2265 = vmatpush1.bf16.msra.mxu0 0
    %2266 = vmatprep.subr.bf16.mxu0 0
    %2267 = vmatpush1.bf16.msra.mxu0 0
    %2268 = vmatprep.subr.bf16.mxu0 0
    %2269 = vmatpush1.bf16.msra.mxu0 0
    %2270 = vmatprep.subr.bf16.mxu0 0
    %2271 = vmatpush1.bf16.msra.mxu0 0
    %2272 = vmatprep.subr.bf16.mxu0 0
    %2273 = vmatpush1.bf16.msra.mxu0 0
    %2274 = vmatprep.mubr.bf16.mxu0 0
    %2275 = vmatmul.mubr.bf16.gmra.mrb[0].mxu0 %v2136
    %v2276 = vpop.f32.mrb[0].mxu0
    %v2277 = vadd.f32 0.0, %v2276
    %v2278 = vpop.f32.mrb[0].mxu0
    %v2279 = vadd.f32 0.0, %v2278
    %v2280 = vpop.f32.mrb[0].mxu0
    %v2281 = vpop.f32.mrb[0].mxu0
    %2282 = vdwg.mxu0
    %2283 = vmatprep.subr.bf16.mxu0 %v516
    %2284 = vmatpush1.bf16.msra.mxu0 %v515
    %2285 = vmatprep.subr.bf16.mxu0 %v520
    %2286 = vmatpush1.bf16.msra.mxu0 %v519
    %2287 = vmatprep.subr.bf16.mxu0 %v524
    %2288 = vmatpush1.bf16.msra.mxu0 %v523
    %2289 = vmatprep.subr.bf16.mxu0 %v528
    %2290 = vmatpush1.bf16.msra.mxu0 %v527
    %2291 = vmatprep.subr.bf16.mxu0 %v532
    %2292 = vmatpush1.bf16.msra.mxu0 %v531
    %2293 = vmatprep.subr.bf16.mxu0 %v536
    %2294 = vmatpush1.bf16.msra.mxu0 %v535
    %2295 = vmatprep.subr.bf16.mxu0 %v540
    %2296 = vmatpush1.bf16.msra.mxu0 %v539
    %2297 = vmatprep.subr.bf16.mxu0 %v544
    %2298 = vmatpush1.bf16.msra.mxu0 %v543
    %2299 = vmatprep.subr.bf16.mxu0 0
    %2300 = vmatpush1.bf16.msra.mxu0 0
    %2301 = vmatprep.subr.bf16.mxu0 0
    %2302 = vmatpush1.bf16.msra.mxu0 0
    %2303 = vmatprep.subr.bf16.mxu0 0
    %2304 = vmatpush1.bf16.msra.mxu0 0
    %2305 = vmatprep.subr.bf16.mxu0 0
    %2306 = vmatpush1.bf16.msra.mxu0 0
    %2307 = vmatprep.subr.bf16.mxu0 0
    %2308 = vmatpush1.bf16.msra.mxu0 0
    %2309 = vmatprep.subr.bf16.mxu0 0
    %2310 = vmatpush1.bf16.msra.mxu0 0
    %2311 = vmatprep.subr.bf16.mxu0 0
    %2312 = vmatpush1.bf16.msra.mxu0 0
    %2313 = vmatprep.subr.bf16.mxu0 0
    %2314 = vmatpush1.bf16.msra.mxu0 0
    %2315 = vmatprep.mubr.bf16.mxu0 0
    %2316 = vmatmul.mubr.bf16.gmra.mrb[0].mxu0 %v2136
    %v2317 = vpop.f32.mrb[0].mxu0
    %v2318 = vadd.f32 0.0, %v2317
    %v2319 = vpop.f32.mrb[0].mxu0
    %v2320 = vadd.f32 0.0, %v2319
    %v2321 = vpop.f32.mrb[0].mxu0
    %v2322 = vpop.f32.mrb[0].mxu0
    %2323 = vdwg.mxu0
    %v2324 = vadd.f32 %v2238, %v2277
    %v2325 = vadd.f32 %v2239, %v2279
    %v2326 = vadd.f32 %v2240, %v2318
    %v2327 = vadd.f32 %v2241, %v2320
    %v2328 = vmul.f32 %v2324, 0.5
    %v2329 = vtanh.pop %v2328
    %v2330 = vmul.f32 %v2329, 0.5
    %v2331 = vadd.f32 %v2330, 0.5
    %v2332 = vmul.f32 %v2325, 0.5
    %v2333 = vtanh.pop %v2332
    %v2334 = vmul.f32 %v2333, 0.5
    %v2335 = vadd.f32 %v2334, 0.5
    %v2336 = vtanh.pop %v2326
    %v2337 = vmul.f32 %v2327, 0.5
    %v2338 = vtanh.pop %v2337
    %v2339 = vmul.f32 %v2338, 0.5
    %v2340 = vadd.f32 %v2339, 0.5
    %v2341 = vmul.f32 %v2335, %v2133
    %v2342 = vmul.f32 %v2331, %v2336
    %v2343 = vadd.f32 %v2341, %v2342
    %v2344 = vtanh.pop %v2343
    %v2345 = vmul.f32 %v2340, %v2344
    %v2346 = vpack.c.bf16 %v2345, %v2345
    %v2347 = vpack.c.bf16 %v2237, %v2237
    %2348 = vmatprep.subr.bf16.mxu0 %v961
    %2349 = vmatpush1.bf16.msra.mxu0 %v960
    %2350 = vmatprep.subr.bf16.mxu0 %v965
    %2351 = vmatpush1.bf16.msra.mxu0 %v964
    %2352 = vmatprep.subr.bf16.mxu0 %v969
    %2353 = vmatpush1.bf16.msra.mxu0 %v968
    %2354 = vmatprep.subr.bf16.mxu0 %v973
    %2355 = vmatpush1.bf16.msra.mxu0 %v972
    %2356 = vmatprep.subr.bf16.mxu0 %v977
    %2357 = vmatpush1.bf16.msra.mxu0 %v976
    %2358 = vmatprep.subr.bf16.mxu0 %v981
    %2359 = vmatpush1.bf16.msra.mxu0 %v980
    %2360 = vmatprep.subr.bf16.mxu0 %v985
    %2361 = vmatpush1.bf16.msra.mxu0 %v984
    %2362 = vmatprep.subr.bf16.mxu0 %v989
    %2363 = vmatpush1.bf16.msra.mxu0 %v988
    %2364 = vmatprep.subr.bf16.mxu0 %v993
    %2365 = vmatpush1.bf16.msra.mxu0 %v992
    %2366 = vmatprep.subr.bf16.mxu0 %v997
    %2367 = vmatpush1.bf16.msra.mxu0 %v996
    %2368 = vmatprep.subr.bf16.mxu0 %v1001
    %2369 = vmatpush1.bf16.msra.mxu0 %v1000
    %2370 = vmatprep.subr.bf16.mxu0 %v1005
    %2371 = vmatpush1.bf16.msra.mxu0 %v1004
    %2372 = vmatprep.subr.bf16.mxu0 %v1009
    %2373 = vmatpush1.bf16.msra.mxu0 %v1008
    %2374 = vmatprep.subr.bf16.mxu0 %v1013
    %2375 = vmatpush1.bf16.msra.mxu0 %v1012
    %2376 = vmatprep.subr.bf16.mxu0 %v1017
    %2377 = vmatpush1.bf16.msra.mxu0 %v1016
    %2378 = vmatprep.subr.bf16.mxu0 %v1021
    %2379 = vmatpush1.bf16.msra.mxu0 %v1020
    %2380 = vmatprep.mubr.bf16.mxu0 %v2347
    %2381 = vmatmul.mubr.bf16.gmra.mrb[0].mxu0 %v2346
    %v2382 = vpop.f32.mrb[0].mxu0
    %v2383 = vadd.f32 %v751, %v2382
    %v2384 = vpop.f32.mrb[0].mxu0
    %v2385 = vadd.f32 %v755, %v2384
    %v2386 = vpop.f32.mrb[0].mxu0
    %v2387 = vpop.f32.mrb[0].mxu0
    %2388 = vdwg.mxu0
    %2389 = vmatprep.subr.bf16.mxu0 %v963
    %2390 = vmatpush1.bf16.msra.mxu0 %v962
    %2391 = vmatprep.subr.bf16.mxu0 %v967
    %2392 = vmatpush1.bf16.msra.mxu0 %v966
    %2393 = vmatprep.subr.bf16.mxu0 %v971
    %2394 = vmatpush1.bf16.msra.mxu0 %v970
    %2395 = vmatprep.subr.bf16.mxu0 %v975
    %2396 = vmatpush1.bf16.msra.mxu0 %v974
    %2397 = vmatprep.subr.bf16.mxu0 %v979
    %2398 = vmatpush1.bf16.msra.mxu0 %v978
    %2399 = vmatprep.subr.bf16.mxu0 %v983
    %2400 = vmatpush1.bf16.msra.mxu0 %v982
    %2401 = vmatprep.subr.bf16.mxu0 %v987
    %2402 = vmatpush1.bf16.msra.mxu0 %v986
    %2403 = vmatprep.subr.bf16.mxu0 %v991
    %2404 = vmatpush1.bf16.msra.mxu0 %v990
    %2405 = vmatprep.subr.bf16.mxu0 %v995
    %2406 = vmatpush1.bf16.msra.mxu0 %v994
    %2407 = vmatprep.subr.bf16.mxu0 %v999
    %2408 = vmatpush1.bf16.msra.mxu0 %v998
    %2409 = vmatprep.subr.bf16.mxu0 %v1003
    %2410 = vmatpush1.bf16.msra.mxu0 %v1002
    %2411 = vmatprep.subr.bf16.mxu0 %v1007
    %2412 = vmatpush1.bf16.msra.mxu0 %v1006
    %2413 = vmatprep.subr.bf16.mxu0 %v1011
    %2414 = vmatpush1.bf16.msra.mxu0 %v1010
    %2415 = vmatprep.subr.bf16.mxu0 %v1015
    %2416 = vmatpush1.bf16.msra.mxu0 %v1014
    %2417 = vmatprep.subr.bf16.mxu0 %v1019
    %2418 = vmatpush1.bf16.msra.mxu0 %v1018
    %2419 = vmatprep.subr.bf16.mxu0 %v1023
    %2420 = vmatpush1.bf16.msra.mxu0 %v1022
    %2421 = vmatprep.mubr.bf16.mxu0 %v2347
    %2422 = vmatmul.mubr.bf16.gmra.mrb[0].mxu0 %v2346
    %v2423 = vpop.f32.mrb[0].mxu0
    %v2424 = vadd.f32 %v759, %v2423
    %v2425 = vpop.f32.mrb[0].mxu0
    %v2426 = vadd.f32 %v763, %v2425
    %v2427 = vpop.f32.mrb[0].mxu0
    %v2428 = vpop.f32.mrb[0].mxu0
    %2429 = vdwg.mxu0
    %v2430 = vmul.f32 %v2383, 0.5
    %v2431 = vtanh.pop %v2430
    %v2432 = vmul.f32 %v2431, 0.5
    %v2433 = vadd.f32 %v2432, 0.5
    %v2434 = vmul.f32 %v2385, 0.5
    %v2435 = vtanh.pop %v2434
    %v2436 = vmul.f32 %v2435, 0.5
    %v2437 = vadd.f32 %v2436, 0.5
    %v2438 = vtanh.pop %v2424
    %v2439 = vmul.f32 %v2426, 0.5
    %v2440 = vtanh.pop %v2439
    %v2441 = vmul.f32 %v2440, 0.5
    %v2442 = vadd.f32 %v2441, 0.5
    %v2443 = vmul.f32 %v2437, %v2235
    %v2444 = vmul.f32 %v2433, %v2438
    %v2445 = vadd.f32 %v2443, %v2444
    %v2446 = vtanh.pop %v2445
    %v2447 = vmul.f32 %v2442, %v2446
    %v2448 = vld [vmem:[#allocation2 + $0xe0] sm:$0xff]
    %v2449 = vld [vmem:[#allocation2 + $0xe8] sm:$0xff]
    %v2450 = vld [vmem:[#allocation2 + $0xf0] sm:$0xff]
    %v2451 = vld [vmem:[#allocation2 + $0xf8] sm:$0xff]
    %2452 = vmatprep.subr.bf16.mxu0 %v514
    %2453 = vmatpush1.bf16.msra.mxu0 %v513
    %2454 = vmatprep.subr.bf16.mxu0 %v518
    %2455 = vmatpush1.bf16.msra.mxu0 %v517
    %2456 = vmatprep.subr.bf16.mxu0 %v522
    %2457 = vmatpush1.bf16.msra.mxu0 %v521
    %2458 = vmatprep.subr.bf16.mxu0 %v526
    %2459 = vmatpush1.bf16.msra.mxu0 %v525
    %2460 = vmatprep.subr.bf16.mxu0 %v530
    %2461 = vmatpush1.bf16.msra.mxu0 %v529
    %2462 = vmatprep.subr.bf16.mxu0 %v534
    %2463 = vmatpush1.bf16.msra.mxu0 %v533
    %2464 = vmatprep.subr.bf16.mxu0 %v538
    %2465 = vmatpush1.bf16.msra.mxu0 %v537
    %2466 = vmatprep.subr.bf16.mxu0 %v542
    %2467 = vmatpush1.bf16.msra.mxu0 %v541
    %2468 = vmatprep.subr.bf16.mxu0 0
    %2469 = vmatpush1.bf16.msra.mxu0 0
    %2470 = vmatprep.subr.bf16.mxu0 0
    %2471 = vmatpush1.bf16.msra.mxu0 0
    %2472 = vmatprep.subr.bf16.mxu0 0
    %2473 = vmatpush1.bf16.msra.mxu0 0
    %2474 = vmatprep.subr.bf16.mxu0 0
    %2475 = vmatpush1.bf16.msra.mxu0 0
    %2476 = vmatprep.subr.bf16.mxu0 0
    %2477 = vmatpush1.bf16.msra.mxu0 0
    %2478 = vmatprep.subr.bf16.mxu0 0
    %2479 = vmatpush1.bf16.msra.mxu0 0
    %2480 = vmatprep.subr.bf16.mxu0 0
    %2481 = vmatpush1.bf16.msra.mxu0 0
    %2482 = vmatprep.subr.bf16.mxu0 0
    %2483 = vmatpush1.bf16.msra.mxu0 0
    %2484 = vmatprep.mubr.bf16.mxu0 0
    %2485 = vmatmul.mubr.bf16.gmra.mrb[0].mxu0 %v2346
    %v2486 = vpop.f32.mrb[0].mxu0
    %v2487 = vadd.f32 0.0, %v2486
    %v2488 = vpop.f32.mrb[0].mxu0
    %v2489 = vadd.f32 0.0, %v2488
    %v2490 = vpop.f32.mrb[0].mxu0
    %v2491 = vpop.f32.mrb[0].mxu0
    %2492 = vdwg.mxu0
    %2493 = vmatprep.subr.bf16.mxu0 %v516
    %2494 = vmatpush1.bf16.msra.mxu0 %v515
    %2495 = vmatprep.subr.bf16.mxu0 %v520
    %2496 = vmatpush1.bf16.msra.mxu0 %v519
    %2497 = vmatprep.subr.bf16.mxu0 %v524
    %2498 = vmatpush1.bf16.msra.mxu0 %v523
    %2499 = vmatprep.subr.bf16.mxu0 %v528
    %2500 = vmatpush1.bf16.msra.mxu0 %v527
    %2501 = vmatprep.subr.bf16.mxu0 %v532
    %2502 = vmatpush1.bf16.msra.mxu0 %v531
    %2503 = vmatprep.subr.bf16.mxu0 %v536
    %2504 = vmatpush1.bf16.msra.mxu0 %v535
    %2505 = vmatprep.subr.bf16.mxu0 %v540
    %2506 = vmatpush1.bf16.msra.mxu0 %v539
    %2507 = vmatprep.subr.bf16.mxu0 %v544
    %2508 = vmatpush1.bf16.msra.mxu0 %v543
    %2509 = vmatprep.subr.bf16.mxu0 0
    %2510 = vmatpush1.bf16.msra.mxu0 0
    %2511 = vmatprep.subr.bf16.mxu0 0
    %2512 = vmatpush1.bf16.msra.mxu0 0
    %2513 = vmatprep.subr.bf16.mxu0 0
    %2514 = vmatpush1.bf16.msra.mxu0 0
    %2515 = vmatprep.subr.bf16.mxu0 0
    %2516 = vmatpush1.bf16.msra.mxu0 0
    %2517 = vmatprep.subr.bf16.mxu0 0
    %2518 = vmatpush1.bf16.msra.mxu0 0
    %2519 = vmatprep.subr.bf16.mxu0 0
    %2520 = vmatpush1.bf16.msra.mxu0 0
    %2521 = vmatprep.subr.bf16.mxu0 0
    %2522 = vmatpush1.bf16.msra.mxu0 0
    %2523 = vmatprep.subr.bf16.mxu0 0
    %2524 = vmatpush1.bf16.msra.mxu0 0
    %2525 = vmatprep.mubr.bf16.mxu0 0
    %2526 = vmatmul.mubr.bf16.gmra.mrb[0].mxu0 %v2346
    %v2527 = vpop.f32.mrb[0].mxu0
    %v2528 = vadd.f32 0.0, %v2527
    %v2529 = vpop.f32.mrb[0].mxu0
    %v2530 = vadd.f32 0.0, %v2529
    %v2531 = vpop.f32.mrb[0].mxu0
    %v2532 = vpop.f32.mrb[0].mxu0
    %2533 = vdwg.mxu0
    %v2534 = vadd.f32 %v2448, %v2487
    %v2535 = vadd.f32 %v2449, %v2489
    %v2536 = vadd.f32 %v2450, %v2528
    %v2537 = vadd.f32 %v2451, %v2530
    %v2538 = vmul.f32 %v2534, 0.5
    %v2539 = vtanh.pop %v2538
    %v2540 = vmul.f32 %v2539, 0.5
    %v2541 = vadd.f32 %v2540, 0.5
    %v2542 = vmul.f32 %v2535, 0.5
    %v2543 = vtanh.pop %v2542
    %v2544 = vmul.f32 %v2543, 0.5
    %v2545 = vadd.f32 %v2544, 0.5
    %v2546 = vtanh.pop %v2536
    %v2547 = vmul.f32 %v2537, 0.5
    %v2548 = vtanh.pop %v2547
    %v2549 = vmul.f32 %v2548, 0.5
    %v2550 = vadd.f32 %v2549, 0.5
    %v2551 = vmul.f32 %v2545, %v2343
    %v2552 = vmul.f32 %v2541, %v2546
    %v2553 = vadd.f32 %v2551, %v2552
    %v2554 = vtanh.pop %v2553
    %v2555 = vmul.f32 %v2550, %v2554
    %v2556 = vpack.c.bf16 %v2555, %v2555
    %v2557 = vpack.c.bf16 %v2447, %v2447
    %2558 = vmatprep.subr.bf16.mxu0 %v961
    %2559 = vmatpush1.bf16.msra.mxu0 %v960
    %2560 = vmatprep.subr.bf16.mxu0 %v965
    %2561 = vmatpush1.bf16.msra.mxu0 %v964
    %2562 = vmatprep.subr.bf16.mxu0 %v969
    %2563 = vmatpush1.bf16.msra.mxu0 %v968
    %2564 = vmatprep.subr.bf16.mxu0 %v973
    %2565 = vmatpush1.bf16.msra.mxu0 %v972
    %2566 = vmatprep.subr.bf16.mxu0 %v977
    %2567 = vmatpush1.bf16.msra.mxu0 %v976
    %2568 = vmatprep.subr.bf16.mxu0 %v981
    %2569 = vmatpush1.bf16.msra.mxu0 %v980
    %2570 = vmatprep.subr.bf16.mxu0 %v985
    %2571 = vmatpush1.bf16.msra.mxu0 %v984
    %2572 = vmatprep.subr.bf16.mxu0 %v989
    %2573 = vmatpush1.bf16.msra.mxu0 %v988
    %2574 = vmatprep.subr.bf16.mxu0 %v993
    %2575 = vmatpush1.bf16.msra.mxu0 %v992
    %2576 = vmatprep.subr.bf16.mxu0 %v997
    %2577 = vmatpush1.bf16.msra.mxu0 %v996
    %2578 = vmatprep.subr.bf16.mxu0 %v1001
    %2579 = vmatpush1.bf16.msra.mxu0 %v1000
    %2580 = vmatprep.subr.bf16.mxu0 %v1005
    %2581 = vmatpush1.bf16.msra.mxu0 %v1004
    %2582 = vmatprep.subr.bf16.mxu0 %v1009
    %2583 = vmatpush1.bf16.msra.mxu0 %v1008
    %2584 = vmatprep.subr.bf16.mxu0 %v1013
    %2585 = vmatpush1.bf16.msra.mxu0 %v1012
    %2586 = vmatprep.subr.bf16.mxu0 %v1017
    %2587 = vmatpush1.bf16.msra.mxu0 %v1016
    %2588 = vmatprep.subr.bf16.mxu0 %v1021
    %2589 = vmatpush1.bf16.msra.mxu0 %v1020
    %2590 = vmatprep.mubr.bf16.mxu0 %v2557
    %2591 = vmatmul.mubr.bf16.gmra.mrb[0].mxu0 %v2556
    %v2592 = vpop.f32.mrb[0].mxu0
    %v2593 = vadd.f32 %v751, %v2592
    %v2594 = vpop.f32.mrb[0].mxu0
    %v2595 = vadd.f32 %v755, %v2594
    %v2596 = vpop.f32.mrb[0].mxu0
    %v2597 = vpop.f32.mrb[0].mxu0
    %2598 = vdwg.mxu0
    %2599 = vmatprep.subr.bf16.mxu0 %v963
    %2600 = vmatpush1.bf16.msra.mxu0 %v962
    %2601 = vmatprep.subr.bf16.mxu0 %v967
    %2602 = vmatpush1.bf16.msra.mxu0 %v966
    %2603 = vmatprep.subr.bf16.mxu0 %v971
    %2604 = vmatpush1.bf16.msra.mxu0 %v970
    %2605 = vmatprep.subr.bf16.mxu0 %v975
    %2606 = vmatpush1.bf16.msra.mxu0 %v974
    %2607 = vmatprep.subr.bf16.mxu0 %v979
    %2608 = vmatpush1.bf16.msra.mxu0 %v978
    %2609 = vmatprep.subr.bf16.mxu0 %v983
    %2610 = vmatpush1.bf16.msra.mxu0 %v982
    %2611 = vmatprep.subr.bf16.mxu0 %v987
    %2612 = vmatpush1.bf16.msra.mxu0 %v986
    %2613 = vmatprep.subr.bf16.mxu0 %v991
    %2614 = vmatpush1.bf16.msra.mxu0 %v990
    %2615 = vmatprep.subr.bf16.mxu0 %v995
    %2616 = vmatpush1.bf16.msra.mxu0 %v994
    %2617 = vmatprep.subr.bf16.mxu0 %v999
    %2618 = vmatpush1.bf16.msra.mxu0 %v998
    %2619 = vmatprep.subr.bf16.mxu0 %v1003
    %2620 = vmatpush1.bf16.msra.mxu0 %v1002
    %2621 = vmatprep.subr.bf16.mxu0 %v1007
    %2622 = vmatpush1.bf16.msra.mxu0 %v1006
    %2623 = vmatprep.subr.bf16.mxu0 %v1011
    %2624 = vmatpush1.bf16.msra.mxu0 %v1010
    %2625 = vmatprep.subr.bf16.mxu0 %v1015
    %2626 = vmatpush1.bf16.msra.mxu0 %v1014
    %2627 = vmatprep.subr.bf16.mxu0 %v1019
    %2628 = vmatpush1.bf16.msra.mxu0 %v1018
    %2629 = vmatprep.subr.bf16.mxu0 %v1023
    %2630 = vmatpush1.bf16.msra.mxu0 %v1022
    %2631 = vmatprep.mubr.bf16.mxu0 %v2557
    %2632 = vmatmul.mubr.bf16.gmra.mrb[0].mxu0 %v2556
    %v2633 = vpop.f32.mrb[0].mxu0
    %v2634 = vadd.f32 %v759, %v2633
    %v2635 = vpop.f32.mrb[0].mxu0
    %v2636 = vadd.f32 %v763, %v2635
    %v2637 = vpop.f32.mrb[0].mxu0
    %v2638 = vpop.f32.mrb[0].mxu0
    %2639 = vdwg.mxu0
    %v2640 = vmul.f32 %v2593, 0.5
    %v2641 = vtanh.pop %v2640
    %v2642 = vmul.f32 %v2641, 0.5
    %v2643 = vadd.f32 %v2642, 0.5
    %v2644 = vmul.f32 %v2595, 0.5
    %v2645 = vtanh.pop %v2644
    %v2646 = vmul.f32 %v2645, 0.5
    %v2647 = vadd.f32 %v2646, 0.5
    %v2648 = vtanh.pop %v2634
    %v2649 = vmul.f32 %v2636, 0.5
    %v2650 = vtanh.pop %v2649
    %v2651 = vmul.f32 %v2650, 0.5
    %v2652 = vadd.f32 %v2651, 0.5
    %v2653 = vmul.f32 %v2647, %v2445
    %v2654 = vmul.f32 %v2643, %v2648
    %v2655 = vadd.f32 %v2653, %v2654
    %v2656 = vtanh.pop %v2655
    %v2657 = vmul.f32 %v2652, %v2656
    %v2658 = vld [vmem:[%s6] sm:$0xff]
    %v2659 = vld [vmem:[%s6 + $0x8] sm:$0xff]
    %v2660 = vld [vmem:[%s6 + $0x10] sm:$0xff]
    %v2661 = vld [vmem:[%s6 + $0x18] sm:$0xff]
    %v2662 = vld [vmem:[%s6 + $0x20] sm:$0xff]
    %v2663 = vld [vmem:[%s6 + $0x28] sm:$0xff]
    %v2664 = vld [vmem:[%s6 + $0x30] sm:$0xff]
    %v2665 = vld [vmem:[%s6 + $0x38] sm:$0xff]
    %v2666 = vld [vmem:[%s6 + $0x40] sm:$0xff]
    %v2667 = vld [vmem:[%s6 + $0x48] sm:$0xff]
    %v2668 = vld [vmem:[%s6 + $0x50] sm:$0xff]
    %v2669 = vld [vmem:[%s6 + $0x58] sm:$0xff]
    %v2670 = vld [vmem:[%s6 + $0x60] sm:$0xff]
    %v2671 = vld [vmem:[%s6 + $0x68] sm:$0xff]
    %v2672 = vld [vmem:[%s6 + $0x70] sm:$0xff]
    %v2673 = vld [vmem:[%s6 + $0x78] sm:$0xff]
    %v2674 = vld [vmem:[#allocation3] sm:$0x1]
    %v2676 = vlaneseq
    %v2677 = vshrl.u32 %v2676, 7
    %v2678 = vsub.s32 0, %v2677
    %v2679 = vrot.slane %v2674, %v2678
    %2681 = vmatprep.subr.mxu0 0.0
    %2682 = vmatpush1.msra.mxu0 %v2658
    %2683 = vmatprep.subr.mxu0 0.0
    %2684 = vmatpush1.msra.mxu0 %v2659
    %2685 = vmatprep.subr.mxu0 0.0
    %2686 = vmatpush1.msra.mxu0 %v2660
    %2687 = vmatprep.subr.mxu0 0.0
    %2688 = vmatpush1.msra.mxu0 %v2661
    %2689 = vmatprep.subr.mxu0 0.0
    %2690 = vmatpush1.msra.mxu0 %v2662
    %2691 = vmatprep.subr.mxu0 0.0
    %2692 = vmatpush1.msra.mxu0 %v2663
    %2693 = vmatprep.subr.mxu0 0.0
    %2694 = vmatpush1.msra.mxu0 %v2664
    %2695 = vmatprep.subr.mxu0 0.0
    %2696 = vmatpush1.msra.mxu0 %v2665
    %2697 = vmatprep.subr.mxu0 0.0
    %2698 = vmatpush1.msra.mxu0 %v2666
    %2699 = vmatprep.subr.mxu0 0.0
    %2700 = vmatpush1.msra.mxu0 %v2667
    %2701 = vmatprep.subr.mxu0 0.0
    %2702 = vmatpush1.msra.mxu0 %v2668
    %2703 = vmatprep.subr.mxu0 0.0
    %2704 = vmatpush1.msra.mxu0 %v2669
    %2705 = vmatprep.subr.mxu0 0.0
    %2706 = vmatpush1.msra.mxu0 %v2670
    %2707 = vmatprep.subr.mxu0 0.0
    %2708 = vmatpush1.msra.mxu0 %v2671
    %2709 = vmatprep.subr.mxu0 0.0
    %2710 = vmatpush1.msra.mxu0 %v2672
    %2711 = vmatprep.subr.mxu0 0.0
    %2712 = vmatpush1.msra.mxu0 %v2673
    %2713 = vmatprep.subr.mxu0 0.0
    %2714 = vmatpush1.msra.mxu0 0.0
    %2715 = vmatprep.subr.mxu0 0.0
    %2716 = vmatpush1.msra.mxu0 0.0
    %2717 = vmatprep.subr.mxu0 0.0
    %2718 = vmatpush1.msra.mxu0 0.0
    %2719 = vmatprep.subr.mxu0 0.0
    %2720 = vmatpush1.msra.mxu0 0.0
    %2721 = vmatprep.subr.mxu0 0.0
    %2722 = vmatpush1.msra.mxu0 0.0
    %2723 = vmatprep.subr.mxu0 0.0
    %2724 = vmatpush1.msra.mxu0 0.0
    %2725 = vmatprep.subr.mxu0 0.0
    %2726 = vmatpush1.msra.mxu0 0.0
    %2727 = vmatprep.subr.mxu0 0.0
    %2728 = vmatpush1.msra.mxu0 0.0
    %2729 = vmatprep.subr.mxu0 0.0
    %2730 = vmatpush1.msra.mxu0 0.0
    %2731 = vmatprep.subr.mxu0 0.0
    %2732 = vmatpush1.msra.mxu0 0.0
    %2733 = vmatprep.subr.mxu0 0.0
    %2734 = vmatpush1.msra.mxu0 0.0
    %2735 = vmatprep.subr.mxu0 0.0
    %2736 = vmatpush1.msra.mxu0 0.0
    %2737 = vmatprep.subr.mxu0 0.0
    %2738 = vmatpush1.msra.mxu0 0.0
    %2739 = vmatprep.subr.mxu0 0.0
    %2740 = vmatpush1.msra.mxu0 0.0
    %2741 = vmatprep.subr.mxu0 0.0
    %2742 = vmatpush1.msra.mxu0 0.0
    %2743 = vmatprep.subr.mxu0 0.0
    %2744 = vmatpush1.msra.mxu0 0.0
    %2745 = vmatprep.mubr.f32.mxu0 0.0
    %2746 = vmatmul.mubr.f32.gmra.mrb[0].mxu0 %v2657
    %v2747 = vpop.f32.mrb[0].mxu0
    %v2748 = vadd.f32 %v2679, %v2747
    %v2749 = vpop.f32.mrb[0].mxu0
    %2750 = vdwg.mxu0
    %vm2751 = vcmask 7168
    %2752 = vst.msk [vmem:[%s8] sm:$0xff] %vm2751, %v2748
    // Predicated region
    $region42: #{tpu_custom_call.1} parent=1 // pred_check
      _
    $region43: #{tpu_custom_call.1} parent=1 // pred_check_branch
      %2754 = sbr.rel (0) target = $region45
    $region44: #{tpu_custom_call.1} parent=1 // pred_region
      _
    $region45: #{tpu_custom_call.1} parent=1 // pred_fallthru
      _
    // Predicated region
    $region46: #{tpu_custom_call.1} parent=1 // pred_check
      _
    $region47: #{tpu_custom_call.1} parent=1 // pred_check_branch
      %2756 = sbr.rel (0) target = $region49
    $region48: #{tpu_custom_call.1} parent=1 // pred_region
      _
    $region49: #{tpu_custom_call.1} parent=1 // pred_fallthru
      _
    %2757 = vsyncpa [#allocation5], 1
    %2758 = vsyncpa [#allocation7], 1

</llo_original>
